<compile_context>
chip_gen: v7x
topology: tpu7x:2x2x1
jax: 0.10.0
libtpu: 0.0.40
codegen_flags: <defaults>
</compile_context>

<pallas_src>
import numpy as np

import jax
import jax.numpy as jnp
from jax import lax
from jax.experimental import pallas as pl
from jax.experimental.pallas import tpu as pltpu

# ------------------------- small config -------------------------
B = 2            # batch per view
C = 4            # image channels
H_IMG = 16
W_IMG = 16
PATCH = 4
NP = (H_IMG // PATCH) * (W_IMG // PATCH)      # 16 patches / image
DIN = C * PATCH * PATCH                       # 64
EMBED = 32                                    # stands in for 768
HID = 64                                      # stands in for 2048
OUT = 256                                     # stands in for 65536
NUM_REG = 4
TEMP_S = 0.1
TEMP_T = 0.04
MOMENTUM = 0.996
BN_EPS = 1e-5
# Lane-dense out_dim tile.  128 here because toy OUT=256; for the real
# 65536-wide head use 1024-2048 (v5e/v6e, 128 MiB VMEM) or 512-1024 (v7x).
TILE_OUT = 128

VMEM = pl.BlockSpec(memory_space=pltpu.MemorySpace.VMEM)

# Pooling matrix (row b averages the NP patch rows of sample b), hoisted to a
# module-level constant.  Entries are 0 or 1/16 — exactly representable in bf16.
_POOL = np.repeat(np.eye(2 * B, dtype=np.float32), NP, axis=1) / NP   # (2B, 2B*NP)


def _bf16(x):
    return x.astype(jnp.bfloat16)


def _gelu_exact(x):
    # nn.GELU default (approximate='none'): 0.5*x*(1+erf(x/sqrt(2))).
    # If VALU-bound on v5e and exact parity is not required, switch to the
    # tanh-approximate GELU so the transcendental rides the (idle) EUP slot.
    return 0.5 * x * (1.0 + lax.erf(x * 0.7071067811865475))


def _bn_per_view(h, gamma, beta):
    # PyTorch BatchNorm1d training-mode normalization (batch mean, biased var).
    # The heads process both views (2B rows) at once, so statistics are
    # computed per view (B rows each) to match two separate head() calls.
    # Mask-based (iota + where): no row slice / concat, so no cross-sublane
    # shuffles through the XLU.  All math stays in f32 (fragile stats at B=2).
    nb = h.shape[0] // 2
    row = lax.broadcasted_iota(jnp.int32, h.shape, 0)
    in_v1 = row < nb
    m1 = in_v1.astype(h.dtype)

    def _norm(mask_f):
        mu = jnp.sum(h * mask_f, axis=0, keepdims=True) * (1.0 / nb)
        var = jnp.sum(((h - mu) ** 2) * mask_f, axis=0, keepdims=True) * (1.0 / nb)
        return (h - mu) * lax.rsqrt(var + BN_EPS)

    hn = jnp.where(in_v1, _norm(m1), _norm(1.0 - m1))
    if gamma is None:                # affine=False (final BN)
        return hn
    return hn * gamma + beta         # (1, D) row-broadcast


# ------------------------- kernel 1: fused trunk -------------------------
# Both backbones (EMA'd teacher) + head layers 1-2 for both heads + reg loss.
# Stacked-parameter refs: index 0 = student, index 1 = teacher.
def _trunk_kernel(patch_ref, pool_ref,
                  wp_ref, bp_ref, wr_ref, br_ref,            # backbone (stacked)
                  w1_ref, b1_ref, g1_ref, be1_ref,            # head L1 (stacked)
                  w2_ref, b2_ref, g2_ref, be2_ref,            # head L2 (stacked)
                  h2s_ref, h2t_ref, regloss_ref):
    patches = patch_ref[...]                                  # (2B*NP, DIN) bf16
    pool = pool_ref[...]                                      # (2B, 2B*NP) bf16

    # momentum_update(): teacher backbone EMA, done in f32 (backbone only —
    # heads are never EMA'd in the reference module).
    def _ema(t, s):
        return (MOMENTUM * t.astype(jnp.float32)
                + (1.0 - MOMENTUM) * s.astype(jnp.float32))

    wp_s, bp_s, wr_s, br_s = wp_ref[0], bp_ref[0], wr_ref[0], br_ref[0]
    wp_t = _bf16(_ema(wp_ref[1], wp_ref[0]))
    bp_t = _ema(bp_ref[1], bp_ref[0])
    wr_t = _bf16(_ema(wr_ref[1], wr_ref[0]))
    br_t = _ema(br_ref[1], br_ref[0])

    def backbone(wp, bp, wr, br):
        # patch embedding (both views): (2B*NP, DIN) @ (DIN, EMBED)
        tok = jnp.dot(patches, wp, preferred_element_type=jnp.float32) + bp
        # per-sample mean over NP patch tokens as a pooling matmul (MXU)
        cls = jnp.dot(pool, _bf16(tok), preferred_element_type=jnp.float32)
        reg = jnp.tanh(jnp.dot(_bf16(cls), wr,
                               preferred_element_type=jnp.float32) + br)
        return cls, reg                                        # (2B,E), (2B,R*E)

    s_cls, s_reg = backbone(wp_s, bp_s, wr_s, br_s)
    t_cls, t_reg = backbone(wp_t, bp_t, wr_t, br_t)

    # register loss: mse(s_reg1, t_reg2) + mse(s_reg2, t_reg1)  (detach is a
    # no-op for the forward value) — reduced in-kernel so reg never hits HBM.
    d1 = s_reg[:B] - t_reg[B:]
    d2 = s_reg[B:] - t_reg[:B]
    reg_loss = (jnp.sum(d1 * d1) + jnp.sum(d2 * d2)) / (B * NUM_REG * EMBED)
    regloss_ref[...] = reg_loss.reshape(1, 1)

    # projection-head layers 1-2 (hoisted out of the OUT-tiled grid).
    def head12(cls, idx):
        h = jnp.dot(_bf16(cls), w1_ref[idx],
                    preferred_element_type=jnp.float32) + b1_ref[idx]
        h = _gelu_exact(_bn_per_view(h, g1_ref[idx], be1_ref[idx]))
        h = jnp.dot(_bf16(h), w2_ref[idx],
                    preferred_element_type=jnp.float32) + b2_ref[idx]
        return _gelu_exact(_bn_per_view(h, g2_ref[idx], be2_ref[idx]))

    h2s_ref[...] = _bf16(head12(s_cls, 0))     # student head on student cls
    h2t_ref[...] = _bf16(head12(t_cls, 1))     # teacher head on teacher cls


def patchify(x):
    # (N, C, H, W) NCHW -> (N*NP, C*P*P)   (XLA glue: reshape/transpose only)
    n, c, h, w = x.shape
    p = x.reshape(n, c, h // PATCH, PATCH, w // PATCH, PATCH)
    p = p.transpose(0, 2, 4, 1, 3, 5)
    return p.reshape(n * NP, DIN)


def trunk(patches, bb, head):
    return pl.pallas_call(
        _trunk_kernel,
        out_shape=(jax.ShapeDtypeStruct((2 * B, HID), jnp.bfloat16),
                   jax.ShapeDtypeStruct((2 * B, HID), jnp.bfloat16),
                   jax.ShapeDtypeStruct((1, 1), jnp.float32)),
        in_specs=[VMEM] * 14,
        out_specs=(VMEM, VMEM, VMEM),
    )(patches, jnp.asarray(_POOL, dtype=jnp.bfloat16),
      bb["w_patch"], bb["b_patch"], bb["w_reg"], bb["b_reg"],
      head["w1"], head["b1"], head["g1"], head["be1"],
      head["w2"], head["b2"], head["g2"], head["be2"])


# ------------------------- kernel 2: head layer 3, OUT-tiled -------------------------
def _head3_kernel(h2s_ref, h2t_ref, w3_ref, b3_ref, s_out_ref, t_out_ref):
    # Per OUT tile: only the layer-3 matmul + bias + affine-free per-view BN
    # (per-feature stats, so tiling over OUT is exact).  Layers 1-2 were done
    # once in the trunk kernel.
    hs = jnp.dot(h2s_ref[...], w3_ref[0],
                 preferred_element_type=jnp.float32) + b3_ref[0]
    ht = jnp.dot(h2t_ref[...], w3_ref[1],
                 preferred_element_type=jnp.float32) + b3_ref[1]
    s_out_ref[...] = _bn_per_view(hs, None, None)
    t_out_ref[...] = _bn_per_view(ht, None, None)


def head_layer3_both(h2_s, h2_t, w3, b3):
    # Student + teacher heads in ONE launch (stacked w3/b3); OUT tiled on a
    # ("parallel",) grid -> both v7x TensorCores get disjoint lane-dense tiles.
    n = h2_s.shape[0]
    const2 = lambda j: (0, 0)
    tiled3 = lambda j: (0, 0, j)
    tiled2 = lambda j: (0, j)
    return pl.pallas_call(
        _head3_kernel,
        out_shape=(jax.ShapeDtypeStruct((n, OUT), jnp.float32),
                   jax.ShapeDtypeStruct((n, OUT), jnp.float32)),
        grid_spec=pltpu.PrefetchScalarGridSpec(
            num_scalar_prefetch=0,
            grid=(OUT // TILE_OUT,),
            in_specs=[
                # Constant-index activation blocks.  For the real-scale head
                # add pipeline_mode=pl.Buffered(1) here so these stay
                # single-buffered inside v7x's 64 MiB VMEM.
                pl.BlockSpec((n, HID), const2),
                pl.BlockSpec((n, HID), const2),
                pl.BlockSpec((2, HID, TILE_OUT), tiled3),   # w3 (bf16), OUT-tiled
                pl.BlockSpec((2, 1, TILE_OUT), tiled3),     # b3, OUT-tiled
            ],
            out_specs=(pl.BlockSpec((n, TILE_OUT), tiled2),
                       pl.BlockSpec((n, TILE_OUT), tiled2)),
        ),
        compiler_params=pltpu.CompilerParams(
            dimension_semantics=("parallel",),
            vmem_limit_bytes=32 * 1024 * 1024),
    )(h2_s, h2_t, w3, b3)


# ------------------------- kernel 3: combined loss -------------------------
def _loss_kernel(t_ref, s_ref, c_ref, regloss_ref, o_ref):
    # Row i of the teacher output pairs with row i of the student output
    # (rows [:B]: teacher(view1)/student(view1); rows [B:]: view2), so both
    # DINO terms reduce to one mean over all 2B rows — no row slicing needed.
    t = t_ref[...]
    s = s_ref[...]
    # teacher probs: softmax((t - center)/temp_t, -1)
    tl = (t - c_ref[...]) * (1.0 / TEMP_T)
    tl = tl - jnp.max(tl, axis=-1, keepdims=True)
    te = jnp.exp(tl)
    tp = te / jnp.sum(te, axis=-1, keepdims=True)
    # student log-probs: log_softmax(s/temp_s, -1)
    sl = s * (1.0 / TEMP_S)
    sl = sl - jnp.max(sl, axis=-1, keepdims=True)
    logp = sl - jnp.log(jnp.sum(jnp.exp(sl), axis=-1, keepdims=True))
    dino = -jnp.sum(tp * logp) / (2 * B)        # == (loss1 + loss2) / 2
    o_ref[...] = dino.reshape(1, 1) + 0.1 * regloss_ref[...]


def combined_loss(t_out, s_out, center, reg_loss):
    out = pl.pallas_call(
        _loss_kernel,
        out_shape=jax.ShapeDtypeStruct((1, 1), jnp.float32),
        in_specs=[VMEM] * 4,
        out_specs=VMEM,
    )(t_out, s_out, center, reg_loss)
    return out[0, 0]


# ------------------------- DINOwithReg forward -------------------------
def dino_forward(x1, x2, bb, head, center):
    # bb / head hold stacked [student, teacher] parameters (packed once at init).
    patches = _bf16(patchify(jnp.concatenate([x1, x2], axis=0)))   # (2B*NP, DIN)
    h2_s, h2_t, reg_loss = trunk(patches, bb, head)
    s_out, t_out = head_layer3_both(h2_s, h2_t, head["w3"], head["b3"])
    total = combined_loss(t_out, s_out, center, reg_loss)
    # TODO(synk): update_center() and the persistent momentum_update() buffer
    # writes are stateful in the reference; they do not affect the returned
    # loss and the updated state is not returned here (JAX/Pallas are stateless).
    return total


# ------------------------- deterministic parameter init -------------------------
def _lin_init(key, din, dout):
    kw, kb = jax.random.split(key)
    bound = 1.0 / jnp.sqrt(jnp.float32(din))
    # MXU weights stored in bf16 (half the HBM->VMEM weight traffic);
    # biases / BN params stay f32.
    w = _bf16(jax.random.uniform(kw, (din, dout), jnp.float32, -bound, bound))
    b = jax.random.uniform(kb, (1, dout), jnp.float32, -bound, bound)
    return w, b


def init_backbone(key):
    k1, k2 = jax.random.split(key)
    w_patch, b_patch = _lin_init(k1, DIN, EMBED)
    w_reg, b_reg = _lin_init(k2, EMBED, NUM_REG * EMBED)
    return {"w_patch": w_patch, "b_patch": b_patch, "w_reg": w_reg, "b_reg": b_reg}


def init_head(key):
    k1, k2, k3 = jax.random.split(key, 3)
    w1, b1 = _lin_init(k1, EMBED, HID)
    w2, b2 = _lin_init(k2, HID, HID)
    w3, b3 = _lin_init(k3, HID, OUT)
    return {
        "w1": w1, "b1": b1,
        "g1": jnp.ones((1, HID), jnp.float32), "be1": jnp.zeros((1, HID), jnp.float32),
        "w2": w2, "b2": b2,
        "g2": jnp.ones((1, HID), jnp.float32), "be2": jnp.zeros((1, HID), jnp.float32),
        "w3": w3, "b3": b3,
    }


def pack_networks(student_bb, teacher_bb, student_head, teacher_head):
    # Stack student (index 0) and teacher (index 1) parameters once, outside
    # the jitted forward, so there is no per-call stacking glue.
    bb = {k: jnp.stack([student_bb[k], teacher_bb[k]]) for k in student_bb}
    head = {k: jnp.stack([student_head[k], teacher_head[k]]) for k in student_head}
    return bb, head


if __name__ == "__main__":
    key = jax.random.PRNGKey(0)
    k_x1, k_x2, k_sbb, k_sh, k_th = jax.random.split(key, 5)

    x1 = jax.random.normal(k_x1, (B, C, H_IMG, W_IMG), jnp.float32)
    x2 = jax.random.normal(k_x2, (B, C, H_IMG, W_IMG), jnp.float32)

    student_bb = init_backbone(k_sbb)
    # _init_teacher(): teacher backbone params are copies of student params.
    teacher_bb = jax.tree_util.tree_map(lambda a: a, student_bb)
    # Heads are independently initialized (not copied) in the reference module.
    student_head = init_head(k_sh)
    teacher_head = init_head(k_th)

    bb, head = pack_networks(student_bb, teacher_bb, student_head, teacher_head)

    # NOTE: the reference buffer is zeros(1, embed_dim), which cannot broadcast
    # against the (B, out_dim) head output (a bug in the reference module);
    # we size it (1, out_dim).
    center = jnp.zeros((1, OUT), jnp.float32)

    loss = jax.jit(dino_forward)(x1, x2, bb, head, center)
    loss = jax.block_until_ready(loss)
    assert loss.shape == () and bool(jnp.isfinite(loss))
    print("KERNEL_OK")
</pallas_src>

<mosaic_0001>
module attributes {stable_mosaic.version = 11 : i64} {
  func.func @_head3_kernel(%arg0: i32, %arg1: memref<4x64xbf16, #tpu.memory_space<vmem>>, %arg2: memref<4x64xbf16, #tpu.memory_space<vmem>>, %arg3: memref<2x64x128xbf16, #tpu.memory_space<vmem>>, %arg4: memref<2x1x128xf32, #tpu.memory_space<vmem>>, %arg5: memref<4x128xf32, #tpu.memory_space<vmem>>, %arg6: memref<4x128xf32, #tpu.memory_space<vmem>>) attributes {dimension_semantics = [#tpu.dimension_semantics<parallel>], iteration_bounds = array<i64: 2>, scalar_prefetch = 0 : i64, scratch_operands = 0 : i64, tpu.core_type = #tpu.core_type<tc>, window_params = [{pipeline_mode = #tpu.pipeline_mode<synchronous>, transform_indices = @transform_0, window_bounds = array<i64: 4, 64>}, {pipeline_mode = #tpu.pipeline_mode<synchronous>, transform_indices = @transform_1, window_bounds = array<i64: 4, 64>}, {transform_indices = @transform_2, window_bounds = array<i64: 2, 64, 128>}, {transform_indices = @transform_3, window_bounds = array<i64: 2, 1, 128>}, {transform_indices = @transform_4, window_bounds = array<i64: 4, 128>}, {transform_indices = @transform_5, window_bounds = array<i64: 4, 128>}]} {
    %c0 = arith.constant 0 : index
    %c0_0 = arith.constant 0 : index
    %0 = vector.load %arg1[%c0, %c0_0] : memref<4x64xbf16, #tpu.memory_space<vmem>>, vector<4x64xbf16>
    %c0_1 = arith.constant 0 : index
    %c0_2 = arith.constant 0 : index
    %c0_3 = arith.constant 0 : index
    %1 = vector.load %arg3[%c0_1, %c0_2, %c0_3] : memref<2x64x128xbf16, #tpu.memory_space<vmem>>, vector<1x64x128xbf16>
    %2 = vector.shape_cast %1 : vector<1x64x128xbf16> to vector<64x128xbf16>
    %cst = arith.constant dense<0.000000e+00> : vector<4x128xf32>
    %3 = tpu.matmul %0, %2, %cst {dimension_numbers = #tpu.dot_dimension_numbers<[1], [0], [0], [1], [0, 0, 1, 1], [], []>} : vector<4x64xbf16>, vector<64x128xbf16>, vector<4x128xf32> -> vector<4x128xf32>
    %c0_4 = arith.constant 0 : index
    %c0_5 = arith.constant 0 : index
    %c0_6 = arith.constant 0 : index
    %4 = vector.load %arg4[%c0_4, %c0_5, %c0_6] : memref<2x1x128xf32, #tpu.memory_space<vmem>>, vector<1x1x128xf32>
    %5 = vector.shape_cast %4 : vector<1x1x128xf32> to vector<1x128xf32>
    %6 = vector.broadcast %5 : vector<1x128xf32> to vector<4x128xf32>
    %7 = arith.addf %3, %6 : vector<4x128xf32>
    %c0_7 = arith.constant 0 : index
    %c0_8 = arith.constant 0 : index
    %8 = vector.load %arg2[%c0_7, %c0_8] : memref<4x64xbf16, #tpu.memory_space<vmem>>, vector<4x64xbf16>
    %c1 = arith.constant 1 : index
    %c0_9 = arith.constant 0 : index
    %c0_10 = arith.constant 0 : index
    %9 = vector.load %arg3[%c1, %c0_9, %c0_10] : memref<2x64x128xbf16, #tpu.memory_space<vmem>>, vector<1x64x128xbf16>
    %10 = vector.shape_cast %9 : vector<1x64x128xbf16> to vector<64x128xbf16>
    %cst_11 = arith.constant dense<0.000000e+00> : vector<4x128xf32>
    %11 = tpu.matmul %8, %10, %cst_11 {dimension_numbers = #tpu.dot_dimension_numbers<[1], [0], [0], [1], [0, 0, 1, 1], [], []>} : vector<4x64xbf16>, vector<64x128xbf16>, vector<4x128xf32> -> vector<4x128xf32>
    %c1_12 = arith.constant 1 : index
    %c0_13 = arith.constant 0 : index
    %c0_14 = arith.constant 0 : index
    %12 = vector.load %arg4[%c1_12, %c0_13, %c0_14] : memref<2x1x128xf32, #tpu.memory_space<vmem>>, vector<1x1x128xf32>
    %13 = vector.shape_cast %12 : vector<1x1x128xf32> to vector<1x128xf32>
    %14 = vector.broadcast %13 : vector<1x128xf32> to vector<4x128xf32>
    %15 = arith.addf %11, %14 : vector<4x128xf32>
    %16 = tpu.iota {dimensions = array<i32: 0>} : vector<4x128xi32>
    %c2_i32 = arith.constant 2 : i32
    %17 = vector.broadcast %c2_i32 : i32 to vector<4x128xi32>
    %18 = arith.cmpi slt, %16, %17 : vector<4x128xi32>
    %19 = arith.extui %18 : vector<4x128xi1> to vector<4x128xi32>
    %20 = arith.sitofp %19 : vector<4x128xi32> to vector<4x128xf32>
    %21 = arith.mulf %7, %20 : vector<4x128xf32>
    %cst_15 = arith.constant dense<0.000000e+00> : vector<128xf32>
    %22 = vector.multi_reduction <add>, %21, %cst_15 [0] : vector<4x128xf32> to vector<128xf32>
    %23 = vector.shape_cast %22 : vector<128xf32> to vector<1x128xf32>
    %cst_16 = arith.constant 5.000000e-01 : f32
    %24 = vector.broadcast %cst_16 : f32 to vector<1x128xf32>
    %25 = arith.mulf %23, %24 : vector<1x128xf32>
    %26 = vector.broadcast %25 : vector<1x128xf32> to vector<4x128xf32>
    %27 = arith.subf %7, %26 : vector<4x128xf32>
    %28 = arith.mulf %27, %27 : vector<4x128xf32>
    %29 = arith.mulf %28, %20 : vector<4x128xf32>
    %cst_17 = arith.constant dense<0.000000e+00> : vector<128xf32>
    %30 = vector.multi_reduction <add>, %29, %cst_17 [0] : vector<4x128xf32> to vector<128xf32>
    %31 = vector.shape_cast %30 : vector<128xf32> to vector<1x128xf32>
    %cst_18 = arith.constant 5.000000e-01 : f32
    %32 = vector.broadcast %cst_18 : f32 to vector<1x128xf32>
    %33 = arith.mulf %31, %32 : vector<1x128xf32>
    %34 = vector.broadcast %25 : vector<1x128xf32> to vector<4x128xf32>
    %35 = arith.subf %7, %34 : vector<4x128xf32>
    %cst_19 = arith.constant 9.99999974E-6 : f32
    %36 = vector.broadcast %cst_19 : f32 to vector<1x128xf32>
    %37 = arith.addf %33, %36 : vector<1x128xf32>
    %38 = math.rsqrt %37 : vector<1x128xf32>
    %39 = vector.broadcast %38 : vector<1x128xf32> to vector<4x128xf32>
    %40 = arith.mulf %35, %39 : vector<4x128xf32>
    %cst_20 = arith.constant 1.000000e+00 : f32
    %41 = vector.broadcast %cst_20 : f32 to vector<4x128xf32>
    %42 = arith.subf %41, %20 : vector<4x128xf32>
    %43 = arith.mulf %7, %42 : vector<4x128xf32>
    %cst_21 = arith.constant dense<0.000000e+00> : vector<128xf32>
    %44 = vector.multi_reduction <add>, %43, %cst_21 [0] : vector<4x128xf32> to vector<128xf32>
    %45 = vector.shape_cast %44 : vector<128xf32> to vector<1x128xf32>
    %cst_22 = arith.constant 5.000000e-01 : f32
    %46 = vector.broadcast %cst_22 : f32 to vector<1x128xf32>
    %47 = arith.mulf %45, %46 : vector<1x128xf32>
    %48 = vector.broadcast %47 : vector<1x128xf32> to vector<4x128xf32>
    %49 = arith.subf %7, %48 : vector<4x128xf32>
    %50 = arith.mulf %49, %49 : vector<4x128xf32>
    %51 = arith.mulf %50, %42 : vector<4x128xf32>
    %cst_23 = arith.constant dense<0.000000e+00> : vector<128xf32>
    %52 = vector.multi_reduction <add>, %51, %cst_23 [0] : vector<4x128xf32> to vector<128xf32>
    %53 = vector.shape_cast %52 : vector<128xf32> to vector<1x128xf32>
    %cst_24 = arith.constant 5.000000e-01 : f32
    %54 = vector.broadcast %cst_24 : f32 to vector<1x128xf32>
    %55 = arith.mulf %53, %54 : vector<1x128xf32>
    %56 = vector.broadcast %47 : vector<1x128xf32> to vector<4x128xf32>
    %57 = arith.subf %7, %56 : vector<4x128xf32>
    %cst_25 = arith.constant 9.99999974E-6 : f32
    %58 = vector.broadcast %cst_25 : f32 to vector<1x128xf32>
    %59 = arith.addf %55, %58 : vector<1x128xf32>
    %60 = math.rsqrt %59 : vector<1x128xf32>
    %61 = vector.broadcast %60 : vector<1x128xf32> to vector<4x128xf32>
    %62 = arith.mulf %57, %61 : vector<4x128xf32>
    %63 = arith.select %18, %40, %62 : vector<4x128xi1>, vector<4x128xf32>
    %c0_26 = arith.constant 0 : index
    %c0_27 = arith.constant 0 : index
    %64 = vector.load %arg5[%c0_26, %c0_27] : memref<4x128xf32, #tpu.memory_space<vmem>>, vector<4x128xf32>
    tpu.vector_store %arg5[%c0_26, %c0_27], %63 {strides = array<i32>} : memref<4x128xf32, #tpu.memory_space<vmem>>, vector<4x128xf32>,
    %65 = tpu.iota {dimensions = array<i32: 0>} : vector<4x128xi32>
    %c2_i32_28 = arith.constant 2 : i32
    %66 = vector.broadcast %c2_i32_28 : i32 to vector<4x128xi32>
    %67 = arith.cmpi slt, %65, %66 : vector<4x128xi32>
    %68 = arith.extui %67 : vector<4x128xi1> to vector<4x128xi32>
    %69 = arith.sitofp %68 : vector<4x128xi32> to vector<4x128xf32>
    %70 = arith.mulf %15, %69 : vector<4x128xf32>
    %cst_29 = arith.constant dense<0.000000e+00> : vector<128xf32>
    %71 = vector.multi_reduction <add>, %70, %cst_29 [0] : vector<4x128xf32> to vector<128xf32>
    %72 = vector.shape_cast %71 : vector<128xf32> to vector<1x128xf32>
    %cst_30 = arith.constant 5.000000e-01 : f32
    %73 = vector.broadcast %cst_30 : f32 to vector<1x128xf32>
    %74 = arith.mulf %72, %73 : vector<1x128xf32>
    %75 = vector.broadcast %74 : vector<1x128xf32> to vector<4x128xf32>
    %76 = arith.subf %15, %75 : vector<4x128xf32>
    %77 = arith.mulf %76, %76 : vector<4x128xf32>
    %78 = arith.mulf %77, %69 : vector<4x128xf32>
    %cst_31 = arith.constant dense<0.000000e+00> : vector<128xf32>
    %79 = vector.multi_reduction <add>, %78, %cst_31 [0] : vector<4x128xf32> to vector<128xf32>
    %80 = vector.shape_cast %79 : vector<128xf32> to vector<1x128xf32>
    %cst_32 = arith.constant 5.000000e-01 : f32
    %81 = vector.broadcast %cst_32 : f32 to vector<1x128xf32>
    %82 = arith.mulf %80, %81 : vector<1x128xf32>
    %83 = vector.broadcast %74 : vector<1x128xf32> to vector<4x128xf32>
    %84 = arith.subf %15, %83 : vector<4x128xf32>
    %cst_33 = arith.constant 9.99999974E-6 : f32
    %85 = vector.broadcast %cst_33 : f32 to vector<1x128xf32>
    %86 = arith.addf %82, %85 : vector<1x128xf32>
    %87 = math.rsqrt %86 : vector<1x128xf32>
    %88 = vector.broadcast %87 : vector<1x128xf32> to vector<4x128xf32>
    %89 = arith.mulf %84, %88 : vector<4x128xf32>
    %cst_34 = arith.constant 1.000000e+00 : f32
    %90 = vector.broadcast %cst_34 : f32 to vector<4x128xf32>
    %91 = arith.subf %90, %69 : vector<4x128xf32>
    %92 = arith.mulf %15, %91 : vector<4x128xf32>
    %cst_35 = arith.constant dense<0.000000e+00> : vector<128xf32>
    %93 = vector.multi_reduction <add>, %92, %cst_35 [0] : vector<4x128xf32> to vector<128xf32>
    %94 = vector.shape_cast %93 : vector<128xf32> to vector<1x128xf32>
    %cst_36 = arith.constant 5.000000e-01 : f32
    %95 = vector.broadcast %cst_36 : f32 to vector<1x128xf32>
    %96 = arith.mulf %94, %95 : vector<1x128xf32>
    %97 = vector.broadcast %96 : vector<1x128xf32> to vector<4x128xf32>
    %98 = arith.subf %15, %97 : vector<4x128xf32>
    %99 = arith.mulf %98, %98 : vector<4x128xf32>
    %100 = arith.mulf %99, %91 : vector<4x128xf32>
    %cst_37 = arith.constant dense<0.000000e+00> : vector<128xf32>
    %101 = vector.multi_reduction <add>, %100, %cst_37 [0] : vector<4x128xf32> to vector<128xf32>
    %102 = vector.shape_cast %101 : vector<128xf32> to vector<1x128xf32>
    %cst_38 = arith.constant 5.000000e-01 : f32
    %103 = vector.broadcast %cst_38 : f32 to vector<1x128xf32>
    %104 = arith.mulf %102, %103 : vector<1x128xf32>
    %105 = vector.broadcast %96 : vector<1x128xf32> to vector<4x128xf32>
    %106 = arith.subf %15, %105 : vector<4x128xf32>
    %cst_39 = arith.constant 9.99999974E-6 : f32
    %107 = vector.broadcast %cst_39 : f32 to vector<1x128xf32>
    %108 = arith.addf %104, %107 : vector<1x128xf32>
    %109 = math.rsqrt %108 : vector<1x128xf32>
    %110 = vector.broadcast %109 : vector<1x128xf32> to vector<4x128xf32>
    %111 = arith.mulf %106, %110 : vector<4x128xf32>
    %112 = arith.select %67, %89, %111 : vector<4x128xi1>, vector<4x128xf32>
    %c0_40 = arith.constant 0 : index
    %c0_41 = arith.constant 0 : index
    %113 = vector.load %arg6[%c0_40, %c0_41] : memref<4x128xf32, #tpu.memory_space<vmem>>, vector<4x128xf32>
    tpu.vector_store %arg6[%c0_40, %c0_41], %112 {strides = array<i32>} : memref<4x128xf32, #tpu.memory_space<vmem>>, vector<4x128xf32>,
    return
  }
  func.func @transform_0(%arg0: i32) -> (i32, i32) {
    %c0_i32 = arith.constant 0 : i32
    %c0_i32_0 = arith.constant 0 : i32
    %c0_i32_1 = arith.constant 0 : i32
    return %c0_i32, %c0_i32_0 : i32, i32
  }
  func.func @transform_1(%arg0: i32) -> (i32, i32) {
    %c0_i32 = arith.constant 0 : i32
    %c0_i32_0 = arith.constant 0 : i32
    %c0_i32_1 = arith.constant 0 : i32
    return %c0_i32, %c0_i32_0 : i32, i32
  }
  func.func @transform_2(%arg0: i32) -> (i32, i32, i32) {
    %c0_i32 = arith.constant 0 : i32
    %c0_i32_0 = arith.constant 0 : i32
    %c0_i32_1 = arith.constant 0 : i32
    return %c0_i32, %c0_i32_0, %arg0 : i32, i32, i32
  }
  func.func @transform_3(%arg0: i32) -> (i32, i32, i32) {
    %c0_i32 = arith.constant 0 : i32
    %c0_i32_0 = arith.constant 0 : i32
    %c0_i32_1 = arith.constant 0 : i32
    return %c0_i32, %c0_i32_0, %arg0 : i32, i32, i32
  }
  func.func @transform_4(%arg0: i32) -> (i32, i32) {
    %c0_i32 = arith.constant 0 : i32
    %c0_i32_0 = arith.constant 0 : i32
    return %c0_i32, %arg0 : i32, i32
  }
  func.func @transform_5(%arg0: i32) -> (i32, i32) {
    %c0_i32 = arith.constant 0 : i32
    %c0_i32_0 = arith.constant 0 : i32
    return %c0_i32, %arg0 : i32, i32
  }
}

module attributes {stable_mosaic.version = 11 : i64} {
  func.func @_trunk_kernel(%arg0: memref<64x64xbf16, #tpu.memory_space<vmem>>, %arg1: memref<4x64xbf16, #tpu.memory_space<vmem>>, %arg2: memref<2x64x32xbf16, #tpu.memory_space<vmem>>, %arg3: memref<2x1x32xf32, #tpu.memory_space<vmem>>, %arg4: memref<2x32x128xbf16, #tpu.memory_space<vmem>>, %arg5: memref<2x1x128xf32, #tpu.memory_space<vmem>>, %arg6: memref<2x32x64xbf16, #tpu.memory_space<vmem>>, %arg7: memref<2x1x64xf32, #tpu.memory_space<vmem>>, %arg8: memref<2x1x64xf32, #tpu.memory_space<vmem>>, %arg9: memref<2x1x64xf32, #tpu.memory_space<vmem>>, %arg10: memref<2x64x64xbf16, #tpu.memory_space<vmem>>, %arg11: memref<2x1x64xf32, #tpu.memory_space<vmem>>, %arg12: memref<2x1x64xf32, #tpu.memory_space<vmem>>, %arg13: memref<2x1x64xf32, #tpu.memory_space<vmem>>, %arg14: memref<4x64xbf16, #tpu.memory_space<vmem>>, %arg15: memref<4x64xbf16, #tpu.memory_space<vmem>>, %arg16: memref<1x1xf32, #tpu.memory_space<vmem>>) attributes {dimension_semantics = [], scalar_prefetch = 0 : i64, scratch_operands = 0 : i64, tpu.core_type = #tpu.core_type<tc>} {
    %c0 = arith.constant 0 : index
    %c0_0 = arith.constant 0 : index
    %0 = vector.load %arg0[%c0, %c0_0] : memref<64x64xbf16, #tpu.memory_space<vmem>>, vector<64x64xbf16>
    %c0_1 = arith.constant 0 : index
    %c0_2 = arith.constant 0 : index
    %1 = vector.load %arg1[%c0_1, %c0_2] : memref<4x64xbf16, #tpu.memory_space<vmem>>, vector<4x64xbf16>
    %c0_3 = arith.constant 0 : index
    %c0_4 = arith.constant 0 : index
    %c0_5 = arith.constant 0 : index
    %2 = vector.load %arg2[%c0_3, %c0_4, %c0_5] : memref<2x64x32xbf16, #tpu.memory_space<vmem>>, vector<1x64x32xbf16>
    %3 = vector.shape_cast %2 : vector<1x64x32xbf16> to vector<64x32xbf16>
    %c0_6 = arith.constant 0 : index
    %c0_7 = arith.constant 0 : index
    %c0_8 = arith.constant 0 : index
    %4 = vector.load %arg3[%c0_6, %c0_7, %c0_8] : memref<2x1x32xf32, #tpu.memory_space<vmem>>, vector<1x1x32xf32>
    %5 = vector.shape_cast %4 : vector<1x1x32xf32> to vector<1x32xf32>
    %c0_9 = arith.constant 0 : index
    %c0_10 = arith.constant 0 : index
    %c0_11 = arith.constant 0 : index
    %6 = vector.load %arg4[%c0_9, %c0_10, %c0_11] : memref<2x32x128xbf16, #tpu.memory_space<vmem>>, vector<1x32x128xbf16>
    %7 = vector.shape_cast %6 : vector<1x32x128xbf16> to vector<32x128xbf16>
    %c0_12 = arith.constant 0 : index
    %c0_13 = arith.constant 0 : index
    %c0_14 = arith.constant 0 : index
    %8 = vector.load %arg5[%c0_12, %c0_13, %c0_14] : memref<2x1x128xf32, #tpu.memory_space<vmem>>, vector<1x1x128xf32>
    %9 = vector.shape_cast %8 : vector<1x1x128xf32> to vector<1x128xf32>
    %c1 = arith.constant 1 : index
    %c0_15 = arith.constant 0 : index
    %c0_16 = arith.constant 0 : index
    %10 = vector.load %arg2[%c1, %c0_15, %c0_16] : memref<2x64x32xbf16, #tpu.memory_space<vmem>>, vector<1x64x32xbf16>
    %11 = vector.shape_cast %10 : vector<1x64x32xbf16> to vector<64x32xbf16>
    %c0_17 = arith.constant 0 : index
    %c0_18 = arith.constant 0 : index
    %c0_19 = arith.constant 0 : index
    %12 = vector.load %arg2[%c0_17, %c0_18, %c0_19] : memref<2x64x32xbf16, #tpu.memory_space<vmem>>, vector<1x64x32xbf16>
    %13 = vector.shape_cast %12 : vector<1x64x32xbf16> to vector<64x32xbf16>
    %14 = arith.extf %11 : vector<64x32xbf16> to vector<64x32xf32>
    %cst = arith.constant 0.995999991 : f32
    %15 = vector.broadcast %cst : f32 to vector<64x32xf32>
    %16 = arith.mulf %15, %14 : vector<64x32xf32>
    %17 = arith.extf %13 : vector<64x32xbf16> to vector<64x32xf32>
    %cst_20 = arith.constant 4.000000e-03 : f32
    %18 = vector.broadcast %cst_20 : f32 to vector<64x32xf32>
    %19 = arith.mulf %18, %17 : vector<64x32xf32>
    %20 = arith.addf %16, %19 : vector<64x32xf32>
    %21 = arith.truncf %20 : vector<64x32xf32> to vector<64x32xbf16>
    %c1_21 = arith.constant 1 : index
    %c0_22 = arith.constant 0 : index
    %c0_23 = arith.constant 0 : index
    %22 = vector.load %arg3[%c1_21, %c0_22, %c0_23] : memref<2x1x32xf32, #tpu.memory_space<vmem>>, vector<1x1x32xf32>
    %23 = vector.shape_cast %22 : vector<1x1x32xf32> to vector<1x32xf32>
    %c0_24 = arith.constant 0 : index
    %c0_25 = arith.constant 0 : index
    %c0_26 = arith.constant 0 : index
    %24 = vector.load %arg3[%c0_24, %c0_25, %c0_26] : memref<2x1x32xf32, #tpu.memory_space<vmem>>, vector<1x1x32xf32>
    %25 = vector.shape_cast %24 : vector<1x1x32xf32> to vector<1x32xf32>
    %cst_27 = arith.constant 0.995999991 : f32
    %26 = vector.broadcast %cst_27 : f32 to vector<1x32xf32>
    %27 = arith.mulf %26, %23 : vector<1x32xf32>
    %cst_28 = arith.constant 4.000000e-03 : f32
    %28 = vector.broadcast %cst_28 : f32 to vector<1x32xf32>
    %29 = arith.mulf %28, %25 : vector<1x32xf32>
    %30 = arith.addf %27, %29 : vector<1x32xf32>
    %c1_29 = arith.constant 1 : index
    %c0_30 = arith.constant 0 : index
    %c0_31 = arith.constant 0 : index
    %31 = vector.load %arg4[%c1_29, %c0_30, %c0_31] : memref<2x32x128xbf16, #tpu.memory_space<vmem>>, vector<1x32x128xbf16>
    %32 = vector.shape_cast %31 : vector<1x32x128xbf16> to vector<32x128xbf16>
    %c0_32 = arith.constant 0 : index
    %c0_33 = arith.constant 0 : index
    %c0_34 = arith.constant 0 : index
    %33 = vector.load %arg4[%c0_32, %c0_33, %c0_34] : memref<2x32x128xbf16, #tpu.memory_space<vmem>>, vector<1x32x128xbf16>
    %34 = vector.shape_cast %33 : vector<1x32x128xbf16> to vector<32x128xbf16>
    %35 = arith.extf %32 : vector<32x128xbf16> to vector<32x128xf32>
    %cst_35 = arith.constant 0.995999991 : f32
    %36 = vector.broadcast %cst_35 : f32 to vector<32x128xf32>
    %37 = arith.mulf %36, %35 : vector<32x128xf32>
    %38 = arith.extf %34 : vector<32x128xbf16> to vector<32x128xf32>
    %cst_36 = arith.constant 4.000000e-03 : f32
    %39 = vector.broadcast %cst_36 : f32 to vector<32x128xf32>
    %40 = arith.mulf %39, %38 : vector<32x128xf32>
    %41 = arith.addf %37, %40 : vector<32x128xf32>
    %42 = arith.truncf %41 : vector<32x128xf32> to vector<32x128xbf16>
    %c1_37 = arith.constant 1 : index
    %c0_38 = arith.constant 0 : index
    %c0_39 = arith.constant 0 : index
    %43 = vector.load %arg5[%c1_37, %c0_38, %c0_39] : memref<2x1x128xf32, #tpu.memory_space<vmem>>, vector<1x1x128xf32>
    %44 = vector.shape_cast %43 : vector<1x1x128xf32> to vector<1x128xf32>
    %c0_40 = arith.constant 0 : index
    %c0_41 = arith.constant 0 : index
    %c0_42 = arith.constant 0 : index
    %45 = vector.load %arg5[%c0_40, %c0_41, %c0_42] : memref<2x1x128xf32, #tpu.memory_space<vmem>>, vector<1x1x128xf32>
    %46 = vector.shape_cast %45 : vector<1x1x128xf32> to vector<1x128xf32>
    %cst_43 = arith.constant 0.995999991 : f32
    %47 = vector.broadcast %cst_43 : f32 to vector<1x128xf32>
    %48 = arith.mulf %47, %44 : vector<1x128xf32>
    %cst_44 = arith.constant 4.000000e-03 : f32
    %49 = vector.broadcast %cst_44 : f32 to vector<1x128xf32>
    %50 = arith.mulf %49, %46 : vector<1x128xf32>
    %51 = arith.addf %48, %50 : vector<1x128xf32>
    %cst_45 = arith.constant dense<0.000000e+00> : vector<64x32xf32>
    %52 = tpu.matmul %0, %3, %cst_45 {dimension_numbers = #tpu.dot_dimension_numbers<[1], [0], [0], [1], [0, 0, 1, 1], [], []>} : vector<64x64xbf16>, vector<64x32xbf16>, vector<64x32xf32> -> vector<64x32xf32>
    %53 = vector.broadcast %5 : vector<1x32xf32> to vector<64x32xf32>
    %54 = arith.addf %52, %53 : vector<64x32xf32>
    %55 = arith.truncf %54 : vector<64x32xf32> to vector<64x32xbf16>
    %cst_46 = arith.constant dense<0.000000e+00> : vector<4x32xf32>
    %56 = tpu.matmul %1, %55, %cst_46 {dimension_numbers = #tpu.dot_dimension_numbers<[1], [0], [0], [1], [0, 0, 1, 1], [], []>} : vector<4x64xbf16>, vector<64x32xbf16>, vector<4x32xf32> -> vector<4x32xf32>
    %57 = arith.truncf %56 : vector<4x32xf32> to vector<4x32xbf16>
    %cst_47 = arith.constant dense<0.000000e+00> : vector<4x128xf32>
    %58 = tpu.matmul %57, %7, %cst_47 {dimension_numbers = #tpu.dot_dimension_numbers<[1], [0], [0], [1], [0, 0, 1, 1], [], []>} : vector<4x32xbf16>, vector<32x128xbf16>, vector<4x128xf32> -> vector<4x128xf32>
    %59 = vector.broadcast %9 : vector<1x128xf32> to vector<4x128xf32>
    %60 = arith.addf %58, %59 : vector<4x128xf32>
    %61 = math.tanh %60 : vector<4x128xf32>
    %cst_48 = arith.constant dense<0.000000e+00> : vector<64x32xf32>
    %62 = tpu.matmul %0, %21, %cst_48 {dimension_numbers = #tpu.dot_dimension_numbers<[1], [0], [0], [1], [0, 0, 1, 1], [], []>} : vector<64x64xbf16>, vector<64x32xbf16>, vector<64x32xf32> -> vector<64x32xf32>
    %63 = vector.broadcast %30 : vector<1x32xf32> to vector<64x32xf32>
    %64 = arith.addf %62, %63 : vector<64x32xf32>
    %65 = arith.truncf %64 : vector<64x32xf32> to vector<64x32xbf16>
    %cst_49 = arith.constant dense<0.000000e+00> : vector<4x32xf32>
    %66 = tpu.matmul %1, %65, %cst_49 {dimension_numbers = #tpu.dot_dimension_numbers<[1], [0], [0], [1], [0, 0, 1, 1], [], []>} : vector<4x64xbf16>, vector<64x32xbf16>, vector<4x32xf32> -> vector<4x32xf32>
    %67 = arith.truncf %66 : vector<4x32xf32> to vector<4x32xbf16>
    %cst_50 = arith.constant dense<0.000000e+00> : vector<4x128xf32>
    %68 = tpu.matmul %67, %42, %cst_50 {dimension_numbers = #tpu.dot_dimension_numbers<[1], [0], [0], [1], [0, 0, 1, 1], [], []>} : vector<4x32xbf16>, vector<32x128xbf16>, vector<4x128xf32> -> vector<4x128xf32>
    %69 = vector.broadcast %51 : vector<1x128xf32> to vector<4x128xf32>
    %70 = arith.addf %68, %69 : vector<4x128xf32>
    %71 = math.tanh %70 : vector<4x128xf32>
    %72 = vector.extract_strided_slice %61 {offsets = [0, 0], sizes = [2, 128], strides = [1, 1]} : vector<4x128xf32> to vector<2x128xf32>
    %73 = vector.extract_strided_slice %71 {offsets = [2, 0], sizes = [2, 128], strides = [1, 1]} : vector<4x128xf32> to vector<2x128xf32>
    %74 = arith.subf %72, %73 : vector<2x128xf32>
    %75 = vector.extract_strided_slice %61 {offsets = [2, 0], sizes = [2, 128], strides = [1, 1]} : vector<4x128xf32> to vector<2x128xf32>
    %76 = vector.extract_strided_slice %71 {offsets = [0, 0], sizes = [2, 128], strides = [1, 1]} : vector<4x128xf32> to vector<2x128xf32>
    %77 = arith.subf %75, %76 : vector<2x128xf32>
    %78 = arith.mulf %74, %74 : vector<2x128xf32>
    %79 = vector.shape_cast %78 : vector<2x128xf32> to vector<1x2x128xf32>
    %cst_51 = arith.constant dense<0.000000e+00> : vector<1xf32>
    %80 = vector.multi_reduction <add>, %79, %cst_51 [1, 2] : vector<1x2x128xf32> to vector<1xf32>
    %81 = vector.shape_cast %80 : vector<1xf32> to vector<1x1x1xf32>
    %82 = vector.extract %81[0, 0, 0] : f32 from vector<1x1x1xf32>
    %83 = arith.mulf %77, %77 : vector<2x128xf32>
    %84 = vector.shape_cast %83 : vector<2x128xf32> to vector<1x2x128xf32>
    %cst_52 = arith.constant dense<0.000000e+00> : vector<1xf32>
    %85 = vector.multi_reduction <add>, %84, %cst_52 [1, 2] : vector<1x2x128xf32> to vector<1xf32>
    %86 = vector.shape_cast %85 : vector<1xf32> to vector<1x1x1xf32>
    %87 = vector.extract %86[0, 0, 0] : f32 from vector<1x1x1xf32>
    %88 = arith.addf %82, %87 : f32
    %cst_53 = arith.constant 2.560000e+02 : f32
    %89 = arith.divf %88, %cst_53 : f32
    %90 = vector.broadcast %89 : f32 to vector<1x1xf32>
    %c0_54 = arith.constant 0 : index
    %c0_55 = arith.constant 0 : index
    %91 = vector.load %arg16[%c0_54, %c0_55] : memref<1x1xf32, #tpu.memory_space<vmem>>, vector<1x1xf32>
    tpu.vector_store %arg16[%c0_54, %c0_55], %90 {strides = array<i32>} : memref<1x1xf32, #tpu.memory_space<vmem>>, vector<1x1xf32>,
    %92 = arith.truncf %56 : vector<4x32xf32> to vector<4x32xbf16>
    %c0_56 = arith.constant 0 : index
    %c0_57 = arith.constant 0 : index
    %c0_58 = arith.constant 0 : index
    %93 = vector.load %arg6[%c0_56, %c0_57, %c0_58] : memref<2x32x64xbf16, #tpu.memory_space<vmem>>, vector<1x32x64xbf16>
    %94 = vector.shape_cast %93 : vector<1x32x64xbf16> to vector<32x64xbf16>
    %cst_59 = arith.constant dense<0.000000e+00> : vector<4x64xf32>
    %95 = tpu.matmul %92, %94, %cst_59 {dimension_numbers = #tpu.dot_dimension_numbers<[1], [0], [0], [1], [0, 0, 1, 1], [], []>} : vector<4x32xbf16>, vector<32x64xbf16>, vector<4x64xf32> -> vector<4x64xf32>
    %c0_60 = arith.constant 0 : index
    %c0_61 = arith.constant 0 : index
    %c0_62 = arith.constant 0 : index
    %96 = vector.load %arg7[%c0_60, %c0_61, %c0_62] : memref<2x1x64xf32, #tpu.memory_space<vmem>>, vector<1x1x64xf32>
    %97 = vector.shape_cast %96 : vector<1x1x64xf32> to vector<1x64xf32>
    %98 = vector.broadcast %97 : vector<1x64xf32> to vector<4x64xf32>
    %99 = arith.addf %95, %98 : vector<4x64xf32>
    %c0_63 = arith.constant 0 : index
    %c0_64 = arith.constant 0 : index
    %c0_65 = arith.constant 0 : index
    %100 = vector.load %arg8[%c0_63, %c0_64, %c0_65] : memref<2x1x64xf32, #tpu.memory_space<vmem>>, vector<1x1x64xf32>
    %101 = vector.shape_cast %100 : vector<1x1x64xf32> to vector<1x64xf32>
    %c0_66 = arith.constant 0 : index
    %c0_67 = arith.constant 0 : index
    %c0_68 = arith.constant 0 : index
    %102 = vector.load %arg9[%c0_66, %c0_67, %c0_68] : memref<2x1x64xf32, #tpu.memory_space<vmem>>, vector<1x1x64xf32>
    %103 = vector.shape_cast %102 : vector<1x1x64xf32> to vector<1x64xf32>
    %104 = tpu.iota {dimensions = array<i32: 0>} : vector<4x64xi32>
    %c2_i32 = arith.constant 2 : i32
    %105 = vector.broadcast %c2_i32 : i32 to vector<4x64xi32>
    %106 = arith.cmpi slt, %104, %105 : vector<4x64xi32>
    %107 = arith.extui %106 : vector<4x64xi1> to vector<4x64xi32>
    %108 = arith.sitofp %107 : vector<4x64xi32> to vector<4x64xf32>
    %109 = arith.mulf %99, %108 : vector<4x64xf32>
    %cst_69 = arith.constant dense<0.000000e+00> : vector<64xf32>
    %110 = vector.multi_reduction <add>, %109, %cst_69 [0] : vector<4x64xf32> to vector<64xf32>
    %111 = vector.shape_cast %110 : vector<64xf32> to vector<1x64xf32>
    %cst_70 = arith.constant 5.000000e-01 : f32
    %112 = vector.broadcast %cst_70 : f32 to vector<1x64xf32>
    %113 = arith.mulf %111, %112 : vector<1x64xf32>
    %114 = vector.broadcast %113 : vector<1x64xf32> to vector<4x64xf32>
    %115 = arith.subf %99, %114 : vector<4x64xf32>
    %116 = arith.mulf %115, %115 : vector<4x64xf32>
    %117 = arith.mulf %116, %108 : vector<4x64xf32>
    %cst_71 = arith.constant dense<0.000000e+00> : vector<64xf32>
    %118 = vector.multi_reduction <add>, %117, %cst_71 [0] : vector<4x64xf32> to vector<64xf32>
    %119 = vector.shape_cast %118 : vector<64xf32> to vector<1x64xf32>
    %cst_72 = arith.constant 5.000000e-01 : f32
    %120 = vector.broadcast %cst_72 : f32 to vector<1x64xf32>
    %121 = arith.mulf %119, %120 : vector<1x64xf32>
    %122 = vector.broadcast %113 : vector<1x64xf32> to vector<4x64xf32>
    %123 = arith.subf %99, %122 : vector<4x64xf32>
    %cst_73 = arith.constant 9.99999974E-6 : f32
    %124 = vector.broadcast %cst_73 : f32 to vector<1x64xf32>
    %125 = arith.addf %121, %124 : vector<1x64xf32>
    %126 = math.rsqrt %125 : vector<1x64xf32>
    %127 = vector.broadcast %126 : vector<1x64xf32> to vector<4x64xf32>
    %128 = arith.mulf %123, %127 : vector<4x64xf32>
    %cst_74 = arith.constant 1.000000e+00 : f32
    %129 = vector.broadcast %cst_74 : f32 to vector<4x64xf32>
    %130 = arith.subf %129, %108 : vector<4x64xf32>
    %131 = arith.mulf %99, %130 : vector<4x64xf32>
    %cst_75 = arith.constant dense<0.000000e+00> : vector<64xf32>
    %132 = vector.multi_reduction <add>, %131, %cst_75 [0] : vector<4x64xf32> to vector<64xf32>
    %133 = vector.shape_cast %132 : vector<64xf32> to vector<1x64xf32>
    %cst_76 = arith.constant 5.000000e-01 : f32
    %134 = vector.broadcast %cst_76 : f32 to vector<1x64xf32>
    %135 = arith.mulf %133, %134 : vector<1x64xf32>
    %136 = vector.broadcast %135 : vector<1x64xf32> to vector<4x64xf32>
    %137 = arith.subf %99, %136 : vector<4x64xf32>
    %138 = arith.mulf %137, %137 : vector<4x64xf32>
    %139 = arith.mulf %138, %130 : vector<4x64xf32>
    %cst_77 = arith.constant dense<0.000000e+00> : vector<64xf32>
    %140 = vector.multi_reduction <add>, %139, %cst_77 [0] : vector<4x64xf32> to vector<64xf32>
    %141 = vector.shape_cast %140 : vector<64xf32> to vector<1x64xf32>
    %cst_78 = arith.constant 5.000000e-01 : f32
    %142 = vector.broadcast %cst_78 : f32 to vector<1x64xf32>
    %143 = arith.mulf %141, %142 : vector<1x64xf32>
    %144 = vector.broadcast %135 : vector<1x64xf32> to vector<4x64xf32>
    %145 = arith.subf %99, %144 : vector<4x64xf32>
    %cst_79 = arith.constant 9.99999974E-6 : f32
    %146 = vector.broadcast %cst_79 : f32 to vector<1x64xf32>
    %147 = arith.addf %143, %146 : vector<1x64xf32>
    %148 = math.rsqrt %147 : vector<1x64xf32>
    %149 = vector.broadcast %148 : vector<1x64xf32> to vector<4x64xf32>
    %150 = arith.mulf %145, %149 : vector<4x64xf32>
    %151 = arith.select %106, %128, %150 : vector<4x64xi1>, vector<4x64xf32>
    %152 = vector.broadcast %101 : vector<1x64xf32> to vector<4x64xf32>
    %153 = arith.mulf %151, %152 : vector<4x64xf32>
    %154 = vector.broadcast %103 : vector<1x64xf32> to vector<4x64xf32>
    %155 = arith.addf %153, %154 : vector<4x64xf32>
    %cst_80 = arith.constant 5.000000e-01 : f32
    %156 = vector.broadcast %cst_80 : f32 to vector<4x64xf32>
    %157 = arith.mulf %156, %155 : vector<4x64xf32>
    %cst_81 = arith.constant 0.707106769 : f32
    %158 = vector.broadcast %cst_81 : f32 to vector<4x64xf32>
    %159 = arith.mulf %155, %158 : vector<4x64xf32>
    %160 = math.erf %159 : vector<4x64xf32>
    %cst_82 = arith.constant 1.000000e+00 : f32
    %161 = vector.broadcast %cst_82 : f32 to vector<4x64xf32>
    %162 = arith.addf %161, %160 : vector<4x64xf32>
    %163 = arith.mulf %157, %162 : vector<4x64xf32>
    %164 = arith.truncf %163 : vector<4x64xf32> to vector<4x64xbf16>
    %c0_83 = arith.constant 0 : index
    %c0_84 = arith.constant 0 : index
    %c0_85 = arith.constant 0 : index
    %165 = vector.load %arg10[%c0_83, %c0_84, %c0_85] : memref<2x64x64xbf16, #tpu.memory_space<vmem>>, vector<1x64x64xbf16>
    %166 = vector.shape_cast %165 : vector<1x64x64xbf16> to vector<64x64xbf16>
    %cst_86 = arith.constant dense<0.000000e+00> : vector<4x64xf32>
    %167 = tpu.matmul %164, %166, %cst_86 {dimension_numbers = #tpu.dot_dimension_numbers<[1], [0], [0], [1], [0, 0, 1, 1], [], []>} : vector<4x64xbf16>, vector<64x64xbf16>, vector<4x64xf32> -> vector<4x64xf32>
    %c0_87 = arith.constant 0 : index
    %c0_88 = arith.constant 0 : index
    %c0_89 = arith.constant 0 : index
    %168 = vector.load %arg11[%c0_87, %c0_88, %c0_89] : memref<2x1x64xf32, #tpu.memory_space<vmem>>, vector<1x1x64xf32>
    %169 = vector.shape_cast %168 : vector<1x1x64xf32> to vector<1x64xf32>
    %170 = vector.broadcast %169 : vector<1x64xf32> to vector<4x64xf32>
    %171 = arith.addf %167, %170 : vector<4x64xf32>
    %c0_90 = arith.constant 0 : index
    %c0_91 = arith.constant 0 : index
    %c0_92 = arith.constant 0 : index
    %172 = vector.load %arg12[%c0_90, %c0_91, %c0_92] : memref<2x1x64xf32, #tpu.memory_space<vmem>>, vector<1x1x64xf32>
    %173 = vector.shape_cast %172 : vector<1x1x64xf32> to vector<1x64xf32>
    %c0_93 = arith.constant 0 : index
    %c0_94 = arith.constant 0 : index
    %c0_95 = arith.constant 0 : index
    %174 = vector.load %arg13[%c0_93, %c0_94, %c0_95] : memref<2x1x64xf32, #tpu.memory_space<vmem>>, vector<1x1x64xf32>
    %175 = vector.shape_cast %174 : vector<1x1x64xf32> to vector<1x64xf32>
    %176 = tpu.iota {dimensions = array<i32: 0>} : vector<4x64xi32>
    %c2_i32_96 = arith.constant 2 : i32
    %177 = vector.broadcast %c2_i32_96 : i32 to vector<4x64xi32>
    %178 = arith.cmpi slt, %176, %177 : vector<4x64xi32>
    %179 = arith.extui %178 : vector<4x64xi1> to vector<4x64xi32>
    %180 = arith.sitofp %179 : vector<4x64xi32> to vector<4x64xf32>
    %181 = arith.mulf %171, %180 : vector<4x64xf32>
    %cst_97 = arith.constant dense<0.000000e+00> : vector<64xf32>
    %182 = vector.multi_reduction <add>, %181, %cst_97 [0] : vector<4x64xf32> to vector<64xf32>
    %183 = vector.shape_cast %182 : vector<64xf32> to vector<1x64xf32>
    %cst_98 = arith.constant 5.000000e-01 : f32
    %184 = vector.broadcast %cst_98 : f32 to vector<1x64xf32>
    %185 = arith.mulf %183, %184 : vector<1x64xf32>
    %186 = vector.broadcast %185 : vector<1x64xf32> to vector<4x64xf32>
    %187 = arith.subf %171, %186 : vector<4x64xf32>
    %188 = arith.mulf %187, %187 : vector<4x64xf32>
    %189 = arith.mulf %188, %180 : vector<4x64xf32>
    %cst_99 = arith.constant dense<0.000000e+00> : vector<64xf32>
    %190 = vector.multi_reduction <add>, %189, %cst_99 [0] : vector<4x64xf32> to vector<64xf32>
    %191 = vector.shape_cast %190 : vector<64xf32> to vector<1x64xf32>
    %cst_100 = arith.constant 5.000000e-01 : f32
    %192 = vector.broadcast %cst_100 : f32 to vector<1x64xf32>
    %193 = arith.mulf %191, %192 : vector<1x64xf32>
    %194 = vector.broadcast %185 : vector<1x64xf32> to vector<4x64xf32>
    %195 = arith.subf %171, %194 : vector<4x64xf32>
    %cst_101 = arith.constant 9.99999974E-6 : f32
    %196 = vector.broadcast %cst_101 : f32 to vector<1x64xf32>
    %197 = arith.addf %193, %196 : vector<1x64xf32>
    %198 = math.rsqrt %197 : vector<1x64xf32>
    %199 = vector.broadcast %198 : vector<1x64xf32> to vector<4x64xf32>
    %200 = arith.mulf %195, %199 : vector<4x64xf32>
    %cst_102 = arith.constant 1.000000e+00 : f32
    %201 = vector.broadcast %cst_102 : f32 to vector<4x64xf32>
    %202 = arith.subf %201, %180 : vector<4x64xf32>
    %203 = arith.mulf %171, %202 : vector<4x64xf32>
    %cst_103 = arith.constant dense<0.000000e+00> : vector<64xf32>
    %204 = vector.multi_reduction <add>, %203, %cst_103 [0] : vector<4x64xf32> to vector<64xf32>
    %205 = vector.shape_cast %204 : vector<64xf32> to vector<1x64xf32>
    %cst_104 = arith.constant 5.000000e-01 : f32
    %206 = vector.broadcast %cst_104 : f32 to vector<1x64xf32>
    %207 = arith.mulf %205, %206 : vector<1x64xf32>
    %208 = vector.broadcast %207 : vector<1x64xf32> to vector<4x64xf32>
    %209 = arith.subf %171, %208 : vector<4x64xf32>
    %210 = arith.mulf %209, %209 : vector<4x64xf32>
    %211 = arith.mulf %210, %202 : vector<4x64xf32>
    %cst_105 = arith.constant dense<0.000000e+00> : vector<64xf32>
    %212 = vector.multi_reduction <add>, %211, %cst_105 [0] : vector<4x64xf32> to vector<64xf32>
    %213 = vector.shape_cast %212 : vector<64xf32> to vector<1x64xf32>
    %cst_106 = arith.constant 5.000000e-01 : f32
    %214 = vector.broadcast %cst_106 : f32 to vector<1x64xf32>
    %215 = arith.mulf %213, %214 : vector<1x64xf32>
    %216 = vector.broadcast %207 : vector<1x64xf32> to vector<4x64xf32>
    %217 = arith.subf %171, %216 : vector<4x64xf32>
    %cst_107 = arith.constant 9.99999974E-6 : f32
    %218 = vector.broadcast %cst_107 : f32 to vector<1x64xf32>
    %219 = arith.addf %215, %218 : vector<1x64xf32>
    %220 = math.rsqrt %219 : vector<1x64xf32>
    %221 = vector.broadcast %220 : vector<1x64xf32> to vector<4x64xf32>
    %222 = arith.mulf %217, %221 : vector<4x64xf32>
    %223 = arith.select %178, %200, %222 : vector<4x64xi1>, vector<4x64xf32>
    %224 = vector.broadcast %173 : vector<1x64xf32> to vector<4x64xf32>
    %225 = arith.mulf %223, %224 : vector<4x64xf32>
    %226 = vector.broadcast %175 : vector<1x64xf32> to vector<4x64xf32>
    %227 = arith.addf %225, %226 : vector<4x64xf32>
    %cst_108 = arith.constant 5.000000e-01 : f32
    %228 = vector.broadcast %cst_108 : f32 to vector<4x64xf32>
    %229 = arith.mulf %228, %227 : vector<4x64xf32>
    %cst_109 = arith.constant 0.707106769 : f32
    %230 = vector.broadcast %cst_109 : f32 to vector<4x64xf32>
    %231 = arith.mulf %227, %230 : vector<4x64xf32>
    %232 = math.erf %231 : vector<4x64xf32>
    %cst_110 = arith.constant 1.000000e+00 : f32
    %233 = vector.broadcast %cst_110 : f32 to vector<4x64xf32>
    %234 = arith.addf %233, %232 : vector<4x64xf32>
    %235 = arith.mulf %229, %234 : vector<4x64xf32>
    %236 = arith.truncf %235 : vector<4x64xf32> to vector<4x64xbf16>
    %c0_111 = arith.constant 0 : index
    %c0_112 = arith.constant 0 : index
    %237 = vector.load %arg14[%c0_111, %c0_112] : memref<4x64xbf16, #tpu.memory_space<vmem>>, vector<4x64xbf16>
    tpu.vector_store %arg14[%c0_111, %c0_112], %236 {strides = array<i32>} : memref<4x64xbf16, #tpu.memory_space<vmem>>, vector<4x64xbf16>,
    %238 = arith.truncf %66 : vector<4x32xf32> to vector<4x32xbf16>
    %c1_113 = arith.constant 1 : index
    %c0_114 = arith.constant 0 : index
    %c0_115 = arith.constant 0 : index
    %239 = vector.load %arg6[%c1_113, %c0_114, %c0_115] : memref<2x32x64xbf16, #tpu.memory_space<vmem>>, vector<1x32x64xbf16>
    %240 = vector.shape_cast %239 : vector<1x32x64xbf16> to vector<32x64xbf16>
    %cst_116 = arith.constant dense<0.000000e+00> : vector<4x64xf32>
    %241 = tpu.matmul %238, %240, %cst_116 {dimension_numbers = #tpu.dot_dimension_numbers<[1], [0], [0], [1], [0, 0, 1, 1], [], []>} : vector<4x32xbf16>, vector<32x64xbf16>, vector<4x64xf32> -> vector<4x64xf32>
    %c1_117 = arith.constant 1 : index
    %c0_118 = arith.constant 0 : index
    %c0_119 = arith.constant 0 : index
    %242 = vector.load %arg7[%c1_117, %c0_118, %c0_119] : memref<2x1x64xf32, #tpu.memory_space<vmem>>, vector<1x1x64xf32>
    %243 = vector.shape_cast %242 : vector<1x1x64xf32> to vector<1x64xf32>
    %244 = vector.broadcast %243 : vector<1x64xf32> to vector<4x64xf32>
    %245 = arith.addf %241, %244 : vector<4x64xf32>
    %c1_120 = arith.constant 1 : index
    %c0_121 = arith.constant 0 : index
    %c0_122 = arith.constant 0 : index
    %246 = vector.load %arg8[%c1_120, %c0_121, %c0_122] : memref<2x1x64xf32, #tpu.memory_space<vmem>>, vector<1x1x64xf32>
    %247 = vector.shape_cast %246 : vector<1x1x64xf32> to vector<1x64xf32>
    %c1_123 = arith.constant 1 : index
    %c0_124 = arith.constant 0 : index
    %c0_125 = arith.constant 0 : index
    %248 = vector.load %arg9[%c1_123, %c0_124, %c0_125] : memref<2x1x64xf32, #tpu.memory_space<vmem>>, vector<1x1x64xf32>
    %249 = vector.shape_cast %248 : vector<1x1x64xf32> to vector<1x64xf32>
    %250 = tpu.iota {dimensions = array<i32: 0>} : vector<4x64xi32>
    %c2_i32_126 = arith.constant 2 : i32
    %251 = vector.broadcast %c2_i32_126 : i32 to vector<4x64xi32>
    %252 = arith.cmpi slt, %250, %251 : vector<4x64xi32>
    %253 = arith.extui %252 : vector<4x64xi1> to vector<4x64xi32>
    %254 = arith.sitofp %253 : vector<4x64xi32> to vector<4x64xf32>
    %255 = arith.mulf %245, %254 : vector<4x64xf32>
    %cst_127 = arith.constant dense<0.000000e+00> : vector<64xf32>
    %256 = vector.multi_reduction <add>, %255, %cst_127 [0] : vector<4x64xf32> to vector<64xf32>
    %257 = vector.shape_cast %256 : vector<64xf32> to vector<1x64xf32>
    %cst_128 = arith.constant 5.000000e-01 : f32
    %258 = vector.broadcast %cst_128 : f32 to vector<1x64xf32>
    %259 = arith.mulf %257, %258 : vector<1x64xf32>
    %260 = vector.broadcast %259 : vector<1x64xf32> to vector<4x64xf32>
    %261 = arith.subf %245, %260 : vector<4x64xf32>
    %262 = arith.mulf %261, %261 : vector<4x64xf32>
    %263 = arith.mulf %262, %254 : vector<4x64xf32>
    %cst_129 = arith.constant dense<0.000000e+00> : vector<64xf32>
    %264 = vector.multi_reduction <add>, %263, %cst_129 [0] : vector<4x64xf32> to vector<64xf32>
    %265 = vector.shape_cast %264 : vector<64xf32> to vector<1x64xf32>
    %cst_130 = arith.constant 5.000000e-01 : f32
    %266 = vector.broadcast %cst_130 : f32 to vector<1x64xf32>
    %267 = arith.mulf %265, %266 : vector<1x64xf32>
    %268 = vector.broadcast %259 : vector<1x64xf32> to vector<4x64xf32>
    %269 = arith.subf %245, %268 : vector<4x64xf32>
    %cst_131 = arith.constant 9.99999974E-6 : f32
    %270 = vector.broadcast %cst_131 : f32 to vector<1x64xf32>
    %271 = arith.addf %267, %270 : vector<1x64xf32>
    %272 = math.rsqrt %271 : vector<1x64xf32>
    %273 = vector.broadcast %272 : vector<1x64xf32> to vector<4x64xf32>
    %274 = arith.mulf %269, %273 : vector<4x64xf32>
    %cst_132 = arith.constant 1.000000e+00 : f32
    %275 = vector.broadcast %cst_132 : f32 to vector<4x64xf32>
    %276 = arith.subf %275, %254 : vector<4x64xf32>
    %277 = arith.mulf %245, %276 : vector<4x64xf32>
    %cst_133 = arith.constant dense<0.000000e+00> : vector<64xf32>
    %278 = vector.multi_reduction <add>, %277, %cst_133 [0] : vector<4x64xf32> to vector<64xf32>
    %279 = vector.shape_cast %278 : vector<64xf32> to vector<1x64xf32>
    %cst_134 = arith.constant 5.000000e-01 : f32
    %280 = vector.broadcast %cst_134 : f32 to vector<1x64xf32>
    %281 = arith.mulf %279, %280 : vector<1x64xf32>
    %282 = vector.broadcast %281 : vector<1x64xf32> to vector<4x64xf32>
    %283 = arith.subf %245, %282 : vector<4x64xf32>
    %284 = arith.mulf %283, %283 : vector<4x64xf32>
    %285 = arith.mulf %284, %276 : vector<4x64xf32>
    %cst_135 = arith.constant dense<0.000000e+00> : vector<64xf32>
    %286 = vector.multi_reduction <add>, %285, %cst_135 [0] : vector<4x64xf32> to vector<64xf32>
    %287 = vector.shape_cast %286 : vector<64xf32> to vector<1x64xf32>
    %cst_136 = arith.constant 5.000000e-01 : f32
    %288 = vector.broadcast %cst_136 : f32 to vector<1x64xf32>
    %289 = arith.mulf %287, %288 : vector<1x64xf32>
    %290 = vector.broadcast %281 : vector<1x64xf32> to vector<4x64xf32>
    %291 = arith.subf %245, %290 : vector<4x64xf32>
    %cst_137 = arith.constant 9.99999974E-6 : f32
    %292 = vector.broadcast %cst_137 : f32 to vector<1x64xf32>
    %293 = arith.addf %289, %292 : vector<1x64xf32>
    %294 = math.rsqrt %293 : vector<1x64xf32>
    %295 = vector.broadcast %294 : vector<1x64xf32> to vector<4x64xf32>
    %296 = arith.mulf %291, %295 : vector<4x64xf32>
    %297 = arith.select %252, %274, %296 : vector<4x64xi1>, vector<4x64xf32>
    %298 = vector.broadcast %247 : vector<1x64xf32> to vector<4x64xf32>
    %299 = arith.mulf %297, %298 : vector<4x64xf32>
    %300 = vector.broadcast %249 : vector<1x64xf32> to vector<4x64xf32>
    %301 = arith.addf %299, %300 : vector<4x64xf32>
    %cst_138 = arith.constant 5.000000e-01 : f32
    %302 = vector.broadcast %cst_138 : f32 to vector<4x64xf32>
    %303 = arith.mulf %302, %301 : vector<4x64xf32>
    %cst_139 = arith.constant 0.707106769 : f32
    %304 = vector.broadcast %cst_139 : f32 to vector<4x64xf32>
    %305 = arith.mulf %301, %304 : vector<4x64xf32>
    %306 = math.erf %305 : vector<4x64xf32>
    %cst_140 = arith.constant 1.000000e+00 : f32
    %307 = vector.broadcast %cst_140 : f32 to vector<4x64xf32>
    %308 = arith.addf %307, %306 : vector<4x64xf32>
    %309 = arith.mulf %303, %308 : vector<4x64xf32>
    %310 = arith.truncf %309 : vector<4x64xf32> to vector<4x64xbf16>
    %c1_141 = arith.constant 1 : index
    %c0_142 = arith.constant 0 : index
    %c0_143 = arith.constant 0 : index
    %311 = vector.load %arg10[%c1_141, %c0_142, %c0_143] : memref<2x64x64xbf16, #tpu.memory_space<vmem>>, vector<1x64x64xbf16>
    %312 = vector.shape_cast %311 : vector<1x64x64xbf16> to vector<64x64xbf16>
    %cst_144 = arith.constant dense<0.000000e+00> : vector<4x64xf32>
    %313 = tpu.matmul %310, %312, %cst_144 {dimension_numbers = #tpu.dot_dimension_numbers<[1], [0], [0], [1], [0, 0, 1, 1], [], []>} : vector<4x64xbf16>, vector<64x64xbf16>, vector<4x64xf32> -> vector<4x64xf32>
    %c1_145 = arith.constant 1 : index
    %c0_146 = arith.constant 0 : index
    %c0_147 = arith.constant 0 : index
    %314 = vector.load %arg11[%c1_145, %c0_146, %c0_147] : memref<2x1x64xf32, #tpu.memory_space<vmem>>, vector<1x1x64xf32>
    %315 = vector.shape_cast %314 : vector<1x1x64xf32> to vector<1x64xf32>
    %316 = vector.broadcast %315 : vector<1x64xf32> to vector<4x64xf32>
    %317 = arith.addf %313, %316 : vector<4x64xf32>
    %c1_148 = arith.constant 1 : index
    %c0_149 = arith.constant 0 : index
    %c0_150 = arith.constant 0 : index
    %318 = vector.load %arg12[%c1_148, %c0_149, %c0_150] : memref<2x1x64xf32, #tpu.memory_space<vmem>>, vector<1x1x64xf32>
    %319 = vector.shape_cast %318 : vector<1x1x64xf32> to vector<1x64xf32>
    %c1_151 = arith.constant 1 : index
    %c0_152 = arith.constant 0 : index
    %c0_153 = arith.constant 0 : index
    %320 = vector.load %arg13[%c1_151, %c0_152, %c0_153] : memref<2x1x64xf32, #tpu.memory_space<vmem>>, vector<1x1x64xf32>
    %321 = vector.shape_cast %320 : vector<1x1x64xf32> to vector<1x64xf32>
    %322 = tpu.iota {dimensions = array<i32: 0>} : vector<4x64xi32>
    %c2_i32_154 = arith.constant 2 : i32
    %323 = vector.broadcast %c2_i32_154 : i32 to vector<4x64xi32>
    %324 = arith.cmpi slt, %322, %323 : vector<4x64xi32>
    %325 = arith.extui %324 : vector<4x64xi1> to vector<4x64xi32>
    %326 = arith.sitofp %325 : vector<4x64xi32> to vector<4x64xf32>
    %327 = arith.mulf %317, %326 : vector<4x64xf32>
    %cst_155 = arith.constant dense<0.000000e+00> : vector<64xf32>
    %328 = vector.multi_reduction <add>, %327, %cst_155 [0] : vector<4x64xf32> to vector<64xf32>
    %329 = vector.shape_cast %328 : vector<64xf32> to vector<1x64xf32>
    %cst_156 = arith.constant 5.000000e-01 : f32
    %330 = vector.broadcast %cst_156 : f32 to vector<1x64xf32>
    %331 = arith.mulf %329, %330 : vector<1x64xf32>
    %332 = vector.broadcast %331 : vector<1x64xf32> to vector<4x64xf32>
    %333 = arith.subf %317, %332 : vector<4x64xf32>
    %334 = arith.mulf %333, %333 : vector<4x64xf32>
    %335 = arith.mulf %334, %326 : vector<4x64xf32>
    %cst_157 = arith.constant dense<0.000000e+00> : vector<64xf32>
    %336 = vector.multi_reduction <add>, %335, %cst_157 [0] : vector<4x64xf32> to vector<64xf32>
    %337 = vector.shape_cast %336 : vector<64xf32> to vector<1x64xf32>
    %cst_158 = arith.constant 5.000000e-01 : f32
    %338 = vector.broadcast %cst_158 : f32 to vector<1x64xf32>
    %339 = arith.mulf %337, %338 : vector<1x64xf32>
    %340 = vector.broadcast %331 : vector<1x64xf32> to vector<4x64xf32>
    %341 = arith.subf %317, %340 : vector<4x64xf32>
    %cst_159 = arith.constant 9.99999974E-6 : f32
    %342 = vector.broadcast %cst_159 : f32 to vector<1x64xf32>
    %343 = arith.addf %339, %342 : vector<1x64xf32>
    %344 = math.rsqrt %343 : vector<1x64xf32>
    %345 = vector.broadcast %344 : vector<1x64xf32> to vector<4x64xf32>
    %346 = arith.mulf %341, %345 : vector<4x64xf32>
    %cst_160 = arith.constant 1.000000e+00 : f32
    %347 = vector.broadcast %cst_160 : f32 to vector<4x64xf32>
    %348 = arith.subf %347, %326 : vector<4x64xf32>
    %349 = arith.mulf %317, %348 : vector<4x64xf32>
    %cst_161 = arith.constant dense<0.000000e+00> : vector<64xf32>
    %350 = vector.multi_reduction <add>, %349, %cst_161 [0] : vector<4x64xf32> to vector<64xf32>
    %351 = vector.shape_cast %350 : vector<64xf32> to vector<1x64xf32>
    %cst_162 = arith.constant 5.000000e-01 : f32
    %352 = vector.broadcast %cst_162 : f32 to vector<1x64xf32>
    %353 = arith.mulf %351, %352 : vector<1x64xf32>
    %354 = vector.broadcast %353 : vector<1x64xf32> to vector<4x64xf32>
    %355 = arith.subf %317, %354 : vector<4x64xf32>
    %356 = arith.mulf %355, %355 : vector<4x64xf32>
    %357 = arith.mulf %356, %348 : vector<4x64xf32>
    %cst_163 = arith.constant dense<0.000000e+00> : vector<64xf32>
    %358 = vector.multi_reduction <add>, %357, %cst_163 [0] : vector<4x64xf32> to vector<64xf32>
    %359 = vector.shape_cast %358 : vector<64xf32> to vector<1x64xf32>
    %cst_164 = arith.constant 5.000000e-01 : f32
    %360 = vector.broadcast %cst_164 : f32 to vector<1x64xf32>
    %361 = arith.mulf %359, %360 : vector<1x64xf32>
    %362 = vector.broadcast %353 : vector<1x64xf32> to vector<4x64xf32>
    %363 = arith.subf %317, %362 : vector<4x64xf32>
    %cst_165 = arith.constant 9.99999974E-6 : f32
    %364 = vector.broadcast %cst_165 : f32 to vector<1x64xf32>
    %365 = arith.addf %361, %364 : vector<1x64xf32>
    %366 = math.rsqrt %365 : vector<1x64xf32>
    %367 = vector.broadcast %366 : vector<1x64xf32> to vector<4x64xf32>
    %368 = arith.mulf %363, %367 : vector<4x64xf32>
    %369 = arith.select %324, %346, %368 : vector<4x64xi1>, vector<4x64xf32>
    %370 = vector.broadcast %319 : vector<1x64xf32> to vector<4x64xf32>
    %371 = arith.mulf %369, %370 : vector<4x64xf32>
    %372 = vector.broadcast %321 : vector<1x64xf32> to vector<4x64xf32>
    %373 = arith.addf %371, %372 : vector<4x64xf32>
    %cst_166 = arith.constant 5.000000e-01 : f32
    %374 = vector.broadcast %cst_166 : f32 to vector<4x64xf32>
    %375 = arith.mulf %374, %373 : vector<4x64xf32>
    %cst_167 = arith.constant 0.707106769 : f32
    %376 = vector.broadcast %cst_167 : f32 to vector<4x64xf32>
    %377 = arith.mulf %373, %376 : vector<4x64xf32>
    %378 = math.erf %377 : vector<4x64xf32>
    %cst_168 = arith.constant 1.000000e+00 : f32
    %379 = vector.broadcast %cst_168 : f32 to vector<4x64xf32>
    %380 = arith.addf %379, %378 : vector<4x64xf32>
    %381 = arith.mulf %375, %380 : vector<4x64xf32>
    %382 = arith.truncf %381 : vector<4x64xf32> to vector<4x64xbf16>
    %c0_169 = arith.constant 0 : index
    %c0_170 = arith.constant 0 : index
    %383 = vector.load %arg15[%c0_169, %c0_170] : memref<4x64xbf16, #tpu.memory_space<vmem>>, vector<4x64xbf16>
    tpu.vector_store %arg15[%c0_169, %c0_170], %382 {strides = array<i32>} : memref<4x64xbf16, #tpu.memory_space<vmem>>, vector<4x64xbf16>,
    return
  }
}

module attributes {stable_mosaic.version = 11 : i64} {
  func.func @_loss_kernel(%arg0: memref<4x256xf32, #tpu.memory_space<vmem>>, %arg1: memref<4x256xf32, #tpu.memory_space<vmem>>, %arg2: memref<1x256xf32, #tpu.memory_space<vmem>>, %arg3: memref<1x1xf32, #tpu.memory_space<vmem>>, %arg4: memref<1x1xf32, #tpu.memory_space<vmem>>) attributes {dimension_semantics = [], scalar_prefetch = 0 : i64, scratch_operands = 0 : i64, tpu.core_type = #tpu.core_type<tc>} {
    %c0 = arith.constant 0 : index
    %c0_0 = arith.constant 0 : index
    %0 = vector.load %arg0[%c0, %c0_0] : memref<4x256xf32, #tpu.memory_space<vmem>>, vector<4x256xf32>
    %c0_1 = arith.constant 0 : index
    %c0_2 = arith.constant 0 : index
    %1 = vector.load %arg1[%c0_1, %c0_2] : memref<4x256xf32, #tpu.memory_space<vmem>>, vector<4x256xf32>
    %c0_3 = arith.constant 0 : index
    %c0_4 = arith.constant 0 : index
    %2 = vector.load %arg2[%c0_3, %c0_4] : memref<1x256xf32, #tpu.memory_space<vmem>>, vector<1x256xf32>
    %3 = vector.broadcast %2 : vector<1x256xf32> to vector<4x256xf32>
    %4 = arith.subf %0, %3 : vector<4x256xf32>
    %cst = arith.constant 2.500000e+01 : f32
    %5 = vector.broadcast %cst : f32 to vector<4x256xf32>
    %6 = arith.mulf %4, %5 : vector<4x256xf32>
    %cst_5 = arith.constant dense<0xFF800000> : vector<4xf32>
    %7 = vector.multi_reduction <maximumf>, %6, %cst_5 [1] : vector<4x256xf32> to vector<4xf32>
    %8 = vector.shape_cast %7 : vector<4xf32> to vector<4x1xf32>
    %9 = vector.broadcast %8 : vector<4x1xf32> to vector<4x256xf32>
    %10 = arith.subf %6, %9 : vector<4x256xf32>
    %11 = math.exp %10 : vector<4x256xf32>
    %cst_6 = arith.constant dense<0.000000e+00> : vector<4xf32>
    %12 = vector.multi_reduction <add>, %11, %cst_6 [1] : vector<4x256xf32> to vector<4xf32>
    %13 = vector.shape_cast %12 : vector<4xf32> to vector<4x1xf32>
    %14 = vector.broadcast %13 : vector<4x1xf32> to vector<4x256xf32>
    %15 = arith.divf %11, %14 : vector<4x256xf32>
    %cst_7 = arith.constant 1.000000e+01 : f32
    %16 = vector.broadcast %cst_7 : f32 to vector<4x256xf32>
    %17 = arith.mulf %1, %16 : vector<4x256xf32>
    %cst_8 = arith.constant dense<0xFF800000> : vector<4xf32>
    %18 = vector.multi_reduction <maximumf>, %17, %cst_8 [1] : vector<4x256xf32> to vector<4xf32>
    %19 = vector.shape_cast %18 : vector<4xf32> to vector<4x1xf32>
    %20 = vector.broadcast %19 : vector<4x1xf32> to vector<4x256xf32>
    %21 = arith.subf %17, %20 : vector<4x256xf32>
    %22 = math.exp %21 : vector<4x256xf32>
    %cst_9 = arith.constant dense<0.000000e+00> : vector<4xf32>
    %23 = vector.multi_reduction <add>, %22, %cst_9 [1] : vector<4x256xf32> to vector<4xf32>
    %24 = vector.shape_cast %23 : vector<4xf32> to vector<4x1xf32>
    %25 = math.log %24 : vector<4x1xf32>
    %26 = vector.broadcast %25 : vector<4x1xf32> to vector<4x256xf32>
    %27 = arith.subf %21, %26 : vector<4x256xf32>
    %28 = arith.mulf %15, %27 : vector<4x256xf32>
    %29 = vector.shape_cast %28 : vector<4x256xf32> to vector<1x4x256xf32>
    %cst_10 = arith.constant dense<0.000000e+00> : vector<1xf32>
    %30 = vector.multi_reduction <add>, %29, %cst_10 [1, 2] : vector<1x4x256xf32> to vector<1xf32>
    %31 = vector.shape_cast %30 : vector<1xf32> to vector<1x1x1xf32>
    %32 = vector.extract %31[0, 0, 0] : f32 from vector<1x1x1xf32>
    %cst_11 = arith.constant 0.000000e+00 : f32
    %33 = arith.subf %cst_11, %32 : f32
    %cst_12 = arith.constant 4.000000e+00 : f32
    %34 = arith.divf %33, %cst_12 : f32
    %35 = vector.broadcast %34 : f32 to vector<1x1xf32>
    %c0_13 = arith.constant 0 : index
    %c0_14 = arith.constant 0 : index
    %36 = vector.load %arg3[%c0_13, %c0_14] : memref<1x1xf32, #tpu.memory_space<vmem>>, vector<1x1xf32>
    %cst_15 = arith.constant 1.000000e-01 : f32
    %37 = vector.broadcast %cst_15 : f32 to vector<1x1xf32>
    %38 = arith.mulf %37, %36 : vector<1x1xf32>
    %39 = arith.addf %35, %38 : vector<1x1xf32>
    %c0_16 = arith.constant 0 : index
    %c0_17 = arith.constant 0 : index
    %40 = vector.load %arg4[%c0_16, %c0_17] : memref<1x1xf32, #tpu.memory_space<vmem>>, vector<1x1xf32>
    tpu.vector_store %arg4[%c0_16, %c0_17], %39 {strides = array<i32>} : memref<1x1xf32, #tpu.memory_space<vmem>>, vector<1x1xf32>,
    return
  }
}

</mosaic_0001>

<llo_original>
// kernel: dino_forward.4
$region0: #{dino_forward.4}
  #allocation0 [shape = 'u32[]', space=smem, size = 0x4, offset = 0x4, fixed_abs, tag = 'smem constant byte address 0x4 - core index']
  #allocation1 [shape = 'u32[144,128]{1,0:T(1,128)}', space=vmem, size = 0x12000, scoped, tag = 'internal scratch']
  %s0 = inlined_call_operand.vmem [shape: bf16[4,64], index: 0, kind: input, shape index: {}]
  %s1 = inlined_call_operand.vmem [shape: bf16[4,64], index: 1, kind: input, shape index: {}]
  %s2 = inlined_call_operand.vmem [shape: bf16[2,64,256], index: 2, kind: input, shape index: {}]
  %s3 = inlined_call_operand.vmem [shape: f32[2,1,256], index: 3, kind: input, shape index: {}]
  %s4 = inlined_call_operand.vmem [shape: f32[4,256], index: 4, kind: output, shape index: {0}]
  %s5 = inlined_call_operand.vmem [shape: f32[4,256], index: 5, kind: output, shape index: {1}]
  %6 = xla_tuple %s4, %s5
  %s7 = sld [smem:[#allocation0]]
  $region132: #{dino_forward.4} parent=0
    _
  %s9 = ssub.s32 1, %s7
  %s10 = scalar_select 0, %s9, %s7
  $region1: #{dino_forward.4} parent=0
    #allocation2 [shape = 'u8[65536]{0}', space=vmem, size = 0x10000, scoped, tag = 'input window, operand 2']
    #allocation3 [shape = 'u8[2048]{0}', space=vmem, size = 0x800, scoped, tag = 'input window, operand 3']
    loop: start=0, step=1, limit=4
    $region2: #{dino_forward.4} parent=1 // loop_pre_header
      _
    $region3: #{dino_forward.4} parent=1 // loop_header
      %s12 = sphi 0, %s16
      %p13 = scmp.ge.s32.totalorder %s12, 4
      %s20 = sphi 0, %s20
      %s22 = sphi 0, %s20
      %s23 = sphi 0, %s22
      %s37 = sphi 0, %s23
      %s41 = sphi 0, %s41
      %s43 = sphi 0, %s41
      %s44 = sphi 0, %s43
      %s58 = sphi 0, %s44
      %s64 = sphi 0, %s66
      %s67 = sphi 0, %s64
      %s68 = sphi 0, %s67
      %s84 = sphi 0, %s68
      %s90 = sphi 0, %s92
      %s93 = sphi 0, %s90
      %s94 = sphi 0, %s93
      %s110 = sphi 0, %s94
      %s116 = sphi 0, %s118
      %s119 = sphi 0, %s116
      %s120 = sphi 0, %s119
      %s136 = sphi 0, %s120
      %s142 = sphi 0, %s144
      %s145 = sphi 0, %s142
      %s146 = sphi 0, %s145
      %s162 = sphi 0, %s146
    $region4: #{dino_forward.4} parent=1 // loop_header_branch
      %15 = sbr.rel (%p13) target = $region8
    $region5: #{dino_forward.4} parent=1 // loop_body
      %s17 = ssub.s32 %s12, 1
      %s18 = ssub.s32 %s12, 2
      %s19 = sadd.s32 %s12, 1
      %s21 = sadd.s32 %s20, 1
      %p24 = scmp.eq.s32.totalorder %s12, 1
      %p25 = scmp.ne.s32.totalorder %s20, %s22
      %p26 = scmp.eq.s32.totalorder %s12, 0
      %p27 = por %p25, %p26
      %p28 = scmp.ne.s32.totalorder %s20, %s22
      %p29 = scmp.eq.s32.totalorder %s17, 1
      %p30 = por %p28, %p29
      %p31 = scmp.ne.s32.totalorder %s22, %s23
      %p32 = scmp.eq.s32.totalorder %s17, 0
      %p33 = por %p31, %p32
      %p34 = scmp.ne.s32.totalorder %s22, %s23
      %p35 = scmp.eq.s32.totalorder %s18, 1
      %p36 = por %p34, %p35
      %p38 = scmp.ne.s32.totalorder %s23, %s37
      %p39 = scmp.eq.s32.totalorder %s18, 0
      %p40 = por %p38, %p39
      %s42 = sadd.s32 %s41, 1
      %p45 = scmp.eq.s32.totalorder %s12, 1
      %p46 = scmp.ne.s32.totalorder %s41, %s43
      %p47 = scmp.eq.s32.totalorder %s12, 0
      %p48 = por %p46, %p47
      %p49 = scmp.ne.s32.totalorder %s41, %s43
      %p50 = scmp.eq.s32.totalorder %s17, 1
      %p51 = por %p49, %p50
      %p52 = scmp.ne.s32.totalorder %s43, %s44
      %p53 = scmp.eq.s32.totalorder %s17, 0
      %p54 = por %p52, %p53
      %p55 = scmp.ne.s32.totalorder %s43, %s44
      %p56 = scmp.eq.s32.totalorder %s18, 1
      %p57 = por %p55, %p56
      %p59 = scmp.ne.s32.totalorder %s44, %s58
      %p60 = scmp.eq.s32.totalorder %s18, 0
      %p61 = por %p59, %p60
      %s62 = ssub.s32 %s12, %s19
      %p63 = scmp.eq.s32.totalorder %s62, 0
      %s65 = sadd.s32 %s64, 1
      %s66 = scalar_select %p63, %s64, %s65
      %p69 = pneg %p63
      %p70 = scmp.eq.s32.totalorder %s12, 1
      %p71 = por %p69, %p70
      %p72 = scmp.ne.s32.totalorder %s64, %s67
      %p73 = scmp.eq.s32.totalorder %s12, 0
      %p74 = por %p72, %p73
      %p75 = scmp.ne.s32.totalorder %s64, %s67
      %p76 = scmp.eq.s32.totalorder %s17, 1
      %p77 = por %p75, %p76
      %p78 = scmp.ne.s32.totalorder %s67, %s68
      %p79 = scmp.eq.s32.totalorder %s17, 0
      %p80 = por %p78, %p79
      %p81 = scmp.ne.s32.totalorder %s67, %s68
      %p82 = scmp.eq.s32.totalorder %s18, 1
      %p83 = por %p81, %p82
      %p85 = scmp.ne.s32.totalorder %s68, %s84
      %p86 = scmp.eq.s32.totalorder %s18, 0
      %p87 = por %p85, %p86
      %s88 = ssub.s32 %s12, %s19
      %p89 = scmp.eq.s32.totalorder %s88, 0
      %s91 = sadd.s32 %s90, 1
      %s92 = scalar_select %p89, %s90, %s91
      %p95 = pneg %p89
      %p96 = scmp.eq.s32.totalorder %s12, 1
      %p97 = por %p95, %p96
      %p98 = scmp.ne.s32.totalorder %s90, %s93
      %p99 = scmp.eq.s32.totalorder %s12, 0
      %p100 = por %p98, %p99
      %p101 = scmp.ne.s32.totalorder %s90, %s93
      %p102 = scmp.eq.s32.totalorder %s17, 1
      %p103 = por %p101, %p102
      %p104 = scmp.ne.s32.totalorder %s93, %s94
      %p105 = scmp.eq.s32.totalorder %s17, 0
      %p106 = por %p104, %p105
      %p107 = scmp.ne.s32.totalorder %s93, %s94
      %p108 = scmp.eq.s32.totalorder %s18, 1
      %p109 = por %p107, %p108
      %p111 = scmp.ne.s32.totalorder %s94, %s110
      %p112 = scmp.eq.s32.totalorder %s18, 0
      %p113 = por %p111, %p112
      %s114 = ssub.s32 %s12, %s19
      %p115 = scmp.eq.s32.totalorder %s114, 0
      %s117 = sadd.s32 %s116, 1
      %s118 = scalar_select %p115, %s116, %s117
      %p121 = pneg %p115
      %p122 = scmp.eq.s32.totalorder %s12, 1
      %p123 = por %p121, %p122
      %p124 = scmp.ne.s32.totalorder %s116, %s119
      %p125 = scmp.eq.s32.totalorder %s12, 0
      %p126 = por %p124, %p125
      %p127 = scmp.ne.s32.totalorder %s116, %s119
      %p128 = scmp.eq.s32.totalorder %s17, 1
      %p129 = por %p127, %p128
      %p130 = scmp.ne.s32.totalorder %s119, %s120
      %p131 = scmp.eq.s32.totalorder %s17, 0
      %p132 = por %p130, %p131
      %p133 = scmp.ne.s32.totalorder %s119, %s120
      %p134 = scmp.eq.s32.totalorder %s18, 1
      %p135 = por %p133, %p134
      %p137 = scmp.ne.s32.totalorder %s120, %s136
      %p138 = scmp.eq.s32.totalorder %s18, 0
      %p139 = por %p137, %p138
      %s140 = ssub.s32 %s12, %s19
      %p141 = scmp.eq.s32.totalorder %s140, 0
      %s143 = sadd.s32 %s142, 1
      %s144 = scalar_select %p141, %s142, %s143
      %p147 = pneg %p141
      %p148 = scmp.eq.s32.totalorder %s12, 1
      %p149 = por %p147, %p148
      %p150 = scmp.ne.s32.totalorder %s142, %s145
      %p151 = scmp.eq.s32.totalorder %s12, 0
      %p152 = por %p150, %p151
      %p153 = scmp.ne.s32.totalorder %s142, %s145
      %p154 = scmp.eq.s32.totalorder %s17, 1
      %p155 = por %p153, %p154
      %p156 = scmp.ne.s32.totalorder %s145, %s146
      %p157 = scmp.eq.s32.totalorder %s17, 0
      %p158 = por %p156, %p157
      %p159 = scmp.ne.s32.totalorder %s145, %s146
      %p160 = scmp.eq.s32.totalorder %s18, 1
      %p161 = por %p159, %p160
      %p163 = scmp.ne.s32.totalorder %s146, %s162
      %p164 = scmp.eq.s32.totalorder %s18, 0
      %p165 = por %p163, %p164
      %p166 = scmp.le.s32.totalorder 1, %s12
      %p167 = scmp.lt.s32.totalorder %s12, 3
      %p168 = pnand %p166, %p167
      %p169 = pneg %p168
      // Predicated region
      $region9: #{dino_forward.4} parent=5 // pred_check
        _
      $region10: #{dino_forward.4} parent=5 // pred_check_branch
        %171 = sbr.rel (%p168) target = $region12
      $region11: #{dino_forward.4} parent=5 // pred_region
        %s172 = ssub.s32 %s12, 1
        // Predicated region
        $region13: #{dino_forward.4} parent=11 // pred_check
          %p173 = pneg %p33
        $region14: #{dino_forward.4} parent=11 // pred_check_branch
          %175 = sbr.rel (%p173) target = $region16
        $region15: #{dino_forward.4} parent=11 // pred_region
          _
        $region16: #{dino_forward.4} parent=11 // pred_fallthru
          _
        // Predicated region
        $region17: #{dino_forward.4} parent=11 // pred_check
          %p176 = pneg %p54
        $region18: #{dino_forward.4} parent=11 // pred_check_branch
          %178 = sbr.rel (%p176) target = $region20
        $region19: #{dino_forward.4} parent=11 // pred_region
          _
        $region20: #{dino_forward.4} parent=11 // pred_fallthru
          _
      $region12: #{dino_forward.4} parent=5 // pred_fallthru
        _
      %p179 = scmp.lt.s32.totalorder %s12, 2
      // Predicated region
      $region21: #{dino_forward.4} parent=5 // pred_check
        %p180 = pneg %p179
      $region22: #{dino_forward.4} parent=5 // pred_check_branch
        %182 = sbr.rel (%p180) target = $region24
      $region23: #{dino_forward.4} parent=5 // pred_region
        // Predicated region
        $region25: #{dino_forward.4} parent=23 // pred_check
          %p183 = pneg %p74
        $region26: #{dino_forward.4} parent=23 // pred_check_branch
          %185 = sbr.rel (%p183) target = $region28
        $region27: #{dino_forward.4} parent=23 // pred_region
          %s186 = sand.u32 %s64, 1
          %s187 = sand.u32 %s64, 1
          %s188 = smul.addr %s187, 64
          %s189 = scalar_lea.vmem [#allocation2], %s188
          %s190 = smul.addr %s12, 4
          %s191 = scalar_lea.vmem %s2, %s190
          // Predicated region
          $region29: #{dino_forward.4} parent=27 // pred_check
            _
          $region30: #{dino_forward.4} parent=27 // pred_check_branch
            %193 = sbr.rel (0) target = $region32
          $region31: #{dino_forward.4} parent=27 // pred_region
            // Predicated region
            $region33: #{dino_forward.4} parent=31 // pred_check
              _
            $region34: #{dino_forward.4} parent=31 // pred_check_branch
              %195 = sbr.rel target = $region36
            $region35: #{dino_forward.4} parent=31 // pred_region
              // Predicated region
              $region48: #{dino_forward.4} parent=35 // pred_check
                _
              $region49: #{dino_forward.4} parent=35 // pred_check_branch
                %240 = sbr.rel (0) target = $region51
              $region50: #{dino_forward.4} parent=35 // pred_region
                loop: start=0, step=1, limit=1
                $region52: #{dino_forward.4} parent=50 // loop_pre_header
                  _
                $region53: #{dino_forward.4} parent=50 // loop_header
                  %s242 = sphi 0, %s246
                  %p243 = scmp.ge.s32.totalorder %s242, 1
                  %s247 = sphi %s191, %s191
                  %s248 = sphi %s189, %s189
                $region54: #{dino_forward.4} parent=50 // loop_header_branch
                  %245 = sbr.rel (%p243) target = $region58
                $region55: #{dino_forward.4} parent=50 // loop_body
                  _
                $region56: #{dino_forward.4} parent=50 // loop_footer
                  %s246 = sadd.s32 1, %s242
                $region57: #{dino_forward.4} parent=50 // loop_footer_branch
                  %241 = sbr.rel target = $region53
                $region58: #{dino_forward.4} parent=50 // loop_exit
                  _
                loop: start=0, step=1, limit=1
                $region59: #{dino_forward.4} parent=50 // loop_pre_header
                  _
                $region60: #{dino_forward.4} parent=50 // loop_header
                  %s251 = sphi 0, %s255
                  %p252 = scmp.ge.s32.totalorder %s251, 1
                  %s256 = sphi %s191, %s191
                  %s257 = sphi %s189, %s189
                $region61: #{dino_forward.4} parent=50 // loop_header_branch
                  %254 = sbr.rel (%p252) target = $region65
                $region62: #{dino_forward.4} parent=50 // loop_body
                  %v258 = vld [vmem:[%s256] sm:$0xf]
                  %259 = vst [vmem:[%s257] sm:$0xf] %v258
                  %v260 = vld [vmem:[%s256 + $0x8] sm:$0xf]
                  %261 = vst [vmem:[%s257 + $0x4] sm:$0xf] %v260
                  %v262 = vld [vmem:[%s256 + $0x10] sm:$0xf]
                  %263 = vst [vmem:[%s257 + $0x8] sm:$0xf] %v262
                  %v264 = vld [vmem:[%s256 + $0x18] sm:$0xf]
                  %265 = vst [vmem:[%s257 + $0xc] sm:$0xf] %v264
                  %v266 = vld [vmem:[%s256 + $0x20] sm:$0xf]
                  %267 = vst [vmem:[%s257 + $0x10] sm:$0xf] %v266
                  %v268 = vld [vmem:[%s256 + $0x28] sm:$0xf]
                  %269 = vst [vmem:[%s257 + $0x14] sm:$0xf] %v268
                  %v270 = vld [vmem:[%s256 + $0x30] sm:$0xf]
                  %271 = vst [vmem:[%s257 + $0x18] sm:$0xf] %v270
                  %v272 = vld [vmem:[%s256 + $0x38] sm:$0xf]
                  %273 = vst [vmem:[%s257 + $0x1c] sm:$0xf] %v272
                  %v274 = vld [vmem:[%s256 + $0x40] sm:$0xf]
                  %275 = vst [vmem:[%s257 + $0x20] sm:$0xf] %v274
                  %v276 = vld [vmem:[%s256 + $0x48] sm:$0xf]
                  %277 = vst [vmem:[%s257 + $0x24] sm:$0xf] %v276
                  %v278 = vld [vmem:[%s256 + $0x50] sm:$0xf]
                  %279 = vst [vmem:[%s257 + $0x28] sm:$0xf] %v278
                  %v280 = vld [vmem:[%s256 + $0x58] sm:$0xf]
                  %281 = vst [vmem:[%s257 + $0x2c] sm:$0xf] %v280
                  %v282 = vld [vmem:[%s256 + $0x60] sm:$0xf]
                  %283 = vst [vmem:[%s257 + $0x30] sm:$0xf] %v282
                  %v284 = vld [vmem:[%s256 + $0x68] sm:$0xf]
                  %285 = vst [vmem:[%s257 + $0x34] sm:$0xf] %v284
                  %v286 = vld [vmem:[%s256 + $0x70] sm:$0xf]
                  %287 = vst [vmem:[%s257 + $0x38] sm:$0xf] %v286
                  %v288 = vld [vmem:[%s256 + $0x78] sm:$0xf]
                  %289 = vst [vmem:[%s257 + $0x3c] sm:$0xf] %v288
                $region63: #{dino_forward.4} parent=50 // loop_footer
                  %s255 = sadd.s32 1, %s251
                $region64: #{dino_forward.4} parent=50 // loop_footer_branch
                  %250 = sbr.rel target = $region60
                $region65: #{dino_forward.4} parent=50 // loop_exit
                  _
              $region51: #{dino_forward.4} parent=35 // pred_fallthru
                _
            $region36: #{dino_forward.4} parent=31 // pred_fallthru
              _
            // Predicated region
            $region37: #{dino_forward.4} parent=31 // pred_check
              _
            $region38: #{dino_forward.4} parent=31 // pred_check_branch
              %197 = sbr.rel (0) target = $region40
            $region39: #{dino_forward.4} parent=31 // pred_region
              loop: start=0, step=1, limit=1
              $region41: #{dino_forward.4} parent=39 // loop_pre_header
                _
              $region42: #{dino_forward.4} parent=39 // loop_header
                %s200 = sphi 0, %s204
                %p201 = scmp.ge.s32.totalorder %s200, 1
                %s205 = sphi %s191, %s191
                %s206 = sphi %s189, %s189
              $region43: #{dino_forward.4} parent=39 // loop_header_branch
                %203 = sbr.rel (%p201) target = $region47
              $region44: #{dino_forward.4} parent=39 // loop_body
                %v207 = vld [vmem:[%s205] sm:$0xf]
                %208 = vst [vmem:[%s206] sm:$0xf] %v207
                %v209 = vld [vmem:[%s205 + $0x8] sm:$0xf]
                %210 = vst [vmem:[%s206 + $0x4] sm:$0xf] %v209
                %v211 = vld [vmem:[%s205 + $0x10] sm:$0xf]
                %212 = vst [vmem:[%s206 + $0x8] sm:$0xf] %v211
                %v213 = vld [vmem:[%s205 + $0x18] sm:$0xf]
                %214 = vst [vmem:[%s206 + $0xc] sm:$0xf] %v213
                %v215 = vld [vmem:[%s205 + $0x20] sm:$0xf]
                %216 = vst [vmem:[%s206 + $0x10] sm:$0xf] %v215
                %v217 = vld [vmem:[%s205 + $0x28] sm:$0xf]
                %218 = vst [vmem:[%s206 + $0x14] sm:$0xf] %v217
                %v219 = vld [vmem:[%s205 + $0x30] sm:$0xf]
                %220 = vst [vmem:[%s206 + $0x18] sm:$0xf] %v219
                %v221 = vld [vmem:[%s205 + $0x38] sm:$0xf]
                %222 = vst [vmem:[%s206 + $0x1c] sm:$0xf] %v221
                %v223 = vld [vmem:[%s205 + $0x40] sm:$0xf]
                %224 = vst [vmem:[%s206 + $0x20] sm:$0xf] %v223
                %v225 = vld [vmem:[%s205 + $0x48] sm:$0xf]
                %226 = vst [vmem:[%s206 + $0x24] sm:$0xf] %v225
                %v227 = vld [vmem:[%s205 + $0x50] sm:$0xf]
                %228 = vst [vmem:[%s206 + $0x28] sm:$0xf] %v227
                %v229 = vld [vmem:[%s205 + $0x58] sm:$0xf]
                %230 = vst [vmem:[%s206 + $0x2c] sm:$0xf] %v229
                %v231 = vld [vmem:[%s205 + $0x60] sm:$0xf]
                %232 = vst [vmem:[%s206 + $0x30] sm:$0xf] %v231
                %v233 = vld [vmem:[%s205 + $0x68] sm:$0xf]
                %234 = vst [vmem:[%s206 + $0x34] sm:$0xf] %v233
                %v235 = vld [vmem:[%s205 + $0x70] sm:$0xf]
                %236 = vst [vmem:[%s206 + $0x38] sm:$0xf] %v235
                %v237 = vld [vmem:[%s205 + $0x78] sm:$0xf]
                %238 = vst [vmem:[%s206 + $0x3c] sm:$0xf] %v237
              $region45: #{dino_forward.4} parent=39 // loop_footer
                %s204 = sadd.s32 1, %s200
              $region46: #{dino_forward.4} parent=39 // loop_footer_branch
                %199 = sbr.rel target = $region42
              $region47: #{dino_forward.4} parent=39 // loop_exit
                _
            $region40: #{dino_forward.4} parent=31 // pred_fallthru
              _
          $region32: #{dino_forward.4} parent=27 // pred_fallthru
            _
          %290 = vnop
        $region28: #{dino_forward.4} parent=23 // pred_fallthru
          _
        // Predicated region
        $region66: #{dino_forward.4} parent=23 // pred_check
          %p291 = pneg %p100
        $region67: #{dino_forward.4} parent=23 // pred_check_branch
          %293 = sbr.rel (%p291) target = $region69
        $region68: #{dino_forward.4} parent=23 // pred_region
          %s294 = sand.u32 %s90, 1
          %s295 = sand.u32 %s90, 1
          %s296 = smul.addr %s295, 2
          %s297 = scalar_lea.vmem [#allocation3], %s296
          %s298 = scalar_lea.vmem %s3, %s12
          // Predicated region
          $region70: #{dino_forward.4} parent=68 // pred_check
            _
          $region71: #{dino_forward.4} parent=68 // pred_check_branch
            %300 = sbr.rel (0) target = $region73
          $region72: #{dino_forward.4} parent=68 // pred_region
            // Predicated region
            $region74: #{dino_forward.4} parent=72 // pred_check
              _
            $region75: #{dino_forward.4} parent=72 // pred_check_branch
              %302 = sbr.rel target = $region77
            $region76: #{dino_forward.4} parent=72 // pred_region
              // Predicated region
              $region89: #{dino_forward.4} parent=76 // pred_check
                _
              $region90: #{dino_forward.4} parent=76 // pred_check_branch
                %319 = sbr.rel (0) target = $region92
              $region91: #{dino_forward.4} parent=76 // pred_region
                loop: start=0, step=1, limit=1
                $region93: #{dino_forward.4} parent=91 // loop_pre_header
                  _
                $region94: #{dino_forward.4} parent=91 // loop_header
                  %s322 = sphi 0, %s326
                  %p323 = scmp.ge.s32.totalorder %s322, 1
                  %s327 = sphi %s298, %s298
                  %s328 = sphi %s297, %s297
                $region95: #{dino_forward.4} parent=91 // loop_header_branch
                  %325 = sbr.rel (%p323) target = $region99
                $region96: #{dino_forward.4} parent=91 // loop_body
                  %v329 = vld [vmem:[%s327] sm:$0x1]
                  %330 = vst [vmem:[%s328] sm:$0x1] %v329
                  %v331 = vld [vmem:[%s327 + $0x2] sm:$0x1]
                  %332 = vst [vmem:[%s328 + $0x1] sm:$0x1] %v331
                $region97: #{dino_forward.4} parent=91 // loop_footer
                  %s326 = sadd.s32 1, %s322
                $region98: #{dino_forward.4} parent=91 // loop_footer_branch
                  %321 = sbr.rel target = $region94
                $region99: #{dino_forward.4} parent=91 // loop_exit
                  _
              $region92: #{dino_forward.4} parent=76 // pred_fallthru
                _
            $region77: #{dino_forward.4} parent=72 // pred_fallthru
              _
            // Predicated region
            $region78: #{dino_forward.4} parent=72 // pred_check
              _
            $region79: #{dino_forward.4} parent=72 // pred_check_branch
              %304 = sbr.rel (0) target = $region81
            $region80: #{dino_forward.4} parent=72 // pred_region
              loop: start=0, step=1, limit=1
              $region82: #{dino_forward.4} parent=80 // loop_pre_header
                _
              $region83: #{dino_forward.4} parent=80 // loop_header
                %s307 = sphi 0, %s311
                %p308 = scmp.ge.s32.totalorder %s307, 1
                %s312 = sphi %s298, %s298
                %s313 = sphi %s297, %s297
              $region84: #{dino_forward.4} parent=80 // loop_header_branch
                %310 = sbr.rel (%p308) target = $region88
              $region85: #{dino_forward.4} parent=80 // loop_body
                %v314 = vld [vmem:[%s312] sm:$0x1]
                %315 = vst [vmem:[%s313] sm:$0x1] %v314
                %v316 = vld [vmem:[%s312 + $0x2] sm:$0x1]
                %317 = vst [vmem:[%s313 + $0x1] sm:$0x1] %v316
              $region86: #{dino_forward.4} parent=80 // loop_footer
                %s311 = sadd.s32 1, %s307
              $region87: #{dino_forward.4} parent=80 // loop_footer_branch
                %306 = sbr.rel target = $region83
              $region88: #{dino_forward.4} parent=80 // loop_exit
                _
            $region81: #{dino_forward.4} parent=72 // pred_fallthru
              _
          $region73: #{dino_forward.4} parent=68 // pred_fallthru
            _
          %333 = vnop
        $region69: #{dino_forward.4} parent=23 // pred_fallthru
          _
      $region24: #{dino_forward.4} parent=5 // pred_fallthru
        _
      %p334 = scmp.le.s32.totalorder 1, %s12
      %p335 = scmp.lt.s32.totalorder %s12, 3
      %p336 = pnand %p334, %p335
      %p337 = pneg %p336
      // Predicated region
      $region100: #{dino_forward.4} parent=5 // pred_check
        _
      $region101: #{dino_forward.4} parent=5 // pred_check_branch
        %339 = sbr.rel (%p336) target = $region103
      $region102: #{dino_forward.4} parent=5 // pred_region
        %s340 = ssub.s32 %s12, 1
        %s341 = sand.u32 %s67, 1
        %s342 = sand.u32 %s67, 1
        %s343 = smul.addr %s342, 64
        %s344 = scalar_lea.vmem [#allocation2], %s343
        // Predicated region
        $region104: #{dino_forward.4} parent=102 // pred_check
          %p345 = pneg %p80
        $region105: #{dino_forward.4} parent=102 // pred_check_branch
          %347 = sbr.rel (%p345) target = $region107
        $region106: #{dino_forward.4} parent=102 // pred_region
          _
        $region107: #{dino_forward.4} parent=102 // pred_fallthru
          _
        %s348 = sand.u32 %s93, 1
        %s349 = sand.u32 %s93, 1
        %s350 = smul.addr %s349, 2
        %s351 = scalar_lea.vmem [#allocation3], %s350
        // Predicated region
        $region108: #{dino_forward.4} parent=102 // pred_check
          %p352 = pneg %p106
        $region109: #{dino_forward.4} parent=102 // pred_check_branch
          %354 = sbr.rel (%p352) target = $region111
        $region110: #{dino_forward.4} parent=102 // pred_region
          _
        $region111: #{dino_forward.4} parent=102 // pred_fallthru
          _
        %p355 = pneg %p33
        %p356 = pneg %p30
        %p357 = pneg %p54
        %p358 = pneg %p51
        %s359 = sand.u32 %s67, 1
        %s360 = sand.u32 %s67, 1
        %s361 = smul.addr %s360, 64
        %s362 = scalar_lea.vmem [#allocation2], %s361
        %p363 = pneg %p80
        %p364 = pneg %p77
        %s365 = sand.u32 %s93, 1
        %s366 = sand.u32 %s93, 1
        %s367 = smul.addr %s366, 2
        %s368 = scalar_lea.vmem [#allocation3], %s367
        %p369 = pneg %p106
        %p370 = pneg %p103
        %p371 = pneg %p132
        %p372 = pneg %p129
        %p373 = scmp.lt.s32.totalorder %s17, 1
        %s374 = scalar_select %p373, %s17, 1
        %s375 = smul.addr %s374, 4
        %s376 = scalar_lea.vmem %s4, %s375
        %p377 = pneg %p158
        %p378 = pneg %p155
        %p379 = scmp.lt.s32.totalorder %s17, 1
        %s380 = scalar_select %p379, %s17, 1
        %s381 = smul.addr %s380, 4
        %s382 = scalar_lea.vmem %s5, %s381
        %p383 = scmp.lt.s32.totalorder %s17, 1
        %s384 = scalar_select %p383, %s17, 1
        %s385 = smul.addr %s384, 4
        %s386 = scalar_lea.vmem %s4, %s385
        %p387 = scmp.lt.s32.totalorder %s17, 1
        %s388 = scalar_select %p387, %s17, 1
        %s389 = smul.addr %s388, 4
        %s390 = scalar_lea.vmem %s5, %s389
        %v392 = vld [vmem:[%s0] sm:$0x3]
        %v393 = vld [vmem:[%s344] sm:$0xf]
        %v394 = vld [vmem:[%s344 + $0x4] sm:$0xf]
        %v395 = vld [vmem:[%s344 + $0x8] sm:$0xf]
        %v396 = vld [vmem:[%s344 + $0xc] sm:$0xf]
        %v397 = vld [vmem:[%s344 + $0x10] sm:$0xf]
        %v398 = vld [vmem:[%s344 + $0x14] sm:$0xf]
        %v399 = vld [vmem:[%s344 + $0x18] sm:$0xf]
        %v400 = vld [vmem:[%s344 + $0x1c] sm:$0xf]
        %v401 = vld [vmem:[%s351] sm:$0x1]
        %v403 = vlaneseq
        %v404 = vshrl.u32 %v403, 7
        %v405 = vsub.s32 0, %v404
        %v406 = vrot.slane %v401, %v405
        %v416 = vunpack.c.l.b16 %v393
        %v417 = vunpack.c.l.b16 %v394
        %v418 = vunpack.c.l.b16 %v395
        %v419 = vunpack.c.l.b16 %v396
        %v420 = vunpack.c.l.b16 %v397
        %v421 = vunpack.c.l.b16 %v398
        %v422 = vunpack.c.l.b16 %v399
        %v423 = vunpack.c.l.b16 %v400
        %v424 = vpack.c.b16 %v417, %v416
        %v425 = vpack.c.b16 %v419, %v418
        %v426 = vpack.c.b16 %v421, %v420
        %v427 = vpack.c.b16 %v423, %v422
        %vm432 = vcmask 523264
        %v434 = vsel %vm432, %v392, 0
        %436 = vmatprep.subr.bf16.mxu0 0
        %437 = vmatpush1.bf16.msra.mxu0 %v424
        %438 = vmatprep.subr.bf16.mxu0 0
        %439 = vmatpush1.bf16.msra.mxu0 %v425
        %440 = vmatprep.subr.bf16.mxu0 0
        %441 = vmatpush1.bf16.msra.mxu0 %v426
        %442 = vmatprep.subr.bf16.mxu0 0
        %443 = vmatpush1.bf16.msra.mxu0 %v427
        %444 = vmatprep.subr.bf16.mxu0 0
        %445 = vmatpush1.bf16.msra.mxu0 0
        %446 = vmatprep.subr.bf16.mxu0 0
        %447 = vmatpush1.bf16.msra.mxu0 0
        %448 = vmatprep.subr.bf16.mxu0 0
        %449 = vmatpush1.bf16.msra.mxu0 0
        %450 = vmatprep.subr.bf16.mxu0 0
        %451 = vmatpush1.bf16.msra.mxu0 0
        %452 = vmatprep.subr.bf16.mxu0 0
        %453 = vmatpush1.bf16.msra.mxu0 0
        %454 = vmatprep.subr.bf16.mxu0 0
        %455 = vmatpush1.bf16.msra.mxu0 0
        %456 = vmatprep.subr.bf16.mxu0 0
        %457 = vmatpush1.bf16.msra.mxu0 0
        %458 = vmatprep.subr.bf16.mxu0 0
        %459 = vmatpush1.bf16.msra.mxu0 0
        %460 = vmatprep.subr.bf16.mxu0 0
        %461 = vmatpush1.bf16.msra.mxu0 0
        %462 = vmatprep.subr.bf16.mxu0 0
        %463 = vmatpush1.bf16.msra.mxu0 0
        %464 = vmatprep.subr.bf16.mxu0 0
        %465 = vmatpush1.bf16.msra.mxu0 0
        %466 = vmatprep.subr.bf16.mxu0 0
        %467 = vmatpush1.bf16.msra.mxu0 0
        %468 = vmatprep.mubr.bf16.mxu0 0
        %469 = vmatmul.mubr.bf16.gmra.mrb[0].mxu0 %v434
        %v470 = vpop.f32.mrb[0].mxu0
        %v471 = vadd.f32 %v406, %v470
        %v472 = vpop.f32.mrb[0].mxu0
        %v473 = vpop.f32.mrb[0].mxu0
        %v474 = vpop.f32.mrb[0].mxu0
        %475 = vdwg.mxu0
        %v476 = vld [vmem:[%s1] sm:$0x3]
        %s477 = scalar_lea.vmem %s344, 32 [#allocation2]
        %v478 = vld [vmem:[%s477] sm:$0xf]
        %v479 = vld [vmem:[%s477 + $0x4] sm:$0xf]
        %v480 = vld [vmem:[%s477 + $0x8] sm:$0xf]
        %v481 = vld [vmem:[%s477 + $0xc] sm:$0xf]
        %v482 = vld [vmem:[%s477 + $0x10] sm:$0xf]
        %v483 = vld [vmem:[%s477 + $0x14] sm:$0xf]
        %v484 = vld [vmem:[%s477 + $0x18] sm:$0xf]
        %v485 = vld [vmem:[%s477 + $0x1c] sm:$0xf]
        %s486 = scalar_lea.vmem %s351, 1 [#allocation3]
        %v487 = vld [vmem:[%s486] sm:$0x1]
        %v489 = vlaneseq
        %v490 = vshrl.u32 %v489, 7
        %v491 = vsub.s32 0, %v490
        %v492 = vrot.slane %v487, %v491
        %v502 = vunpack.c.l.b16 %v478
        %v503 = vunpack.c.l.b16 %v479
        %v504 = vunpack.c.l.b16 %v480
        %v505 = vunpack.c.l.b16 %v481
        %v506 = vunpack.c.l.b16 %v482
        %v507 = vunpack.c.l.b16 %v483
        %v508 = vunpack.c.l.b16 %v484
        %v509 = vunpack.c.l.b16 %v485
        %v510 = vpack.c.b16 %v503, %v502
        %v511 = vpack.c.b16 %v505, %v504
        %v512 = vpack.c.b16 %v507, %v506
        %v513 = vpack.c.b16 %v509, %v508
        %v519 = vsel %vm432, %v476, 0
        %521 = vmatprep.subr.bf16.mxu0 0
        %522 = vmatpush1.bf16.msra.mxu0 %v510
        %523 = vmatprep.subr.bf16.mxu0 0
        %524 = vmatpush1.bf16.msra.mxu0 %v511
        %525 = vmatprep.subr.bf16.mxu0 0
        %526 = vmatpush1.bf16.msra.mxu0 %v512
        %527 = vmatprep.subr.bf16.mxu0 0
        %528 = vmatpush1.bf16.msra.mxu0 %v513
        %529 = vmatprep.subr.bf16.mxu0 0
        %530 = vmatpush1.bf16.msra.mxu0 0
        %531 = vmatprep.subr.bf16.mxu0 0
        %532 = vmatpush1.bf16.msra.mxu0 0
        %533 = vmatprep.subr.bf16.mxu0 0
        %534 = vmatpush1.bf16.msra.mxu0 0
        %535 = vmatprep.subr.bf16.mxu0 0
        %536 = vmatpush1.bf16.msra.mxu0 0
        %537 = vmatprep.subr.bf16.mxu0 0
        %538 = vmatpush1.bf16.msra.mxu0 0
        %539 = vmatprep.subr.bf16.mxu0 0
        %540 = vmatpush1.bf16.msra.mxu0 0
        %541 = vmatprep.subr.bf16.mxu0 0
        %542 = vmatpush1.bf16.msra.mxu0 0
        %543 = vmatprep.subr.bf16.mxu0 0
        %544 = vmatpush1.bf16.msra.mxu0 0
        %545 = vmatprep.subr.bf16.mxu0 0
        %546 = vmatpush1.bf16.msra.mxu0 0
        %547 = vmatprep.subr.bf16.mxu0 0
        %548 = vmatpush1.bf16.msra.mxu0 0
        %549 = vmatprep.subr.bf16.mxu0 0
        %550 = vmatpush1.bf16.msra.mxu0 0
        %551 = vmatprep.subr.bf16.mxu0 0
        %552 = vmatpush1.bf16.msra.mxu0 0
        %553 = vmatprep.mubr.bf16.mxu0 0
        %554 = vmatmul.mubr.bf16.gmra.mrb[0].mxu0 %v519
        %v555 = vpop.f32.mrb[0].mxu0
        %v556 = vadd.f32 %v492, %v555
        %v557 = vpop.f32.mrb[0].mxu0
        %v558 = vpop.f32.mrb[0].mxu0
        %v559 = vpop.f32.mrb[0].mxu0
        %560 = vdwg.mxu0
        %v561 = vlaneseq
        %v562 = vshrl.u32 %v561, 7
        %vm563 = vcmp.lt.s32.totalorder %v562, 2
        %v564 = vsel %vm563, 1, 0
        %v565 = vcvt.s32.f32 %v564
        %v566 = vmul.f32 %v471, %v565
        %vm567 = vcmask 1043456
        %v568 = vsel %vm567, %v566, 0.0
        %v569 = vrot.slane %v568, 4
        %v570 = vadd.f32 %v568, %v569
        %v571 = vrot.slane %v570, 2
        %v572 = vadd.f32 %v570, %v571
        %v573 = vrot.slane %v572, 1
        %v574 = vadd.f32 %v572, %v573
        %v575 = vmul.f32 %v574, 0.5
        %v576 = vsub.f32 %v471, %v575
        %v577 = vmul.f32 %v576, %v576
        %v578 = vmul.f32 %v577, %v565
        %v579 = vsel %vm567, %v578, 0.0
        %v580 = vrot.slane %v579, 4
        %v581 = vadd.f32 %v579, %v580
        %v582 = vrot.slane %v581, 2
        %v583 = vadd.f32 %v581, %v582
        %v584 = vrot.slane %v583, 1
        %v585 = vadd.f32 %v583, %v584
        %v586 = vmul.f32 %v585, 0.5
        %v587 = vadd.f32 %v586, 1e-05
        %v588 = vrsqrt.pop %v587
        %v589 = vmul.f32 %v576, %v588
        %v590 = vsub.f32 1.0, %v565
        %v591 = vmul.f32 %v471, %v590
        %v592 = vsel %vm567, %v591, 0.0
        %v593 = vrot.slane %v592, 4
        %v594 = vadd.f32 %v592, %v593
        %v595 = vrot.slane %v594, 2
        %v596 = vadd.f32 %v594, %v595
        %v597 = vrot.slane %v596, 1
        %v598 = vadd.f32 %v596, %v597
        %v599 = vmul.f32 %v598, 0.5
        %v600 = vsub.f32 %v471, %v599
        %v601 = vmul.f32 %v600, %v600
        %v602 = vmul.f32 %v601, %v590
        %v603 = vsel %vm567, %v602, 0.0
        %v604 = vrot.slane %v603, 4
        %v605 = vadd.f32 %v603, %v604
        %v606 = vrot.slane %v605, 2
        %v607 = vadd.f32 %v605, %v606
        %v608 = vrot.slane %v607, 1
        %v609 = vadd.f32 %v607, %v608
        %v610 = vmul.f32 %v609, 0.5
        %v611 = vadd.f32 %v610, 1e-05
        %v612 = vrsqrt.pop %v611
        %v613 = vmul.f32 %v600, %v612
        %v614 = vsel %vm563, %v589, %v613
        %615 = vst [vmem:[%s386] sm:$0xf] %v614
        %v616 = vmul.f32 %v556, %v565
        %v617 = vsel %vm567, %v616, 0.0
        %v618 = vrot.slane %v617, 4
        %v619 = vadd.f32 %v617, %v618
        %v620 = vrot.slane %v619, 2
        %v621 = vadd.f32 %v619, %v620
        %v622 = vrot.slane %v621, 1
        %v623 = vadd.f32 %v621, %v622
        %v624 = vmul.f32 %v623, 0.5
        %v625 = vsub.f32 %v556, %v624
        %v626 = vmul.f32 %v625, %v625
        %v627 = vmul.f32 %v626, %v565
        %v628 = vsel %vm567, %v627, 0.0
        %v629 = vrot.slane %v628, 4
        %v630 = vadd.f32 %v628, %v629
        %v631 = vrot.slane %v630, 2
        %v632 = vadd.f32 %v630, %v631
        %v633 = vrot.slane %v632, 1
        %v634 = vadd.f32 %v632, %v633
        %v635 = vmul.f32 %v634, 0.5
        %v636 = vadd.f32 %v635, 1e-05
        %v637 = vrsqrt.pop %v636
        %v638 = vmul.f32 %v625, %v637
        %v639 = vmul.f32 %v556, %v590
        %v640 = vsel %vm567, %v639, 0.0
        %v641 = vrot.slane %v640, 4
        %v642 = vadd.f32 %v640, %v641
        %v643 = vrot.slane %v642, 2
        %v644 = vadd.f32 %v642, %v643
        %v645 = vrot.slane %v644, 1
        %v646 = vadd.f32 %v644, %v645
        %v647 = vmul.f32 %v646, 0.5
        %v648 = vsub.f32 %v556, %v647
        %v649 = vmul.f32 %v648, %v648
        %v650 = vmul.f32 %v649, %v590
        %v651 = vsel %vm567, %v650, 0.0
        %v652 = vrot.slane %v651, 4
        %v653 = vadd.f32 %v651, %v652
        %v654 = vrot.slane %v653, 2
        %v655 = vadd.f32 %v653, %v654
        %v656 = vrot.slane %v655, 1
        %v657 = vadd.f32 %v655, %v656
        %v658 = vmul.f32 %v657, 0.5
        %v659 = vadd.f32 %v658, 1e-05
        %v660 = vrsqrt.pop %v659
        %v661 = vmul.f32 %v648, %v660
        %v662 = vsel %vm563, %v638, %v661
        %663 = vst [vmem:[%s390] sm:$0xf] %v662
        %p664 = scmp.lt.s32.totalorder %s17, 1
        %s665 = scalar_select %p664, %s17, 1
        %s666 = smul.addr %s665, 4
        %s667 = scalar_lea.vmem %s4, %s666
        %p668 = scmp.lt.s32.totalorder %s17, 1
        %s669 = scalar_select %p668, %s17, 1
        %s670 = smul.addr %s669, 4
        %s671 = scalar_lea.vmem %s5, %s670
        // Predicated region
        $region112: #{dino_forward.4} parent=102 // pred_check
          %p672 = pneg %p129
        $region113: #{dino_forward.4} parent=102 // pred_check_branch
          %674 = sbr.rel (%p672) target = $region115
        $region114: #{dino_forward.4} parent=102 // pred_region
          _
        $region115: #{dino_forward.4} parent=102 // pred_fallthru
          _
        // Predicated region
        $region116: #{dino_forward.4} parent=102 // pred_check
          %p675 = pneg %p155
        $region117: #{dino_forward.4} parent=102 // pred_check_branch
          %677 = sbr.rel (%p675) target = $region119
        $region118: #{dino_forward.4} parent=102 // pred_region
          _
        $region119: #{dino_forward.4} parent=102 // pred_fallthru
          _
      $region103: #{dino_forward.4} parent=5 // pred_fallthru
        _
      %p678 = scmp.le.s32.totalorder 2, %s12
      // Predicated region
      $region120: #{dino_forward.4} parent=5 // pred_check
        %p679 = pneg %p678
      $region121: #{dino_forward.4} parent=5 // pred_check_branch
        %681 = sbr.rel (%p679) target = $region123
      $region122: #{dino_forward.4} parent=5 // pred_region
        %s682 = ssub.s32 %s12, 2
        // Predicated region
        $region124: #{dino_forward.4} parent=122 // pred_check
          %p683 = pneg %p135
        $region125: #{dino_forward.4} parent=122 // pred_check_branch
          %685 = sbr.rel (%p683) target = $region127
        $region126: #{dino_forward.4} parent=122 // pred_region
          %p686 = scmp.lt.s32.totalorder %s18, 1
          %s687 = scalar_select %p686, %s18, 1
          %s688 = smul.addr %s687, 4
          %s689 = scalar_lea.vmem %s4, %s688
        $region127: #{dino_forward.4} parent=122 // pred_fallthru
          _
        // Predicated region
        $region128: #{dino_forward.4} parent=122 // pred_check
          %p690 = pneg %p161
        $region129: #{dino_forward.4} parent=122 // pred_check_branch
          %692 = sbr.rel (%p690) target = $region131
        $region130: #{dino_forward.4} parent=122 // pred_region
          %p693 = scmp.lt.s32.totalorder %s18, 1
          %s694 = scalar_select %p693, %s18, 1
          %s695 = smul.addr %s694, 4
          %s696 = scalar_lea.vmem %s5, %s695
        $region131: #{dino_forward.4} parent=122 // pred_fallthru
          _
      $region123: #{dino_forward.4} parent=5 // pred_fallthru
        _
    $region6: #{dino_forward.4} parent=1 // loop_footer
      %s16 = sadd.s32 1, %s12
    $region7: #{dino_forward.4} parent=1 // loop_footer_branch
      %11 = sbr.rel target = $region3
    $region8: #{dino_forward.4} parent=1 // loop_exit
      _

// kernel: dino_forward.5
$region0: #{dino_forward.5}
  #allocation0 [shape = 'u32[]', space=smem, size = 0x4, offset = 0x4, fixed_abs, tag = 'smem constant byte address 0x4 - core index']
  #allocation1 [shape = 'u32[144,128]{1,0:T(1,128)}', space=vmem, size = 0x12000, scoped, tag = 'internal scratch']
  #allocation2 [shape = 'f32[1,1]{1,0:T(1,128)S(1)}', space=vmem, size = 0x200, scoped, tag = 'scoped memory for dino_forward.5']
  %s0 = inlined_call_operand.vmem [shape: f32[4,256], index: 0, kind: input, shape index: {}]
  %s1 = inlined_call_operand.vmem [shape: f32[4,256], index: 1, kind: input, shape index: {}]
  %s2 = inlined_call_operand.vmem [shape: f32[1,256], index: 2, kind: input, shape index: {}]
  %s3 = inlined_call_operand.<no memory space> [shape: f32[1,1], index: 3, kind: input, shape index: {}]
  %s4 = inlined_call_operand.hbm [shape: f32[1,1], index: 4, kind: output, shape index: {}]
  %s5 = sld [smem:[#allocation0]]
  $region26: #{dino_forward.5} parent=0
    _
  %s7 = ssub.s32 1, %s5
  %s8 = scalar_select 0, %s7, %s5
  %v9 = vstv %s3
  %10 = vst [vmem:[#allocation2] sm:$0x1] %v9
  $region1: #{dino_forward.5} parent=0
    #allocation3 [shape = 'u8[512]{0}', space=vmem, size = 0x400, scoped, tag = 'output window, operand 0, single buffered']
    #allocation4 [shape = 's32[1]{0}', space=sflag, size = 0x4, scoped, tag = 'scoped memory for dino_forward.5']
    %11 = vsyncpa [#allocation4], 0
    // Predicated region
    $region2: #{dino_forward.5} parent=1 // pred_check
      _
    $region3: #{dino_forward.5} parent=1 // pred_check_branch
      %13 = sbr.rel (0) target = $region5
    $region4: #{dino_forward.5} parent=1 // pred_region
      _
    $region5: #{dino_forward.5} parent=1 // pred_fallthru
      _
    // Predicated region
    $region6: #{dino_forward.5} parent=1 // pred_check
      _
    $region7: #{dino_forward.5} parent=1 // pred_check_branch
      %15 = sbr.rel (0) target = $region9
    $region8: #{dino_forward.5} parent=1 // pred_region
      _
    $region9: #{dino_forward.5} parent=1 // pred_fallthru
      _
    // Predicated region
    $region10: #{dino_forward.5} parent=1 // pred_check
      _
    $region11: #{dino_forward.5} parent=1 // pred_check_branch
      %17 = sbr.rel (0) target = $region13
    $region12: #{dino_forward.5} parent=1 // pred_region
      _
    $region13: #{dino_forward.5} parent=1 // pred_fallthru
      _
    // Predicated region
    $region14: #{dino_forward.5} parent=1 // pred_check
      _
    $region15: #{dino_forward.5} parent=1 // pred_check_branch
      %19 = sbr.rel (0) target = $region17
    $region16: #{dino_forward.5} parent=1 // pred_region
      _
    $region17: #{dino_forward.5} parent=1 // pred_fallthru
      _
    %v20 = vld [vmem:[%s0] sm:$0xff]
    %v21 = vld [vmem:[%s1] sm:$0xff]
    %v22 = vld [vmem:[%s2] sm:$0x3]
    %v24 = vlaneseq
    %v25 = vshrl.u32 %v24, 7
    %v26 = vsub.s32 0, %v25
    %v27 = vrot.slane %v22, %v26
    %v28 = vlaneseq
    %v29 = vshrl.u32 %v28, 7
    %v30 = vsub.s32 1, %v29
    %v31 = vrot.slane %v22, %v30
    %v32 = vcombine.low %v27, %v31
    %v34 = vsub.f32 %v20, %v32
    %v35 = vmul.f32 %v34, 25.0
    %v37 = vcombine.high %v35, %v35
    %vm39 = vcmask 1043456
    %v40 = vsel %vm39, %v35, -inf
    %v41 = vsel %vm39, %v37, -inf
    %v42 = vmax.f32 %v40, %v41
    %43 = vmax.xlane.f32.xlu0 %v42
    %v44 = vpop.xlane.xlu0 %43
    %v47 = vunpack.c.l.s4 839922192
    %v48 = vunpack.c.0.s8 %v47
    %v49 = vlaneseq
    %v50 = vshrl.u32 %v49, 7
    %v51 = vsub.s32 %v48, %v50
    %v52 = vrot.slane %v44, %v51
    %v54 = vsub.f32 %v35, %v52
    %v55 = vmul.f32 %v54, 1.442695
    %v56 = vpow.pop %v55
    %v58 = vcombine.high %v56, %v56
    %v60 = vsel %vm39, %v56, 0.0
    %v61 = vsel %vm39, %v58, 0.0
    %v62 = vadd.f32 %v60, %v61
    %63 = vadd.xlane.f32.xlu0 %v62
    %v64 = vpop.xlane.xlu0 %63
    %v67 = vunpack.c.l.s4 839922192
    %v68 = vunpack.c.0.s8 %v67
    %v69 = vlaneseq
    %v70 = vshrl.u32 %v69, 7
    %v71 = vsub.s32 %v68, %v70
    %v72 = vrot.slane %v64, %v71
    %v74 = vrcp.pop %v72
    %v75 = vmul.f32 %v56, %v74
    %v76 = vmul.f32 %v21, 10.0
    %v78 = vcombine.high %v76, %v76
    %v80 = vsel %vm39, %v76, -inf
    %v81 = vsel %vm39, %v78, -inf
    %v82 = vmax.f32 %v80, %v81
    %83 = vmax.xlane.f32.xlu0 %v82
    %v84 = vpop.xlane.xlu0 %83
    %v87 = vunpack.c.l.s4 839922192
    %v88 = vunpack.c.0.s8 %v87
    %v89 = vlaneseq
    %v90 = vshrl.u32 %v89, 7
    %v91 = vsub.s32 %v88, %v90
    %v92 = vrot.slane %v84, %v91
    %v94 = vsub.f32 %v76, %v92
    %v95 = vmul.f32 %v94, 1.442695
    %v96 = vpow.pop %v95
    %v98 = vcombine.high %v96, %v96
    %v100 = vsel %vm39, %v96, 0.0
    %v101 = vsel %vm39, %v98, 0.0
    %v102 = vadd.f32 %v100, %v101
    %103 = vadd.xlane.f32.xlu0 %v102
    %v104 = vpop.xlane.xlu0 %103
    %v105 = vlog2.pop %v104
    %v106 = vmul.f32 %v105, 0.6931472
    %v109 = vunpack.c.l.s4 839922192
    %v110 = vunpack.c.0.s8 %v109
    %v111 = vlaneseq
    %v112 = vshrl.u32 %v111, 7
    %v113 = vsub.s32 %v110, %v112
    %v114 = vrot.slane %v106, %v113
    %v116 = vsub.f32 %v94, %v114
    %v117 = vmul.f32 %v75, %v116
    %v119 = vcombine.high %v117, %v117
    %v121 = vsel %vm39, %v117, 0.0
    %v122 = vsel %vm39, %v119, 0.0
    %v123 = vadd.f32 %v121, %v122
    %124 = vadd.xlane.f32.xlu0 %v123
    %v125 = vpop.xlane.xlu0 %124
    %v126 = vrot.slane %v125, 4
    %v127 = vadd.f32 %v125, %v126
    %v128 = vrot.slane %v127, 2
    %v129 = vadd.f32 %v127, %v128
    %v130 = vrot.slane %v129, 1
    %v131 = vadd.f32 %v129, %v130
    %s132 = vtos %v131
    %s133 = ssub.f32 0.0, %s132
    %v134 = vrcp.pop 4.0
    %s135 = vtos %v134
    %s136 = smul.f32 %s133, %s135
    %v137 = vstv %s136
    %v138 = vld [vmem:[#allocation2] sm:$0x1]
    %v139 = vmul.f32 %v138, 0.1
    %v140 = vadd.f32 %v137, %v139
    %vm141 = vcmask 0
    %142 = vst.msk [vmem:[#allocation3] sm:$0x1] %vm141, %v140
    // Predicated region
    $region18: #{dino_forward.5} parent=1 // pred_check
      _
    $region19: #{dino_forward.5} parent=1 // pred_check_branch
      %144 = sbr.rel (0) target = $region21
    $region20: #{dino_forward.5} parent=1 // pred_region
      %s146 = ssub.s32 16, 16
      %147 = vsyncadd [#allocation4], %s146
      %s149 = sshll.u32 [#allocation3], 4
      %s150 = int_to_ptr.vmem [resolvable:$true] %s149
      %152 = dma.vmem_to_hbm [thread:$0]  %s150, 16, %s4, [#allocation4]
    $region21: #{dino_forward.5} parent=1 // pred_fallthru
      _
    // Predicated region
    $region22: #{dino_forward.5} parent=1 // pred_check
      _
    $region23: #{dino_forward.5} parent=1 // pred_check_branch
      %154 = sbr.rel (0) target = $region25
    $region24: #{dino_forward.5} parent=1 // pred_region
      %155 = dma.done [#allocation4], 16
    $region25: #{dino_forward.5} parent=1 // pred_fallthru
      _
    %156 = vsyncpa [#allocation4], 1

// kernel: dino_forward.3
$region0: #{dino_forward.3}
  #allocation0 [shape = 'u32[]', space=smem, size = 0x4, offset = 0x4, fixed_abs, tag = 'smem constant byte address 0x4 - core index']
  #allocation1 [shape = 'u32[144,128]{1,0:T(1,128)}', space=vmem, size = 0x12000, scoped, tag = 'internal scratch']
  %s0 = inlined_call_operand.vmem [shape: bf16[64,64], index: 0, kind: input, shape index: {}]
  %s1 = inlined_call_operand.vmem [shape: bf16[4,64], index: 1, kind: input, shape index: {}]
  %s2 = inlined_call_operand.vmem [shape: bf16[2,64,32], index: 2, kind: input, shape index: {}]
  %s3 = inlined_call_operand.vmem [shape: f32[2,1,32], index: 3, kind: input, shape index: {}]
  %s4 = inlined_call_operand.vmem [shape: bf16[2,32,128], index: 4, kind: input, shape index: {}]
  %s5 = inlined_call_operand.vmem [shape: f32[2,1,128], index: 5, kind: input, shape index: {}]
  %s6 = inlined_call_operand.vmem [shape: bf16[2,32,64], index: 6, kind: input, shape index: {}]
  %s7 = inlined_call_operand.vmem [shape: f32[2,1,64], index: 7, kind: input, shape index: {}]
  %s8 = inlined_call_operand.vmem [shape: f32[2,1,64], index: 8, kind: input, shape index: {}]
  %s9 = inlined_call_operand.vmem [shape: f32[2,1,64], index: 9, kind: input, shape index: {}]
  %s10 = inlined_call_operand.vmem [shape: bf16[2,64,64], index: 10, kind: input, shape index: {}]
  %s11 = inlined_call_operand.vmem [shape: f32[2,1,64], index: 11, kind: input, shape index: {}]
  %s12 = inlined_call_operand.vmem [shape: f32[2,1,64], index: 12, kind: input, shape index: {}]
  %s13 = inlined_call_operand.vmem [shape: f32[2,1,64], index: 13, kind: input, shape index: {}]
  %s14 = inlined_call_operand.vmem [shape: bf16[4,64], index: 14, kind: output, shape index: {0}]
  %s15 = inlined_call_operand.vmem [shape: bf16[4,64], index: 15, kind: output, shape index: {1}]
  %s16 = inlined_call_operand.hbm [shape: f32[1,1], index: 16, kind: output, shape index: {2}]
  %17 = xla_tuple %s14, %s15, %s16
  %s18 = sld [smem:[#allocation0]]
  $region82: #{dino_forward.3} parent=0
    _
  %s20 = ssub.s32 1, %s18
  %s21 = scalar_select 0, %s20, %s18
  $region1: #{dino_forward.3} parent=0
    #allocation2 [shape = 'u8[512]{0}', space=vmem, size = 0x400, scoped, tag = 'output window, operand 2, single buffered']
    #allocation3 [shape = 's32[1]{0}', space=sflag, size = 0x4, scoped, tag = 'scoped memory for dino_forward.3']
    %22 = vsyncpa [#allocation3], 0
    // Predicated region
    $region2: #{dino_forward.3} parent=1 // pred_check
      _
    $region3: #{dino_forward.3} parent=1 // pred_check_branch
      %24 = sbr.rel (0) target = $region5
    $region4: #{dino_forward.3} parent=1 // pred_region
      _
    $region5: #{dino_forward.3} parent=1 // pred_fallthru
      _
    // Predicated region
    $region6: #{dino_forward.3} parent=1 // pred_check
      _
    $region7: #{dino_forward.3} parent=1 // pred_check_branch
      %26 = sbr.rel (0) target = $region9
    $region8: #{dino_forward.3} parent=1 // pred_region
      _
    $region9: #{dino_forward.3} parent=1 // pred_fallthru
      _
    // Predicated region
    $region10: #{dino_forward.3} parent=1 // pred_check
      _
    $region11: #{dino_forward.3} parent=1 // pred_check_branch
      %28 = sbr.rel (0) target = $region13
    $region12: #{dino_forward.3} parent=1 // pred_region
      _
    $region13: #{dino_forward.3} parent=1 // pred_fallthru
      _
    // Predicated region
    $region14: #{dino_forward.3} parent=1 // pred_check
      _
    $region15: #{dino_forward.3} parent=1 // pred_check_branch
      %30 = sbr.rel (0) target = $region17
    $region16: #{dino_forward.3} parent=1 // pred_region
      _
    $region17: #{dino_forward.3} parent=1 // pred_fallthru
      _
    // Predicated region
    $region18: #{dino_forward.3} parent=1 // pred_check
      _
    $region19: #{dino_forward.3} parent=1 // pred_check_branch
      %32 = sbr.rel (0) target = $region21
    $region20: #{dino_forward.3} parent=1 // pred_region
      _
    $region21: #{dino_forward.3} parent=1 // pred_fallthru
      _
    // Predicated region
    $region22: #{dino_forward.3} parent=1 // pred_check
      _
    $region23: #{dino_forward.3} parent=1 // pred_check_branch
      %34 = sbr.rel (0) target = $region25
    $region24: #{dino_forward.3} parent=1 // pred_region
      _
    $region25: #{dino_forward.3} parent=1 // pred_fallthru
      _
    // Predicated region
    $region26: #{dino_forward.3} parent=1 // pred_check
      _
    $region27: #{dino_forward.3} parent=1 // pred_check_branch
      %36 = sbr.rel (0) target = $region29
    $region28: #{dino_forward.3} parent=1 // pred_region
      _
    $region29: #{dino_forward.3} parent=1 // pred_fallthru
      _
    // Predicated region
    $region30: #{dino_forward.3} parent=1 // pred_check
      _
    $region31: #{dino_forward.3} parent=1 // pred_check_branch
      %38 = sbr.rel (0) target = $region33
    $region32: #{dino_forward.3} parent=1 // pred_region
      _
    $region33: #{dino_forward.3} parent=1 // pred_fallthru
      _
    // Predicated region
    $region34: #{dino_forward.3} parent=1 // pred_check
      _
    $region35: #{dino_forward.3} parent=1 // pred_check_branch
      %40 = sbr.rel (0) target = $region37
    $region36: #{dino_forward.3} parent=1 // pred_region
      _
    $region37: #{dino_forward.3} parent=1 // pred_fallthru
      _
    // Predicated region
    $region38: #{dino_forward.3} parent=1 // pred_check
      _
    $region39: #{dino_forward.3} parent=1 // pred_check_branch
      %42 = sbr.rel (0) target = $region41
    $region40: #{dino_forward.3} parent=1 // pred_region
      _
    $region41: #{dino_forward.3} parent=1 // pred_fallthru
      _
    // Predicated region
    $region42: #{dino_forward.3} parent=1 // pred_check
      _
    $region43: #{dino_forward.3} parent=1 // pred_check_branch
      %44 = sbr.rel (0) target = $region45
    $region44: #{dino_forward.3} parent=1 // pred_region
      _
    $region45: #{dino_forward.3} parent=1 // pred_fallthru
      _
    // Predicated region
    $region46: #{dino_forward.3} parent=1 // pred_check
      _
    $region47: #{dino_forward.3} parent=1 // pred_check_branch
      %46 = sbr.rel (0) target = $region49
    $region48: #{dino_forward.3} parent=1 // pred_region
      _
    $region49: #{dino_forward.3} parent=1 // pred_fallthru
      _
    // Predicated region
    $region50: #{dino_forward.3} parent=1 // pred_check
      _
    $region51: #{dino_forward.3} parent=1 // pred_check_branch
      %48 = sbr.rel (0) target = $region53
    $region52: #{dino_forward.3} parent=1 // pred_region
      _
    $region53: #{dino_forward.3} parent=1 // pred_fallthru
      _
    // Predicated region
    $region54: #{dino_forward.3} parent=1 // pred_check
      _
    $region55: #{dino_forward.3} parent=1 // pred_check_branch
      %50 = sbr.rel (0) target = $region57
    $region56: #{dino_forward.3} parent=1 // pred_region
      _
    $region57: #{dino_forward.3} parent=1 // pred_fallthru
      _
    %v52 = vld [vmem:[%s0] sm:$0xf]
    %v53 = vld [vmem:[%s0 + $0x4] sm:$0xf]
    %v54 = vld [vmem:[%s0 + $0x8] sm:$0xf]
    %v55 = vld [vmem:[%s0 + $0xc] sm:$0xf]
    %v56 = vld [vmem:[%s0 + $0x10] sm:$0xf]
    %v57 = vld [vmem:[%s0 + $0x14] sm:$0xf]
    %v58 = vld [vmem:[%s0 + $0x18] sm:$0xf]
    %v59 = vld [vmem:[%s0 + $0x1c] sm:$0xf]
    %v60 = vld [vmem:[%s1] sm:$0x3]
    %v61 = vld [vmem:[%s2] sm:$0xf]
    %v62 = vld [vmem:[%s2 + $0x4] sm:$0xf]
    %v63 = vld [vmem:[%s2 + $0x8] sm:$0xf]
    %v64 = vld [vmem:[%s2 + $0xc] sm:$0xf]
    %v65 = vld [vmem:[%s2 + $0x10] sm:$0xf]
    %v66 = vld [vmem:[%s2 + $0x14] sm:$0xf]
    %v67 = vld [vmem:[%s2 + $0x18] sm:$0xf]
    %v68 = vld [vmem:[%s2 + $0x1c] sm:$0xf]
    %v69 = vld [vmem:[%s3] sm:$0x1]
    %v70 = vld [vmem:[%s4] sm:$0xf]
    %v71 = vld [vmem:[%s4 + $0x4] sm:$0xf]
    %v72 = vld [vmem:[%s4 + $0x8] sm:$0xf]
    %v73 = vld [vmem:[%s4 + $0xc] sm:$0xf]
    %v74 = vld [vmem:[%s5] sm:$0x1]
    %s75 = scalar_lea.vmem %s2, 32
    %v76 = vld [vmem:[%s75] sm:$0xf]
    %v77 = vld [vmem:[%s75 + $0x4] sm:$0xf]
    %v78 = vld [vmem:[%s75 + $0x8] sm:$0xf]
    %v79 = vld [vmem:[%s75 + $0xc] sm:$0xf]
    %v80 = vld [vmem:[%s75 + $0x10] sm:$0xf]
    %v81 = vld [vmem:[%s75 + $0x14] sm:$0xf]
    %v82 = vld [vmem:[%s75 + $0x18] sm:$0xf]
    %v83 = vld [vmem:[%s75 + $0x1c] sm:$0xf]
    %v84 = vunpack.c.l.bf16 %v76
    %v85 = vunpack.c.l.bf16 %v77
    %v86 = vunpack.c.l.bf16 %v78
    %v87 = vunpack.c.l.bf16 %v79
    %v88 = vunpack.c.l.bf16 %v80
    %v89 = vunpack.c.l.bf16 %v81
    %v90 = vunpack.c.l.bf16 %v82
    %v91 = vunpack.c.l.bf16 %v83
    %v92 = vmul.f32 %v84, 0.996
    %v93 = vmul.f32 %v85, 0.996
    %v94 = vmul.f32 %v86, 0.996
    %v95 = vmul.f32 %v87, 0.996
    %v96 = vmul.f32 %v88, 0.996
    %v97 = vmul.f32 %v89, 0.996
    %v98 = vmul.f32 %v90, 0.996
    %v99 = vmul.f32 %v91, 0.996
    %v100 = vunpack.c.l.bf16 %v61
    %v101 = vunpack.c.l.bf16 %v62
    %v102 = vunpack.c.l.bf16 %v63
    %v103 = vunpack.c.l.bf16 %v64
    %v104 = vunpack.c.l.bf16 %v65
    %v105 = vunpack.c.l.bf16 %v66
    %v106 = vunpack.c.l.bf16 %v67
    %v107 = vunpack.c.l.bf16 %v68
    %v108 = vmul.f32 %v100, 0.004
    %v109 = vmul.f32 %v101, 0.004
    %v110 = vmul.f32 %v102, 0.004
    %v111 = vmul.f32 %v103, 0.004
    %v112 = vmul.f32 %v104, 0.004
    %v113 = vmul.f32 %v105, 0.004
    %v114 = vmul.f32 %v106, 0.004
    %v115 = vmul.f32 %v107, 0.004
    %v116 = vadd.f32 %v92, %v108
    %v117 = vadd.f32 %v93, %v109
    %v118 = vadd.f32 %v94, %v110
    %v119 = vadd.f32 %v95, %v111
    %v120 = vadd.f32 %v96, %v112
    %v121 = vadd.f32 %v97, %v113
    %v122 = vadd.f32 %v98, %v114
    %v123 = vadd.f32 %v99, %v115
    %v124 = vpack.c.bf16 %v117, %v116
    %v125 = vpack.c.bf16 %v119, %v118
    %v126 = vpack.c.bf16 %v121, %v120
    %v127 = vpack.c.bf16 %v123, %v122
    %s128 = scalar_lea.vmem %s3, 1
    %v129 = vld [vmem:[%s128] sm:$0x1]
    %v130 = vmul.f32 %v129, 0.996
    %v131 = vmul.f32 %v69, 0.004
    %v132 = vadd.f32 %v130, %v131
    %s133 = scalar_lea.vmem %s4, 16
    %v134 = vld [vmem:[%s133] sm:$0xf]
    %v135 = vld [vmem:[%s133 + $0x4] sm:$0xf]
    %v136 = vld [vmem:[%s133 + $0x8] sm:$0xf]
    %v137 = vld [vmem:[%s133 + $0xc] sm:$0xf]
    %v138 = vunpack.c.l.bf16 %v134
    %v139 = vunpack.c.l.bf16 %v135
    %v140 = vunpack.c.l.bf16 %v136
    %v141 = vunpack.c.l.bf16 %v137
    %v142 = vmul.f32 %v138, 0.996
    %v143 = vmul.f32 %v139, 0.996
    %v144 = vmul.f32 %v140, 0.996
    %v145 = vmul.f32 %v141, 0.996
    %v146 = vunpack.c.l.bf16 %v70
    %v147 = vunpack.c.l.bf16 %v71
    %v148 = vunpack.c.l.bf16 %v72
    %v149 = vunpack.c.l.bf16 %v73
    %v150 = vmul.f32 %v146, 0.004
    %v151 = vmul.f32 %v147, 0.004
    %v152 = vmul.f32 %v148, 0.004
    %v153 = vmul.f32 %v149, 0.004
    %v154 = vadd.f32 %v142, %v150
    %v155 = vadd.f32 %v143, %v151
    %v156 = vadd.f32 %v144, %v152
    %v157 = vadd.f32 %v145, %v153
    %v158 = vpack.c.bf16 %v155, %v154
    %v159 = vpack.c.bf16 %v157, %v156
    %s160 = scalar_lea.vmem %s5, 1
    %v161 = vld [vmem:[%s160] sm:$0x1]
    %v162 = vmul.f32 %v161, 0.996
    %v163 = vmul.f32 %v74, 0.004
    %v164 = vadd.f32 %v162, %v163
    %v166 = vlaneseq
    %v167 = vshrl.u32 %v166, 7
    %v168 = vsub.s32 0, %v167
    %v169 = vrot.slane %v69, %v168
    %v179 = vunpack.c.l.b16 %v52
    %v180 = vunpack.c.l.b16 %v53
    %v181 = vunpack.c.l.b16 %v54
    %v182 = vunpack.c.l.b16 %v55
    %v183 = vunpack.c.l.b16 %v56
    %v184 = vunpack.c.l.b16 %v57
    %v185 = vunpack.c.l.b16 %v58
    %v186 = vunpack.c.l.b16 %v59
    %v187 = vpack.c.b16 %v180, %v179
    %v188 = vpack.c.b16 %v182, %v181
    %v189 = vpack.c.b16 %v184, %v183
    %v190 = vpack.c.b16 %v186, %v185
    %v199 = vunpack.c.l.b16 %v61
    %v200 = vunpack.c.l.b16 %v62
    %v201 = vunpack.c.l.b16 %v63
    %v202 = vunpack.c.l.b16 %v64
    %v203 = vunpack.c.l.b16 %v65
    %v204 = vunpack.c.l.b16 %v66
    %v205 = vunpack.c.l.b16 %v67
    %v206 = vunpack.c.l.b16 %v68
    %v207 = vpack.c.b16 %v200, %v199
    %v208 = vpack.c.b16 %v202, %v201
    %v209 = vpack.c.b16 %v204, %v203
    %v210 = vpack.c.b16 %v206, %v205
    %vm215 = vcmask 523264
    %v217 = vsel %vm215, %v187, 0
    %v220 = vsel %vm215, %v188, 0
    %v223 = vsel %vm215, %v189, 0
    %v226 = vsel %vm215, %v190, 0
    %228 = vmatprep.subr.bf16.mxu0 0
    %229 = vmatpush1.bf16.msra.mxu0 %v207
    %230 = vmatprep.subr.bf16.mxu0 0
    %231 = vmatpush1.bf16.msra.mxu0 %v208
    %232 = vmatprep.subr.bf16.mxu0 0
    %233 = vmatpush1.bf16.msra.mxu0 %v209
    %234 = vmatprep.subr.bf16.mxu0 0
    %235 = vmatpush1.bf16.msra.mxu0 %v210
    %236 = vmatprep.subr.bf16.mxu0 0
    %237 = vmatpush1.bf16.msra.mxu0 0
    %238 = vmatprep.subr.bf16.mxu0 0
    %239 = vmatpush1.bf16.msra.mxu0 0
    %240 = vmatprep.subr.bf16.mxu0 0
    %241 = vmatpush1.bf16.msra.mxu0 0
    %242 = vmatprep.subr.bf16.mxu0 0
    %243 = vmatpush1.bf16.msra.mxu0 0
    %244 = vmatprep.subr.bf16.mxu0 0
    %245 = vmatpush1.bf16.msra.mxu0 0
    %246 = vmatprep.subr.bf16.mxu0 0
    %247 = vmatpush1.bf16.msra.mxu0 0
    %248 = vmatprep.subr.bf16.mxu0 0
    %249 = vmatpush1.bf16.msra.mxu0 0
    %250 = vmatprep.subr.bf16.mxu0 0
    %251 = vmatpush1.bf16.msra.mxu0 0
    %252 = vmatprep.subr.bf16.mxu0 0
    %253 = vmatpush1.bf16.msra.mxu0 0
    %254 = vmatprep.subr.bf16.mxu0 0
    %255 = vmatpush1.bf16.msra.mxu0 0
    %256 = vmatprep.subr.bf16.mxu0 0
    %257 = vmatpush1.bf16.msra.mxu0 0
    %258 = vmatprep.subr.bf16.mxu0 0
    %259 = vmatpush1.bf16.msra.mxu0 0
    %260 = vmatprep.mubr.bf16.mxu0 0
    %261 = vmatmul.mubr.bf16.gmra.mrb[0].mxu0 %v217
    %v262 = vpop.f32.mrb[0].mxu0
    %v263 = vadd.f32 %v169, %v262
    %v264 = vpop.f32.mrb[0].mxu0
    %v265 = vpop.f32.mrb[0].mxu0
    %v266 = vadd.f32 %v169, %v265
    %v267 = vpop.f32.mrb[0].mxu0
    %268 = vmatprep.mubr.bf16.mxu0 0
    %269 = vmatmul.mubr.bf16.gmra.mrb[0].mxu0 %v220
    %v270 = vpop.f32.mrb[0].mxu0
    %v271 = vadd.f32 %v169, %v270
    %v272 = vpop.f32.mrb[0].mxu0
    %v273 = vpop.f32.mrb[0].mxu0
    %v274 = vadd.f32 %v169, %v273
    %v275 = vpop.f32.mrb[0].mxu0
    %276 = vmatprep.mubr.bf16.mxu0 0
    %277 = vmatmul.mubr.bf16.gmra.mrb[0].mxu0 %v223
    %v278 = vpop.f32.mrb[0].mxu0
    %v279 = vadd.f32 %v169, %v278
    %v280 = vpop.f32.mrb[0].mxu0
    %v281 = vpop.f32.mrb[0].mxu0
    %v282 = vadd.f32 %v169, %v281
    %v283 = vpop.f32.mrb[0].mxu0
    %284 = vmatprep.mubr.bf16.mxu0 0
    %285 = vmatmul.mubr.bf16.gmra.mrb[0].mxu0 %v226
    %v286 = vpop.f32.mrb[0].mxu0
    %v287 = vadd.f32 %v169, %v286
    %v288 = vpop.f32.mrb[0].mxu0
    %v289 = vpop.f32.mrb[0].mxu0
    %v290 = vadd.f32 %v169, %v289
    %v291 = vpop.f32.mrb[0].mxu0
    %292 = vdwg.mxu0
    %v293 = vpack.c.bf16 %v266, %v263
    %v294 = vpack.c.bf16 %v274, %v271
    %v295 = vpack.c.bf16 %v282, %v279
    %v296 = vpack.c.bf16 %v290, %v287
    %v298 = vsel %vm215, %v60, 0
    %300 = vmatprep.subr.bf16.mxu0 0
    %301 = vmatpush1.bf16.msra.mxu0 %v293
    %302 = vmatprep.subr.bf16.mxu0 0
    %303 = vmatpush1.bf16.msra.mxu0 %v294
    %304 = vmatprep.subr.bf16.mxu0 0
    %305 = vmatpush1.bf16.msra.mxu0 %v295
    %306 = vmatprep.subr.bf16.mxu0 0
    %307 = vmatpush1.bf16.msra.mxu0 %v296
    %308 = vmatprep.subr.bf16.mxu0 0
    %309 = vmatpush1.bf16.msra.mxu0 0
    %310 = vmatprep.subr.bf16.mxu0 0
    %311 = vmatpush1.bf16.msra.mxu0 0
    %312 = vmatprep.subr.bf16.mxu0 0
    %313 = vmatpush1.bf16.msra.mxu0 0
    %314 = vmatprep.subr.bf16.mxu0 0
    %315 = vmatpush1.bf16.msra.mxu0 0
    %316 = vmatprep.subr.bf16.mxu0 0
    %317 = vmatpush1.bf16.msra.mxu0 0
    %318 = vmatprep.subr.bf16.mxu0 0
    %319 = vmatpush1.bf16.msra.mxu0 0
    %320 = vmatprep.subr.bf16.mxu0 0
    %321 = vmatpush1.bf16.msra.mxu0 0
    %322 = vmatprep.subr.bf16.mxu0 0
    %323 = vmatpush1.bf16.msra.mxu0 0
    %324 = vmatprep.subr.bf16.mxu0 0
    %325 = vmatpush1.bf16.msra.mxu0 0
    %326 = vmatprep.subr.bf16.mxu0 0
    %327 = vmatpush1.bf16.msra.mxu0 0
    %328 = vmatprep.subr.bf16.mxu0 0
    %329 = vmatpush1.bf16.msra.mxu0 0
    %330 = vmatprep.subr.bf16.mxu0 0
    %331 = vmatpush1.bf16.msra.mxu0 0
    %332 = vmatprep.mubr.bf16.mxu0 0
    %333 = vmatmul.mubr.bf16.gmra.mrb[0].mxu0 %v298
    %v334 = vpop.f32.mrb[0].mxu0
    %v335 = vadd.f32 0.0, %v334
    %v336 = vpop.f32.mrb[0].mxu0
    %v337 = vpop.f32.mrb[0].mxu0
    %v338 = vpop.f32.mrb[0].mxu0
    %339 = vdwg.mxu0
    %v340 = vpack.c.bf16 %v335, %v335
    %v342 = vlaneseq
    %v343 = vshrl.u32 %v342, 7
    %v344 = vsub.s32 0, %v343
    %v345 = vrot.slane %v74, %v344
    %v351 = vunpack.c.l.b16 %v70
    %v352 = vunpack.c.l.b16 %v71
    %v353 = vunpack.c.l.b16 %v72
    %v354 = vunpack.c.l.b16 %v73
    %v355 = vpack.c.b16 %v352, %v351
    %v356 = vpack.c.b16 %v354, %v353
    %vm359 = vcmask 261120
    %v361 = vsel %vm359, %v340, 0
    %363 = vmatprep.subr.bf16.mxu0 0
    %364 = vmatpush1.bf16.msra.mxu0 %v355
    %365 = vmatprep.subr.bf16.mxu0 0
    %366 = vmatpush1.bf16.msra.mxu0 %v356
    %367 = vmatprep.subr.bf16.mxu0 0
    %368 = vmatpush1.bf16.msra.mxu0 0
    %369 = vmatprep.subr.bf16.mxu0 0
    %370 = vmatpush1.bf16.msra.mxu0 0
    %371 = vmatprep.subr.bf16.mxu0 0
    %372 = vmatpush1.bf16.msra.mxu0 0
    %373 = vmatprep.subr.bf16.mxu0 0
    %374 = vmatpush1.bf16.msra.mxu0 0
    %375 = vmatprep.subr.bf16.mxu0 0
    %376 = vmatpush1.bf16.msra.mxu0 0
    %377 = vmatprep.subr.bf16.mxu0 0
    %378 = vmatpush1.bf16.msra.mxu0 0
    %379 = vmatprep.subr.bf16.mxu0 0
    %380 = vmatpush1.bf16.msra.mxu0 0
    %381 = vmatprep.subr.bf16.mxu0 0
    %382 = vmatpush1.bf16.msra.mxu0 0
    %383 = vmatprep.subr.bf16.mxu0 0
    %384 = vmatpush1.bf16.msra.mxu0 0
    %385 = vmatprep.subr.bf16.mxu0 0
    %386 = vmatpush1.bf16.msra.mxu0 0
    %387 = vmatprep.subr.bf16.mxu0 0
    %388 = vmatpush1.bf16.msra.mxu0 0
    %389 = vmatprep.subr.bf16.mxu0 0
    %390 = vmatpush1.bf16.msra.mxu0 0
    %391 = vmatprep.subr.bf16.mxu0 0
    %392 = vmatpush1.bf16.msra.mxu0 0
    %393 = vmatprep.subr.bf16.mxu0 0
    %394 = vmatpush1.bf16.msra.mxu0 0
    %395 = vmatprep.mubr.bf16.mxu0 0
    %396 = vmatmul.mubr.bf16.gmra.mrb[0].mxu0 %v361
    %v397 = vpop.f32.mrb[0].mxu0
    %v398 = vadd.f32 %v345, %v397
    %v399 = vpop.f32.mrb[0].mxu0
    %v400 = vpop.f32.mrb[0].mxu0
    %v401 = vpop.f32.mrb[0].mxu0
    %402 = vdwg.mxu0
    %v403 = vtanh.pop %v398
    %v405 = vlaneseq
    %v406 = vshrl.u32 %v405, 7
    %v407 = vsub.s32 0, %v406
    %v408 = vrot.slane %v132, %v407
    %410 = vmatprep.subr.bf16.mxu0 0
    %411 = vmatpush1.bf16.msra.mxu0 %v124
    %412 = vmatprep.subr.bf16.mxu0 0
    %413 = vmatpush1.bf16.msra.mxu0 %v125
    %414 = vmatprep.subr.bf16.mxu0 0
    %415 = vmatpush1.bf16.msra.mxu0 %v126
    %416 = vmatprep.subr.bf16.mxu0 0
    %417 = vmatpush1.bf16.msra.mxu0 %v127
    %418 = vmatprep.subr.bf16.mxu0 0
    %419 = vmatpush1.bf16.msra.mxu0 0
    %420 = vmatprep.subr.bf16.mxu0 0
    %421 = vmatpush1.bf16.msra.mxu0 0
    %422 = vmatprep.subr.bf16.mxu0 0
    %423 = vmatpush1.bf16.msra.mxu0 0
    %424 = vmatprep.subr.bf16.mxu0 0
    %425 = vmatpush1.bf16.msra.mxu0 0
    %426 = vmatprep.subr.bf16.mxu0 0
    %427 = vmatpush1.bf16.msra.mxu0 0
    %428 = vmatprep.subr.bf16.mxu0 0
    %429 = vmatpush1.bf16.msra.mxu0 0
    %430 = vmatprep.subr.bf16.mxu0 0
    %431 = vmatpush1.bf16.msra.mxu0 0
    %432 = vmatprep.subr.bf16.mxu0 0
    %433 = vmatpush1.bf16.msra.mxu0 0
    %434 = vmatprep.subr.bf16.mxu0 0
    %435 = vmatpush1.bf16.msra.mxu0 0
    %436 = vmatprep.subr.bf16.mxu0 0
    %437 = vmatpush1.bf16.msra.mxu0 0
    %438 = vmatprep.subr.bf16.mxu0 0
    %439 = vmatpush1.bf16.msra.mxu0 0
    %440 = vmatprep.subr.bf16.mxu0 0
    %441 = vmatpush1.bf16.msra.mxu0 0
    %442 = vmatprep.mubr.bf16.mxu0 0
    %443 = vmatmul.mubr.bf16.gmra.mrb[0].mxu0 %v217
    %v444 = vpop.f32.mrb[0].mxu0
    %v445 = vadd.f32 %v408, %v444
    %v446 = vpop.f32.mrb[0].mxu0
    %v447 = vpop.f32.mrb[0].mxu0
    %v448 = vadd.f32 %v408, %v447
    %v449 = vpop.f32.mrb[0].mxu0
    %450 = vmatprep.mubr.bf16.mxu0 0
    %451 = vmatmul.mubr.bf16.gmra.mrb[0].mxu0 %v220
    %v452 = vpop.f32.mrb[0].mxu0
    %v453 = vadd.f32 %v408, %v452
    %v454 = vpop.f32.mrb[0].mxu0
    %v455 = vpop.f32.mrb[0].mxu0
    %v456 = vadd.f32 %v408, %v455
    %v457 = vpop.f32.mrb[0].mxu0
    %458 = vmatprep.mubr.bf16.mxu0 0
    %459 = vmatmul.mubr.bf16.gmra.mrb[0].mxu0 %v223
    %v460 = vpop.f32.mrb[0].mxu0
    %v461 = vadd.f32 %v408, %v460
    %v462 = vpop.f32.mrb[0].mxu0
    %v463 = vpop.f32.mrb[0].mxu0
    %v464 = vadd.f32 %v408, %v463
    %v465 = vpop.f32.mrb[0].mxu0
    %466 = vmatprep.mubr.bf16.mxu0 0
    %467 = vmatmul.mubr.bf16.gmra.mrb[0].mxu0 %v226
    %v468 = vpop.f32.mrb[0].mxu0
    %v469 = vadd.f32 %v408, %v468
    %v470 = vpop.f32.mrb[0].mxu0
    %v471 = vpop.f32.mrb[0].mxu0
    %v472 = vadd.f32 %v408, %v471
    %v473 = vpop.f32.mrb[0].mxu0
    %474 = vdwg.mxu0
    %v475 = vpack.c.bf16 %v448, %v445
    %v476 = vpack.c.bf16 %v456, %v453
    %v477 = vpack.c.bf16 %v464, %v461
    %v478 = vpack.c.bf16 %v472, %v469
    %479 = vmatprep.subr.bf16.mxu0 0
    %480 = vmatpush1.bf16.msra.mxu0 %v475
    %481 = vmatprep.subr.bf16.mxu0 0
    %482 = vmatpush1.bf16.msra.mxu0 %v476
    %483 = vmatprep.subr.bf16.mxu0 0
    %484 = vmatpush1.bf16.msra.mxu0 %v477
    %485 = vmatprep.subr.bf16.mxu0 0
    %486 = vmatpush1.bf16.msra.mxu0 %v478
    %487 = vmatprep.subr.bf16.mxu0 0
    %488 = vmatpush1.bf16.msra.mxu0 0
    %489 = vmatprep.subr.bf16.mxu0 0
    %490 = vmatpush1.bf16.msra.mxu0 0
    %491 = vmatprep.subr.bf16.mxu0 0
    %492 = vmatpush1.bf16.msra.mxu0 0
    %493 = vmatprep.subr.bf16.mxu0 0
    %494 = vmatpush1.bf16.msra.mxu0 0
    %495 = vmatprep.subr.bf16.mxu0 0
    %496 = vmatpush1.bf16.msra.mxu0 0
    %497 = vmatprep.subr.bf16.mxu0 0
    %498 = vmatpush1.bf16.msra.mxu0 0
    %499 = vmatprep.subr.bf16.mxu0 0
    %500 = vmatpush1.bf16.msra.mxu0 0
    %501 = vmatprep.subr.bf16.mxu0 0
    %502 = vmatpush1.bf16.msra.mxu0 0
    %503 = vmatprep.subr.bf16.mxu0 0
    %504 = vmatpush1.bf16.msra.mxu0 0
    %505 = vmatprep.subr.bf16.mxu0 0
    %506 = vmatpush1.bf16.msra.mxu0 0
    %507 = vmatprep.subr.bf16.mxu0 0
    %508 = vmatpush1.bf16.msra.mxu0 0
    %509 = vmatprep.subr.bf16.mxu0 0
    %510 = vmatpush1.bf16.msra.mxu0 0
    %511 = vmatprep.mubr.bf16.mxu0 0
    %512 = vmatmul.mubr.bf16.gmra.mrb[0].mxu0 %v298
    %v513 = vpop.f32.mrb[0].mxu0
    %v514 = vadd.f32 0.0, %v513
    %v515 = vpop.f32.mrb[0].mxu0
    %v516 = vpop.f32.mrb[0].mxu0
    %v517 = vpop.f32.mrb[0].mxu0
    %518 = vdwg.mxu0
    %v519 = vpack.c.bf16 %v514, %v514
    %v521 = vlaneseq
    %v522 = vshrl.u32 %v521, 7
    %v523 = vsub.s32 0, %v522
    %v524 = vrot.slane %v164, %v523
    %v527 = vsel %vm359, %v519, 0
    %529 = vmatprep.subr.bf16.mxu0 0
    %530 = vmatpush1.bf16.msra.mxu0 %v158
    %531 = vmatprep.subr.bf16.mxu0 0
    %532 = vmatpush1.bf16.msra.mxu0 %v159
    %533 = vmatprep.subr.bf16.mxu0 0
    %534 = vmatpush1.bf16.msra.mxu0 0
    %535 = vmatprep.subr.bf16.mxu0 0
    %536 = vmatpush1.bf16.msra.mxu0 0
    %537 = vmatprep.subr.bf16.mxu0 0
    %538 = vmatpush1.bf16.msra.mxu0 0
    %539 = vmatprep.subr.bf16.mxu0 0
    %540 = vmatpush1.bf16.msra.mxu0 0
    %541 = vmatprep.subr.bf16.mxu0 0
    %542 = vmatpush1.bf16.msra.mxu0 0
    %543 = vmatprep.subr.bf16.mxu0 0
    %544 = vmatpush1.bf16.msra.mxu0 0
    %545 = vmatprep.subr.bf16.mxu0 0
    %546 = vmatpush1.bf16.msra.mxu0 0
    %547 = vmatprep.subr.bf16.mxu0 0
    %548 = vmatpush1.bf16.msra.mxu0 0
    %549 = vmatprep.subr.bf16.mxu0 0
    %550 = vmatpush1.bf16.msra.mxu0 0
    %551 = vmatprep.subr.bf16.mxu0 0
    %552 = vmatpush1.bf16.msra.mxu0 0
    %553 = vmatprep.subr.bf16.mxu0 0
    %554 = vmatpush1.bf16.msra.mxu0 0
    %555 = vmatprep.subr.bf16.mxu0 0
    %556 = vmatpush1.bf16.msra.mxu0 0
    %557 = vmatprep.subr.bf16.mxu0 0
    %558 = vmatpush1.bf16.msra.mxu0 0
    %559 = vmatprep.subr.bf16.mxu0 0
    %560 = vmatpush1.bf16.msra.mxu0 0
    %561 = vmatprep.mubr.bf16.mxu0 0
    %562 = vmatmul.mubr.bf16.gmra.mrb[0].mxu0 %v527
    %v563 = vpop.f32.mrb[0].mxu0
    %v564 = vadd.f32 %v524, %v563
    %v565 = vpop.f32.mrb[0].mxu0
    %v566 = vpop.f32.mrb[0].mxu0
    %v567 = vpop.f32.mrb[0].mxu0
    %568 = vdwg.mxu0
    %v569 = vtanh.pop %v564
    %v571 = vrot.slane %v569, 2
    %v573 = vsub.f32 %v403, %v571
    %v574 = vrot.slane %v569, 6
    %v576 = vsub.f32 %v403, %v574
    %v577 = vmul.f32 %v573, %v573
    %vm578 = vcmask 1041408
    %v579 = vsel %vm578, %v577, 0.0
    %580 = vadd.xlane.f32.xlu0 %v579
    %v581 = vpop.xlane.xlu0 %580
    %v582 = vrot.slane %v581, 4
    %v583 = vadd.f32 %v581, %v582
    %v584 = vrot.slane %v583, 2
    %v585 = vadd.f32 %v583, %v584
    %v586 = vrot.slane %v585, 1
    %v587 = vadd.f32 %v585, %v586
    %s588 = vtos %v587
    %v589 = vmul.f32 %v576, %v576
    %v591 = vrot.slane %v589, 2
    %v593 = vsel %vm578, %v591, 0.0
    %594 = vadd.xlane.f32.xlu0 %v593
    %v595 = vpop.xlane.xlu0 %594
    %v596 = vrot.slane %v595, 4
    %v597 = vadd.f32 %v595, %v596
    %v598 = vrot.slane %v597, 2
    %v599 = vadd.f32 %v597, %v598
    %v600 = vrot.slane %v599, 1
    %v601 = vadd.f32 %v599, %v600
    %s602 = vtos %v601
    %s603 = sadd.f32 %s588, %s602
    %v604 = vrcp.pop 256.0
    %s605 = vtos %v604
    %s606 = smul.f32 %s603, %s605
    %v607 = vstv %s606
    %vm608 = vcmask 0
    %609 = vst.msk [vmem:[#allocation2] sm:$0x1] %vm608, %v607
    %v610 = vld [vmem:[%s6] sm:$0xf]
    %v611 = vld [vmem:[%s6 + $0x4] sm:$0xf]
    %v612 = vld [vmem:[%s6 + $0x8] sm:$0xf]
    %v613 = vld [vmem:[%s6 + $0xc] sm:$0xf]
    %v614 = vld [vmem:[%s7] sm:$0x1]
    %v616 = vlaneseq
    %v617 = vshrl.u32 %v616, 7
    %v618 = vsub.s32 0, %v617
    %v619 = vrot.slane %v614, %v618
    %v625 = vunpack.c.l.b16 %v610
    %v626 = vunpack.c.l.b16 %v611
    %v627 = vunpack.c.l.b16 %v612
    %v628 = vunpack.c.l.b16 %v613
    %v629 = vpack.c.b16 %v626, %v625
    %v630 = vpack.c.b16 %v628, %v627
    %633 = vmatprep.subr.bf16.mxu0 0
    %634 = vmatpush1.bf16.msra.mxu0 %v629
    %635 = vmatprep.subr.bf16.mxu0 0
    %636 = vmatpush1.bf16.msra.mxu0 %v630
    %637 = vmatprep.subr.bf16.mxu0 0
    %638 = vmatpush1.bf16.msra.mxu0 0
    %639 = vmatprep.subr.bf16.mxu0 0
    %640 = vmatpush1.bf16.msra.mxu0 0
    %641 = vmatprep.subr.bf16.mxu0 0
    %642 = vmatpush1.bf16.msra.mxu0 0
    %643 = vmatprep.subr.bf16.mxu0 0
    %644 = vmatpush1.bf16.msra.mxu0 0
    %645 = vmatprep.subr.bf16.mxu0 0
    %646 = vmatpush1.bf16.msra.mxu0 0
    %647 = vmatprep.subr.bf16.mxu0 0
    %648 = vmatpush1.bf16.msra.mxu0 0
    %649 = vmatprep.subr.bf16.mxu0 0
    %650 = vmatpush1.bf16.msra.mxu0 0
    %651 = vmatprep.subr.bf16.mxu0 0
    %652 = vmatpush1.bf16.msra.mxu0 0
    %653 = vmatprep.subr.bf16.mxu0 0
    %654 = vmatpush1.bf16.msra.mxu0 0
    %655 = vmatprep.subr.bf16.mxu0 0
    %656 = vmatpush1.bf16.msra.mxu0 0
    %657 = vmatprep.subr.bf16.mxu0 0
    %658 = vmatpush1.bf16.msra.mxu0 0
    %659 = vmatprep.subr.bf16.mxu0 0
    %660 = vmatpush1.bf16.msra.mxu0 0
    %661 = vmatprep.subr.bf16.mxu0 0
    %662 = vmatpush1.bf16.msra.mxu0 0
    %663 = vmatprep.subr.bf16.mxu0 0
    %664 = vmatpush1.bf16.msra.mxu0 0
    %665 = vmatprep.mubr.bf16.mxu0 0
    %666 = vmatmul.mubr.bf16.gmra.mrb[0].mxu0 %v361
    %v667 = vpop.f32.mrb[0].mxu0
    %v668 = vadd.f32 %v619, %v667
    %v669 = vpop.f32.mrb[0].mxu0
    %v670 = vpop.f32.mrb[0].mxu0
    %v671 = vpop.f32.mrb[0].mxu0
    %672 = vdwg.mxu0
    %v673 = vld [vmem:[%s8] sm:$0x1]
    %v674 = vld [vmem:[%s9] sm:$0x1]
    %v675 = vlaneseq
    %v676 = vshrl.u32 %v675, 7
    %vm677 = vcmp.lt.s32.totalorder %v676, 2
    %v678 = vsel %vm677, 1, 0
    %v679 = vcvt.s32.f32 %v678
    %v680 = vmul.f32 %v668, %v679
    %vm681 = vcmask 519168
    %v682 = vsel %vm681, %v680, 0.0
    %v683 = vrot.slane %v682, 4
    %v684 = vadd.f32 %v682, %v683
    %v685 = vrot.slane %v684, 2
    %v686 = vadd.f32 %v684, %v685
    %v687 = vrot.slane %v686, 1
    %v688 = vadd.f32 %v686, %v687
    %v689 = vmul.f32 %v688, 0.5
    %v690 = vsub.f32 %v668, %v689
    %v691 = vmul.f32 %v690, %v690
    %v692 = vmul.f32 %v691, %v679
    %v693 = vsel %vm681, %v692, 0.0
    %v694 = vrot.slane %v693, 4
    %v695 = vadd.f32 %v693, %v694
    %v696 = vrot.slane %v695, 2
    %v697 = vadd.f32 %v695, %v696
    %v698 = vrot.slane %v697, 1
    %v699 = vadd.f32 %v697, %v698
    %v700 = vmul.f32 %v699, 0.5
    %v701 = vadd.f32 %v700, 1e-05
    %v702 = vrsqrt.pop %v701
    %v703 = vmul.f32 %v690, %v702
    %v704 = vsub.f32 1.0, %v679
    %v705 = vmul.f32 %v668, %v704
    %v706 = vsel %vm681, %v705, 0.0
    %v707 = vrot.slane %v706, 4
    %v708 = vadd.f32 %v706, %v707
    %v709 = vrot.slane %v708, 2
    %v710 = vadd.f32 %v708, %v709
    %v711 = vrot.slane %v710, 1
    %v712 = vadd.f32 %v710, %v711
    %v713 = vmul.f32 %v712, 0.5
    %v714 = vsub.f32 %v668, %v713
    %v715 = vmul.f32 %v714, %v714
    %v716 = vmul.f32 %v715, %v704
    %v717 = vsel %vm681, %v716, 0.0
    %v718 = vrot.slane %v717, 4
    %v719 = vadd.f32 %v717, %v718
    %v720 = vrot.slane %v719, 2
    %v721 = vadd.f32 %v719, %v720
    %v722 = vrot.slane %v721, 1
    %v723 = vadd.f32 %v721, %v722
    %v724 = vmul.f32 %v723, 0.5
    %v725 = vadd.f32 %v724, 1e-05
    %v726 = vrsqrt.pop %v725
    %v727 = vmul.f32 %v714, %v726
    %v728 = vsel %vm677, %v703, %v727
    %v730 = vlaneseq
    %v731 = vshrl.u32 %v730, 7
    %v732 = vsub.s32 0, %v731
    %v733 = vrot.slane %v673, %v732
    %v735 = vmul.f32 %v728, %v733
    %v737 = vlaneseq
    %v738 = vshrl.u32 %v737, 7
    %v739 = vsub.s32 0, %v738
    %v740 = vrot.slane %v674, %v739
    %v742 = vadd.f32 %v735, %v740
    %v743 = vmul.f32 %v742, 0.5
    %v744 = vmul.f32 %v742, 0.70710677
    %v745 = verf.f32.pop %v744
    %v746 = vadd.f32 %v745, 1.0
    %v747 = vmul.f32 %v743, %v746
    %v748 = vpack.c.bf16 %v747, %v747
    %v749 = vld [vmem:[%s10] sm:$0xf]
    %v750 = vld [vmem:[%s10 + $0x4] sm:$0xf]
    %v751 = vld [vmem:[%s10 + $0x8] sm:$0xf]
    %v752 = vld [vmem:[%s10 + $0xc] sm:$0xf]
    %v753 = vld [vmem:[%s10 + $0x10] sm:$0xf]
    %v754 = vld [vmem:[%s10 + $0x14] sm:$0xf]
    %v755 = vld [vmem:[%s10 + $0x18] sm:$0xf]
    %v756 = vld [vmem:[%s10 + $0x1c] sm:$0xf]
    %v757 = vld [vmem:[%s11] sm:$0x1]
    %v759 = vlaneseq
    %v760 = vshrl.u32 %v759, 7
    %v761 = vsub.s32 0, %v760
    %v762 = vrot.slane %v757, %v761
    %v772 = vunpack.c.l.b16 %v749
    %v773 = vunpack.c.l.b16 %v750
    %v774 = vunpack.c.l.b16 %v751
    %v775 = vunpack.c.l.b16 %v752
    %v776 = vunpack.c.l.b16 %v753
    %v777 = vunpack.c.l.b16 %v754
    %v778 = vunpack.c.l.b16 %v755
    %v779 = vunpack.c.l.b16 %v756
    %v780 = vpack.c.b16 %v773, %v772
    %v781 = vpack.c.b16 %v775, %v774
    %v782 = vpack.c.b16 %v777, %v776
    %v783 = vpack.c.b16 %v779, %v778
    %v789 = vsel %vm215, %v748, 0
    %791 = vmatprep.subr.bf16.mxu0 0
    %792 = vmatpush1.bf16.msra.mxu0 %v780
    %793 = vmatprep.subr.bf16.mxu0 0
    %794 = vmatpush1.bf16.msra.mxu0 %v781
    %795 = vmatprep.subr.bf16.mxu0 0
    %796 = vmatpush1.bf16.msra.mxu0 %v782
    %797 = vmatprep.subr.bf16.mxu0 0
    %798 = vmatpush1.bf16.msra.mxu0 %v783
    %799 = vmatprep.subr.bf16.mxu0 0
    %800 = vmatpush1.bf16.msra.mxu0 0
    %801 = vmatprep.subr.bf16.mxu0 0
    %802 = vmatpush1.bf16.msra.mxu0 0
    %803 = vmatprep.subr.bf16.mxu0 0
    %804 = vmatpush1.bf16.msra.mxu0 0
    %805 = vmatprep.subr.bf16.mxu0 0
    %806 = vmatpush1.bf16.msra.mxu0 0
    %807 = vmatprep.subr.bf16.mxu0 0
    %808 = vmatpush1.bf16.msra.mxu0 0
    %809 = vmatprep.subr.bf16.mxu0 0
    %810 = vmatpush1.bf16.msra.mxu0 0
    %811 = vmatprep.subr.bf16.mxu0 0
    %812 = vmatpush1.bf16.msra.mxu0 0
    %813 = vmatprep.subr.bf16.mxu0 0
    %814 = vmatpush1.bf16.msra.mxu0 0
    %815 = vmatprep.subr.bf16.mxu0 0
    %816 = vmatpush1.bf16.msra.mxu0 0
    %817 = vmatprep.subr.bf16.mxu0 0
    %818 = vmatpush1.bf16.msra.mxu0 0
    %819 = vmatprep.subr.bf16.mxu0 0
    %820 = vmatpush1.bf16.msra.mxu0 0
    %821 = vmatprep.subr.bf16.mxu0 0
    %822 = vmatpush1.bf16.msra.mxu0 0
    %823 = vmatprep.mubr.bf16.mxu0 0
    %824 = vmatmul.mubr.bf16.gmra.mrb[0].mxu0 %v789
    %v825 = vpop.f32.mrb[0].mxu0
    %v826 = vadd.f32 %v762, %v825
    %v827 = vpop.f32.mrb[0].mxu0
    %v828 = vpop.f32.mrb[0].mxu0
    %v829 = vpop.f32.mrb[0].mxu0
    %830 = vdwg.mxu0
    %v831 = vld [vmem:[%s12] sm:$0x1]
    %v832 = vld [vmem:[%s13] sm:$0x1]
    %v833 = vmul.f32 %v826, %v679
    %v834 = vsel %vm681, %v833, 0.0
    %v835 = vrot.slane %v834, 4
    %v836 = vadd.f32 %v834, %v835
    %v837 = vrot.slane %v836, 2
    %v838 = vadd.f32 %v836, %v837
    %v839 = vrot.slane %v838, 1
    %v840 = vadd.f32 %v838, %v839
    %v841 = vmul.f32 %v840, 0.5
    %v842 = vsub.f32 %v826, %v841
    %v843 = vmul.f32 %v842, %v842
    %v844 = vmul.f32 %v843, %v679
    %v845 = vsel %vm681, %v844, 0.0
    %v846 = vrot.slane %v845, 4
    %v847 = vadd.f32 %v845, %v846
    %v848 = vrot.slane %v847, 2
    %v849 = vadd.f32 %v847, %v848
    %v850 = vrot.slane %v849, 1
    %v851 = vadd.f32 %v849, %v850
    %v852 = vmul.f32 %v851, 0.5
    %v853 = vadd.f32 %v852, 1e-05
    %v854 = vrsqrt.pop %v853
    %v855 = vmul.f32 %v842, %v854
    %v856 = vmul.f32 %v826, %v704
    %v857 = vsel %vm681, %v856, 0.0
    %v858 = vrot.slane %v857, 4
    %v859 = vadd.f32 %v857, %v858
    %v860 = vrot.slane %v859, 2
    %v861 = vadd.f32 %v859, %v860
    %v862 = vrot.slane %v861, 1
    %v863 = vadd.f32 %v861, %v862
    %v864 = vmul.f32 %v863, 0.5
    %v865 = vsub.f32 %v826, %v864
    %v866 = vmul.f32 %v865, %v865
    %v867 = vmul.f32 %v866, %v704
    %v868 = vsel %vm681, %v867, 0.0
    %v869 = vrot.slane %v868, 4
    %v870 = vadd.f32 %v868, %v869
    %v871 = vrot.slane %v870, 2
    %v872 = vadd.f32 %v870, %v871
    %v873 = vrot.slane %v872, 1
    %v874 = vadd.f32 %v872, %v873
    %v875 = vmul.f32 %v874, 0.5
    %v876 = vadd.f32 %v875, 1e-05
    %v877 = vrsqrt.pop %v876
    %v878 = vmul.f32 %v865, %v877
    %v879 = vsel %vm677, %v855, %v878
    %v881 = vlaneseq
    %v882 = vshrl.u32 %v881, 7
    %v883 = vsub.s32 0, %v882
    %v884 = vrot.slane %v831, %v883
    %v886 = vmul.f32 %v879, %v884
    %v888 = vlaneseq
    %v889 = vshrl.u32 %v888, 7
    %v890 = vsub.s32 0, %v889
    %v891 = vrot.slane %v832, %v890
    %v893 = vadd.f32 %v886, %v891
    %v894 = vmul.f32 %v893, 0.5
    %v895 = vmul.f32 %v893, 0.70710677
    %v896 = verf.f32.pop %v895
    %v897 = vadd.f32 %v896, 1.0
    %v898 = vmul.f32 %v894, %v897
    %v899 = vpack.c.bf16 %v898, %v898
    %vm900 = vcmask 517120
    %901 = vst.msk [vmem:[%s14] sm:$0x3] %vm900, %v899
    %s902 = scalar_lea.vmem %s6, 16
    %v903 = vld [vmem:[%s902] sm:$0xf]
    %v904 = vld [vmem:[%s902 + $0x4] sm:$0xf]
    %v905 = vld [vmem:[%s902 + $0x8] sm:$0xf]
    %v906 = vld [vmem:[%s902 + $0xc] sm:$0xf]
    %s907 = scalar_lea.vmem %s7, 1
    %v908 = vld [vmem:[%s907] sm:$0x1]
    %v910 = vlaneseq
    %v911 = vshrl.u32 %v910, 7
    %v912 = vsub.s32 0, %v911
    %v913 = vrot.slane %v908, %v912
    %v919 = vunpack.c.l.b16 %v903
    %v920 = vunpack.c.l.b16 %v904
    %v921 = vunpack.c.l.b16 %v905
    %v922 = vunpack.c.l.b16 %v906
    %v923 = vpack.c.b16 %v920, %v919
    %v924 = vpack.c.b16 %v922, %v921
    %927 = vmatprep.subr.bf16.mxu0 0
    %928 = vmatpush1.bf16.msra.mxu0 %v923
    %929 = vmatprep.subr.bf16.mxu0 0
    %930 = vmatpush1.bf16.msra.mxu0 %v924
    %931 = vmatprep.subr.bf16.mxu0 0
    %932 = vmatpush1.bf16.msra.mxu0 0
    %933 = vmatprep.subr.bf16.mxu0 0
    %934 = vmatpush1.bf16.msra.mxu0 0
    %935 = vmatprep.subr.bf16.mxu0 0
    %936 = vmatpush1.bf16.msra.mxu0 0
    %937 = vmatprep.subr.bf16.mxu0 0
    %938 = vmatpush1.bf16.msra.mxu0 0
    %939 = vmatprep.subr.bf16.mxu0 0
    %940 = vmatpush1.bf16.msra.mxu0 0
    %941 = vmatprep.subr.bf16.mxu0 0
    %942 = vmatpush1.bf16.msra.mxu0 0
    %943 = vmatprep.subr.bf16.mxu0 0
    %944 = vmatpush1.bf16.msra.mxu0 0
    %945 = vmatprep.subr.bf16.mxu0 0
    %946 = vmatpush1.bf16.msra.mxu0 0
    %947 = vmatprep.subr.bf16.mxu0 0
    %948 = vmatpush1.bf16.msra.mxu0 0
    %949 = vmatprep.subr.bf16.mxu0 0
    %950 = vmatpush1.bf16.msra.mxu0 0
    %951 = vmatprep.subr.bf16.mxu0 0
    %952 = vmatpush1.bf16.msra.mxu0 0
    %953 = vmatprep.subr.bf16.mxu0 0
    %954 = vmatpush1.bf16.msra.mxu0 0
    %955 = vmatprep.subr.bf16.mxu0 0
    %956 = vmatpush1.bf16.msra.mxu0 0
    %957 = vmatprep.subr.bf16.mxu0 0
    %958 = vmatpush1.bf16.msra.mxu0 0
    %959 = vmatprep.mubr.bf16.mxu0 0
    %960 = vmatmul.mubr.bf16.gmra.mrb[0].mxu0 %v527
    %v961 = vpop.f32.mrb[0].mxu0
    %v962 = vadd.f32 %v913, %v961
    %v963 = vpop.f32.mrb[0].mxu0
    %v964 = vpop.f32.mrb[0].mxu0
    %v965 = vpop.f32.mrb[0].mxu0
    %966 = vdwg.mxu0
    %s967 = scalar_lea.vmem %s8, 1
    %v968 = vld [vmem:[%s967] sm:$0x1]
    %s969 = scalar_lea.vmem %s9, 1
    %v970 = vld [vmem:[%s969] sm:$0x1]
    %v971 = vmul.f32 %v962, %v679
    %v972 = vsel %vm681, %v971, 0.0
    %v973 = vrot.slane %v972, 4
    %v974 = vadd.f32 %v972, %v973
    %v975 = vrot.slane %v974, 2
    %v976 = vadd.f32 %v974, %v975
    %v977 = vrot.slane %v976, 1
    %v978 = vadd.f32 %v976, %v977
    %v979 = vmul.f32 %v978, 0.5
    %v980 = vsub.f32 %v962, %v979
    %v981 = vmul.f32 %v980, %v980
    %v982 = vmul.f32 %v981, %v679
    %v983 = vsel %vm681, %v982, 0.0
    %v984 = vrot.slane %v983, 4
    %v985 = vadd.f32 %v983, %v984
    %v986 = vrot.slane %v985, 2
    %v987 = vadd.f32 %v985, %v986
    %v988 = vrot.slane %v987, 1
    %v989 = vadd.f32 %v987, %v988
    %v990 = vmul.f32 %v989, 0.5
    %v991 = vadd.f32 %v990, 1e-05
    %v992 = vrsqrt.pop %v991
    %v993 = vmul.f32 %v980, %v992
    %v994 = vmul.f32 %v962, %v704
    %v995 = vsel %vm681, %v994, 0.0
    %v996 = vrot.slane %v995, 4
    %v997 = vadd.f32 %v995, %v996
    %v998 = vrot.slane %v997, 2
    %v999 = vadd.f32 %v997, %v998
    %v1000 = vrot.slane %v999, 1
    %v1001 = vadd.f32 %v999, %v1000
    %v1002 = vmul.f32 %v1001, 0.5
    %v1003 = vsub.f32 %v962, %v1002
    %v1004 = vmul.f32 %v1003, %v1003
    %v1005 = vmul.f32 %v1004, %v704
    %v1006 = vsel %vm681, %v1005, 0.0
    %v1007 = vrot.slane %v1006, 4
    %v1008 = vadd.f32 %v1006, %v1007
    %v1009 = vrot.slane %v1008, 2
    %v1010 = vadd.f32 %v1008, %v1009
    %v1011 = vrot.slane %v1010, 1
    %v1012 = vadd.f32 %v1010, %v1011
    %v1013 = vmul.f32 %v1012, 0.5
    %v1014 = vadd.f32 %v1013, 1e-05
    %v1015 = vrsqrt.pop %v1014
    %v1016 = vmul.f32 %v1003, %v1015
    %v1017 = vsel %vm677, %v993, %v1016
    %v1019 = vlaneseq
    %v1020 = vshrl.u32 %v1019, 7
    %v1021 = vsub.s32 0, %v1020
    %v1022 = vrot.slane %v968, %v1021
    %v1024 = vmul.f32 %v1017, %v1022
    %v1026 = vlaneseq
    %v1027 = vshrl.u32 %v1026, 7
    %v1028 = vsub.s32 0, %v1027
    %v1029 = vrot.slane %v970, %v1028
    %v1031 = vadd.f32 %v1024, %v1029
    %v1032 = vmul.f32 %v1031, 0.5
    %v1033 = vmul.f32 %v1031, 0.70710677
    %v1034 = verf.f32.pop %v1033
    %v1035 = vadd.f32 %v1034, 1.0
    %v1036 = vmul.f32 %v1032, %v1035
    %v1037 = vpack.c.bf16 %v1036, %v1036
    %s1038 = scalar_lea.vmem %s10, 32
    %v1039 = vld [vmem:[%s1038] sm:$0xf]
    %v1040 = vld [vmem:[%s1038 + $0x4] sm:$0xf]
    %v1041 = vld [vmem:[%s1038 + $0x8] sm:$0xf]
    %v1042 = vld [vmem:[%s1038 + $0xc] sm:$0xf]
    %v1043 = vld [vmem:[%s1038 + $0x10] sm:$0xf]
    %v1044 = vld [vmem:[%s1038 + $0x14] sm:$0xf]
    %v1045 = vld [vmem:[%s1038 + $0x18] sm:$0xf]
    %v1046 = vld [vmem:[%s1038 + $0x1c] sm:$0xf]
    %s1047 = scalar_lea.vmem %s11, 1
    %v1048 = vld [vmem:[%s1047] sm:$0x1]
    %v1050 = vlaneseq
    %v1051 = vshrl.u32 %v1050, 7
    %v1052 = vsub.s32 0, %v1051
    %v1053 = vrot.slane %v1048, %v1052
    %v1063 = vunpack.c.l.b16 %v1039
    %v1064 = vunpack.c.l.b16 %v1040
    %v1065 = vunpack.c.l.b16 %v1041
    %v1066 = vunpack.c.l.b16 %v1042
    %v1067 = vunpack.c.l.b16 %v1043
    %v1068 = vunpack.c.l.b16 %v1044
    %v1069 = vunpack.c.l.b16 %v1045
    %v1070 = vunpack.c.l.b16 %v1046
    %v1071 = vpack.c.b16 %v1064, %v1063
    %v1072 = vpack.c.b16 %v1066, %v1065
    %v1073 = vpack.c.b16 %v1068, %v1067
    %v1074 = vpack.c.b16 %v1070, %v1069
    %v1080 = vsel %vm215, %v1037, 0
    %1082 = vmatprep.subr.bf16.mxu0 0
    %1083 = vmatpush1.bf16.msra.mxu0 %v1071
    %1084 = vmatprep.subr.bf16.mxu0 0
    %1085 = vmatpush1.bf16.msra.mxu0 %v1072
    %1086 = vmatprep.subr.bf16.mxu0 0
    %1087 = vmatpush1.bf16.msra.mxu0 %v1073
    %1088 = vmatprep.subr.bf16.mxu0 0
    %1089 = vmatpush1.bf16.msra.mxu0 %v1074
    %1090 = vmatprep.subr.bf16.mxu0 0
    %1091 = vmatpush1.bf16.msra.mxu0 0
    %1092 = vmatprep.subr.bf16.mxu0 0
    %1093 = vmatpush1.bf16.msra.mxu0 0
    %1094 = vmatprep.subr.bf16.mxu0 0
    %1095 = vmatpush1.bf16.msra.mxu0 0
    %1096 = vmatprep.subr.bf16.mxu0 0
    %1097 = vmatpush1.bf16.msra.mxu0 0
    %1098 = vmatprep.subr.bf16.mxu0 0
    %1099 = vmatpush1.bf16.msra.mxu0 0
    %1100 = vmatprep.subr.bf16.mxu0 0
    %1101 = vmatpush1.bf16.msra.mxu0 0
    %1102 = vmatprep.subr.bf16.mxu0 0
    %1103 = vmatpush1.bf16.msra.mxu0 0
    %1104 = vmatprep.subr.bf16.mxu0 0
    %1105 = vmatpush1.bf16.msra.mxu0 0
    %1106 = vmatprep.subr.bf16.mxu0 0
    %1107 = vmatpush1.bf16.msra.mxu0 0
    %1108 = vmatprep.subr.bf16.mxu0 0
    %1109 = vmatpush1.bf16.msra.mxu0 0
    %1110 = vmatprep.subr.bf16.mxu0 0
    %1111 = vmatpush1.bf16.msra.mxu0 0
    %1112 = vmatprep.subr.bf16.mxu0 0
    %1113 = vmatpush1.bf16.msra.mxu0 0
    %1114 = vmatprep.mubr.bf16.mxu0 0
    %1115 = vmatmul.mubr.bf16.gmra.mrb[0].mxu0 %v1080
    %v1116 = vpop.f32.mrb[0].mxu0
    %v1117 = vadd.f32 %v1053, %v1116
    %v1118 = vpop.f32.mrb[0].mxu0
    %v1119 = vpop.f32.mrb[0].mxu0
    %v1120 = vpop.f32.mrb[0].mxu0
    %1121 = vdwg.mxu0
    %s1122 = scalar_lea.vmem %s12, 1
    %v1123 = vld [vmem:[%s1122] sm:$0x1]
    %s1124 = scalar_lea.vmem %s13, 1
    %v1125 = vld [vmem:[%s1124] sm:$0x1]
    %v1126 = vmul.f32 %v1117, %v679
    %v1127 = vsel %vm681, %v1126, 0.0
    %v1128 = vrot.slane %v1127, 4
    %v1129 = vadd.f32 %v1127, %v1128
    %v1130 = vrot.slane %v1129, 2
    %v1131 = vadd.f32 %v1129, %v1130
    %v1132 = vrot.slane %v1131, 1
    %v1133 = vadd.f32 %v1131, %v1132
    %v1134 = vmul.f32 %v1133, 0.5
    %v1135 = vsub.f32 %v1117, %v1134
    %v1136 = vmul.f32 %v1135, %v1135
    %v1137 = vmul.f32 %v1136, %v679
    %v1138 = vsel %vm681, %v1137, 0.0
    %v1139 = vrot.slane %v1138, 4
    %v1140 = vadd.f32 %v1138, %v1139
    %v1141 = vrot.slane %v1140, 2
    %v1142 = vadd.f32 %v1140, %v1141
    %v1143 = vrot.slane %v1142, 1
    %v1144 = vadd.f32 %v1142, %v1143
    %v1145 = vmul.f32 %v1144, 0.5
    %v1146 = vadd.f32 %v1145, 1e-05
    %v1147 = vrsqrt.pop %v1146
    %v1148 = vmul.f32 %v1135, %v1147
    %v1149 = vmul.f32 %v1117, %v704
    %v1150 = vsel %vm681, %v1149, 0.0
    %v1151 = vrot.slane %v1150, 4
    %v1152 = vadd.f32 %v1150, %v1151
    %v1153 = vrot.slane %v1152, 2
    %v1154 = vadd.f32 %v1152, %v1153
    %v1155 = vrot.slane %v1154, 1
    %v1156 = vadd.f32 %v1154, %v1155
    %v1157 = vmul.f32 %v1156, 0.5
    %v1158 = vsub.f32 %v1117, %v1157
    %v1159 = vmul.f32 %v1158, %v1158
    %v1160 = vmul.f32 %v1159, %v704
    %v1161 = vsel %vm681, %v1160, 0.0
    %v1162 = vrot.slane %v1161, 4
    %v1163 = vadd.f32 %v1161, %v1162
    %v1164 = vrot.slane %v1163, 2
    %v1165 = vadd.f32 %v1163, %v1164
    %v1166 = vrot.slane %v1165, 1
    %v1167 = vadd.f32 %v1165, %v1166
    %v1168 = vmul.f32 %v1167, 0.5
    %v1169 = vadd.f32 %v1168, 1e-05
    %v1170 = vrsqrt.pop %v1169
    %v1171 = vmul.f32 %v1158, %v1170
    %v1172 = vsel %vm677, %v1148, %v1171
    %v1174 = vlaneseq
    %v1175 = vshrl.u32 %v1174, 7
    %v1176 = vsub.s32 0, %v1175
    %v1177 = vrot.slane %v1123, %v1176
    %v1179 = vmul.f32 %v1172, %v1177
    %v1181 = vlaneseq
    %v1182 = vshrl.u32 %v1181, 7
    %v1183 = vsub.s32 0, %v1182
    %v1184 = vrot.slane %v1125, %v1183
    %v1186 = vadd.f32 %v1179, %v1184
    %v1187 = vmul.f32 %v1186, 0.5
    %v1188 = vmul.f32 %v1186, 0.70710677
    %v1189 = verf.f32.pop %v1188
    %v1190 = vadd.f32 %v1189, 1.0
    %v1191 = vmul.f32 %v1187, %v1190
    %v1192 = vpack.c.bf16 %v1191, %v1191
    %1193 = vst.msk [vmem:[%s15] sm:$0x3] %vm900, %v1192
    // Predicated region
    $region58: #{dino_forward.3} parent=1 // pred_check
      _
    $region59: #{dino_forward.3} parent=1 // pred_check_branch
      %1195 = sbr.rel (0) target = $region61
    $region60: #{dino_forward.3} parent=1 // pred_region
      _
    $region61: #{dino_forward.3} parent=1 // pred_fallthru
      _
    // Predicated region
    $region62: #{dino_forward.3} parent=1 // pred_check
      _
    $region63: #{dino_forward.3} parent=1 // pred_check_branch
      %1197 = sbr.rel (0) target = $region65
    $region64: #{dino_forward.3} parent=1 // pred_region
      _
    $region65: #{dino_forward.3} parent=1 // pred_fallthru
      _
    // Predicated region
    $region66: #{dino_forward.3} parent=1 // pred_check
      _
    $region67: #{dino_forward.3} parent=1 // pred_check_branch
      %1199 = sbr.rel (0) target = $region69
    $region68: #{dino_forward.3} parent=1 // pred_region
      %s1201 = ssub.s32 16, 16
      %1202 = vsyncadd [#allocation3], %s1201
      %s1204 = sshll.u32 [#allocation2], 4
      %s1205 = int_to_ptr.vmem [resolvable:$true] %s1204
      %1207 = dma.vmem_to_hbm [thread:$0]  %s1205, 16, %s16, [#allocation3]
    $region69: #{dino_forward.3} parent=1 // pred_fallthru
      _
    // Predicated region
    $region70: #{dino_forward.3} parent=1 // pred_check
      _
    $region71: #{dino_forward.3} parent=1 // pred_check_branch
      %1209 = sbr.rel (0) target = $region73
    $region72: #{dino_forward.3} parent=1 // pred_region
      _
    $region73: #{dino_forward.3} parent=1 // pred_fallthru
      _
    // Predicated region
    $region74: #{dino_forward.3} parent=1 // pred_check
      _
    $region75: #{dino_forward.3} parent=1 // pred_check_branch
      %1211 = sbr.rel (0) target = $region77
    $region76: #{dino_forward.3} parent=1 // pred_region
      _
    $region77: #{dino_forward.3} parent=1 // pred_fallthru
      _
    // Predicated region
    $region78: #{dino_forward.3} parent=1 // pred_check
      _
    $region79: #{dino_forward.3} parent=1 // pred_check_branch
      %1213 = sbr.rel (0) target = $region81
    $region80: #{dino_forward.3} parent=1 // pred_region
      %1214 = dma.done [#allocation3], 16
    $region81: #{dino_forward.3} parent=1 // pred_fallthru
      _
    %1215 = vsyncpa [#allocation3], 1

</llo_original>
